<compile_context>
chip_gen: v6e
topology: v6e:2x2x1
jax: 0.10.0
libtpu: 0.0.40
codegen_flags: <defaults>
</compile_context>

<pallas_src>
import functools

import numpy as np

import jax
import jax.numpy as jnp
from jax.experimental import pallas as pl
from jax.experimental.pallas import tpu as pltpu


# ---------------------------------------------------------------------------
# Host-side (one-time) parameter re-layout
# ---------------------------------------------------------------------------
def _fold_bn(gamma, beta, mean, var, eps=1e-5):
    scale = gamma / np.sqrt(var + eps)
    shift = beta - mean * scale
    return scale, shift


def _tap_block(w_pt, *, k_in, in_col, out_col, out_xs, w_in, pad_w, scale=None, n_out=128):
    """Per-vertical-tap weight matrices turning a KxK conv into kh row-shifted matmuls.

    For vertical tap i:
        out[row, out_col(xslot, co)] += in[row + i (shifted), in_col(xi, ci)] * w[co, ci, i, j],
    with xi = xo + j - pad_w.  Horizontal zero padding handled here (out-of-range xi skipped);
    vertical padding handled in the kernel with zero pad rows.
    """
    w = np.asarray(w_pt, np.float32)
    cout, cin, kh, kw = w.shape
    if scale is not None:
        w = w * np.asarray(scale, np.float32)[:, None, None, None]
    t = np.zeros((kh, k_in, n_out), np.float32)
    for i in range(kh):
        for j in range(kw):
            for xslot, xo in out_xs:
                xi = xo + j - pad_w
                if 0 <= xi < w_in:
                    rows = [in_col(xi, ci) for ci in range(cin)]
                    cols = [out_col(xslot, co) for co in range(cout)]
                    t[i][np.ix_(rows, cols)] += w[:, :, i, j].T
    return t


def prepare_kernel_params(p):
    """Precompute (host-side, once) all weight matrices in the layouts the fused kernel uses."""
    f32 = np.float32

    # conv1: 1->6, k5, valid on 28x28.  Input lanes: x (C=1).  Output lanes: 6*x'+c, even-x''
    # block in lanes 0..127, odd-x'' block in lanes 128..255.
    c1_in = lambda x, c: x
    c1_out = lambda xp, co: 6 * xp + co
    t1e = _tap_block(p['conv1_w'], k_in=28, in_col=c1_in, out_col=c1_out,
                     out_xs=[(xp, 2 * xp) for xp in range(12)], w_in=28, pad_w=0)
    t1o = _tap_block(p['conv1_w'], k_in=28, in_col=c1_in, out_col=c1_out,
                     out_xs=[(xp, 2 * xp + 1) for xp in range(12)], w_in=28, pad_w=0)
    t1 = np.concatenate([t1e, t1o], axis=2)                          # (5, 28, 256)
    b1 = np.zeros((1, 128), f32)
    b1[0, :72] = np.tile(np.asarray(p['conv1_b'], f32), 12)

    # conv2: 6->16, k5, valid on the pooled 12x12 map.  Input lanes 6*x+c; output lanes 16*x'+c,
    # even/odd-x'' blocks concatenated to 256 lanes.
    c2_in = lambda x, c: 6 * x + c
    c2_out = lambda xp, co: 16 * xp + co
    t2e = _tap_block(p['conv2_w'], k_in=128, in_col=c2_in, out_col=c2_out,
                     out_xs=[(xp, 2 * xp) for xp in range(4)], w_in=12, pad_w=0)
    t2o = _tap_block(p['conv2_w'], k_in=128, in_col=c2_in, out_col=c2_out,
                     out_xs=[(xp, 2 * xp + 1) for xp in range(4)], w_in=12, pad_w=0)
    t2 = np.concatenate([t2e, t2o], axis=2)                          # (5, 128, 256)
    b2 = np.zeros((1, 128), f32)
    b2[0, :64] = np.tile(np.asarray(p['conv2_b'], f32), 4)

    # ResNet block convs: 16->16, k3, pad 1 on the 4x4 map; BN scale folded into the weights.
    s1, sh1 = _fold_bn(np.asarray(p['bn1_gamma'], f32), np.asarray(p['bn1_beta'], f32),
                       np.asarray(p['bn1_mean'], f32), np.asarray(p['bn1_var'], f32))
    s2, sh2 = _fold_bn(np.asarray(p['bn2_gamma'], f32), np.asarray(p['bn2_beta'], f32),
                       np.asarray(p['bn2_mean'], f32), np.asarray(p['bn2_var'], f32))
    r_col = lambda x, c: 16 * x + c
    tr1 = _tap_block(p['rconv1_w'], k_in=128, in_col=r_col, out_col=r_col,
                     out_xs=[(x, x) for x in range(4)], w_in=4, pad_w=1, scale=s1)  # (3,128,128)
    tr2 = _tap_block(p['rconv2_w'], k_in=128, in_col=r_col, out_col=r_col,
                     out_xs=[(x, x) for x in range(4)], w_in=4, pad_w=1, scale=s2)
    sh1r = np.zeros((1, 128), f32); sh1r[0, :64] = np.tile(sh1.astype(f32), 4)
    sh2r = np.zeros((1, 128), f32); sh2r[0, :64] = np.tile(sh2.astype(f32), 4)

    # fc1: four per-y row blocks; PyTorch NCHW flatten order (16c + 4y + x) folded into rows
    # (kernel lane order within a row is 16x + c).  All FC outputs padded to 128 lanes.
    fc1_w = np.asarray(p['fc1_w'], f32)                              # (120, 256)
    w1 = np.zeros((4, 128, 128), f32)
    for y in range(4):
        for x in range(4):
            for c in range(16):
                w1[y, 16 * x + c, :120] = fc1_w[:, 16 * c + 4 * y + x]
    fb1 = np.zeros((1, 128), f32); fb1[0, :120] = np.asarray(p['fc1_b'], f32)

    w2 = np.zeros((128, 128), f32); w2[:120, :84] = np.asarray(p['fc2_w'], f32).T
    fb2 = np.zeros((1, 128), f32);  fb2[0, :84] = np.asarray(p['fc2_b'], f32)

    w3 = np.zeros((128, 128), f32); w3[:84, :10] = np.asarray(p['fc3_w'], f32).T
    fb3 = np.zeros((1, 128), f32);  fb3[0, :10] = np.asarray(p['fc3_b'], f32)

    bf = lambda a: jnp.asarray(a, jnp.bfloat16)   # MXU inputs in bf16
    fl = lambda a: jnp.asarray(a, jnp.float32)    # epilogue operands stay f32
    return {
        't1': bf(t1), 'b1': fl(b1),
        't2': bf(t2), 'b2': fl(b2),
        'tr1': bf(tr1), 's1': fl(sh1r),
        'tr2': bf(tr2), 's2': fl(sh2r),
        'w1': bf(w1), 'fb1': fl(fb1),
        'w2': bf(w2), 'fb2': fl(fb2),
        'w3': bf(w3), 'fb3': fl(fb3),
    }


# ---------------------------------------------------------------------------
# The single fused kernel: whole forward pass, batched matmuls, VMEM/vreg resident
# ---------------------------------------------------------------------------
def _net_kernel(x_ref, t1_ref, b1_ref, t2_ref, b2_ref, tr1_ref, s1_ref,
                tr2_ref, s2_ref, w1_ref, fb1_ref, w2_ref, fb2_ref, w3_ref, fb3_ref,
                out_ref, h1s_ref, h2s_ref, rp_ref, rp2_ref, r2s_ref, *, batch):
    f32, bf16 = jnp.float32, jnp.bfloat16
    B = batch
    # Image-major row stacking.  "Garbage" rows between images are computed but never read.
    R1 = 28 * (B - 1) + 24      # conv1 output rows computed   (image n valid at 28n + y)
    P1 = 14 * (B - 1) + 12      # pooled-1 rows                (image n valid at 14n + y')
    R2 = 14 * (B - 1) + 8       # conv2 output rows computed   (image n valid at 14n + y'')
    P2 = 7 * (B - 1) + 4        # pooled-2 / resnet rows       (image n valid at 7n + y)

    # -- conv1 (1->6, k5, valid): 5 batched row-shifted matmuls, even/odd-x in lane halves
    x = x_ref[...]                                                   # (28B, 28) bf16
    acc = jnp.zeros((R1, 256), f32)
    for i in range(5):
        acc = acc + jnp.dot(x[i:i + R1, :], t1_ref[i], preferred_element_type=f32)
    # horizontal half of maxpool #1 = even/odd lane-block max (bias + relu commute with max)
    h1 = jnp.maximum(jnp.maximum(acc[:, :128], acc[:, 128:256]) + b1_ref[...], 0.0)  # (R1,128)
    # vertical half of maxpool #1: one full-tile store + two strided loads
    h1s_ref[...] = h1
    p1 = jnp.maximum(h1s_ref[pl.ds(0, P1, stride=2), :],
                     h1s_ref[pl.ds(1, P1, stride=2), :])             # (P1, 128) f32
    p1b = p1.astype(bf16)                                            # hoisted cast

    # -- conv2 (6->16, k5, valid) on the pooled map, same structure
    acc = jnp.zeros((R2, 256), f32)
    for i in range(5):
        acc = acc + jnp.dot(p1b[i:i + R2, :], t2_ref[i], preferred_element_type=f32)
    h2 = jnp.maximum(jnp.maximum(acc[:, :128], acc[:, 128:256]) + b2_ref[...], 0.0)  # (R2,128)
    h2s_ref[...] = h2
    p2 = jnp.maximum(h2s_ref[pl.ds(0, P2, stride=2), :],
                     h2s_ref[pl.ds(1, P2, stride=2), :])             # (P2, 128) f32

    # -- resnet conv1 (3x3, pad 1) + folded BN1 + relu, on a zero-padded row stack
    rp_ref[...] = jnp.zeros(rp_ref.shape, f32)
    rp_ref[1:1 + P2, :] = p2                                         # image n data at 1+7n+y
    for n in range(B - 1):                                           # re-zero between-image rows
        rp_ref[7 * n + 5:7 * n + 8, :] = jnp.zeros((3, 128), f32)
    rpb = rp_ref[...].astype(bf16)                                   # hoisted cast
    acc = jnp.zeros((P2, 128), f32)
    for d in range(3):
        acc = acc + jnp.dot(rpb[d:d + P2, :], tr1_ref[d], preferred_element_type=f32)
    r1 = jnp.maximum(acc + s1_ref[...], 0.0)                         # (P2, 128)

    # -- resnet conv2 (3x3, pad 1) + folded BN2 + identity shortcut + relu
    rp2_ref[...] = jnp.zeros(rp2_ref.shape, f32)
    rp2_ref[1:1 + P2, :] = r1
    for n in range(B - 1):
        rp2_ref[7 * n + 5:7 * n + 8, :] = jnp.zeros((3, 128), f32)
    rp2b = rp2_ref[...].astype(bf16)
    acc = jnp.zeros((P2, 128), f32)
    for d in range(3):
        acc = acc + jnp.dot(rp2b[d:d + P2, :], tr2_ref[d], preferred_element_type=f32)
    r2 = jnp.maximum(acc + s2_ref[...] + p2, 0.0)                    # (P2, 128)

    # -- fc1 as four accumulating (B,128)x(128,128) matmuls (flatten folded into w1 rows)
    r2s_ref[...] = r2
    accf = jnp.zeros((B, 128), f32)
    for y in range(4):
        lhs = r2s_ref[pl.ds(y, B, stride=7), :].astype(bf16)         # rows y, y+7, ... -> (B,128)
        accf = accf + jnp.dot(lhs, w1_ref[y], preferred_element_type=f32)
    h = jnp.maximum(accf + fb1_ref[...], 0.0)

    # -- fc2 / fc3, lane-dense 128-wide outputs
    h = jnp.maximum(jnp.dot(h.astype(bf16), w2_ref[...], preferred_element_type=f32)
                    + fb2_ref[...], 0.0)
    out_ref[...] = (jnp.dot(h.astype(bf16), w3_ref[...], preferred_element_type=f32)
                    + fb3_ref[...])


def _full_spec(shape):
    # Whole-array block (no grid): everything lives in VMEM for the single invocation.
    return pl.BlockSpec(shape, lambda: (0,) * len(shape))


@jax.jit
def net_forward(x_nchw, kp):
    """Forward pass of Net: NCHW input (N, 1, 28, 28) -> logits (N, 10)."""
    n = x_nchw.shape[0]
    x2d = x_nchw.reshape(n * 28, 28).astype(jnp.bfloat16)            # image-major row stack
    R1 = 28 * (n - 1) + 24
    R2 = 14 * (n - 1) + 8
    P2 = 7 * (n - 1) + 4
    operands = [x2d, kp['t1'], kp['b1'], kp['t2'], kp['b2'], kp['tr1'], kp['s1'],
                kp['tr2'], kp['s2'], kp['w1'], kp['fb1'], kp['w2'], kp['fb2'],
                kp['w3'], kp['fb3']]
    out_padded = pl.pallas_call(
        functools.partial(_net_kernel, batch=n),
        out_shape=jax.ShapeDtypeStruct((n, 128), jnp.float32),       # lane-dense padded logits
        in_specs=[_full_spec(op.shape) for op in operands],
        out_specs=_full_spec((n, 128)),
        scratch_shapes=[
            pltpu.VMEM((R1, 128), jnp.float32),      # conv1 output (pre vertical pool)
            pltpu.VMEM((R2, 128), jnp.float32),      # conv2 output (pre vertical pool)
            pltpu.VMEM((P2 + 5, 128), jnp.float32),  # zero-padded resnet conv1 input
            pltpu.VMEM((P2 + 5, 128), jnp.float32),  # zero-padded resnet conv2 input
            pltpu.VMEM((P2, 128), jnp.float32),      # resnet output (for fc1 row extraction)
        ],
    )(*operands)
    return out_padded[:, :10]


# ---------------------------------------------------------------------------
# Pure-XLA reference (f32) for correctness checking
# ---------------------------------------------------------------------------
def reference_forward(x, p):
    def conv(h, w, pad):
        return jax.lax.conv_general_dilated(h, w, (1, 1), [(pad, pad), (pad, pad)],
                                            dimension_numbers=('NCHW', 'OIHW', 'NCHW'))

    def pool(h):
        return jax.lax.reduce_window(h, -jnp.inf, jax.lax.max,
                                     (1, 1, 2, 2), (1, 1, 2, 2), 'VALID')

    def bn(h, g, b, m, v, eps=1e-5):
        s = g / jnp.sqrt(v + eps)
        return h * s.reshape(1, -1, 1, 1) + (b - m * s).reshape(1, -1, 1, 1)

    h = pool(jax.nn.relu(conv(x, p['conv1_w'], 0) + p['conv1_b'].reshape(1, -1, 1, 1)))
    h = pool(jax.nn.relu(conv(h, p['conv2_w'], 0) + p['conv2_b'].reshape(1, -1, 1, 1)))
    r = jax.nn.relu(bn(conv(h, p['rconv1_w'], 1),
                       p['bn1_gamma'], p['bn1_beta'], p['bn1_mean'], p['bn1_var']))
    r = bn(conv(r, p['rconv2_w'], 1),
           p['bn2_gamma'], p['bn2_beta'], p['bn2_mean'], p['bn2_var'])
    r = jax.nn.relu(r + h)
    flat = r.reshape(r.shape[0], -1)
    h1 = jax.nn.relu(flat @ p['fc1_w'].T + p['fc1_b'])
    h2 = jax.nn.relu(h1 @ p['fc2_w'].T + p['fc2_b'])
    return h2 @ p['fc3_w'].T + p['fc3_b']


if __name__ == "__main__":
    key = jax.random.PRNGKey(0)
    keys = jax.random.split(key, 16)

    def u(k, shape, fan_in):  # PyTorch-style uniform(-1/sqrt(fan_in), 1/sqrt(fan_in))
        bound = 1.0 / (fan_in ** 0.5)
        return jax.random.uniform(k, shape, jnp.float32, -bound, bound)

    params = {
        'conv1_w': u(keys[0], (6, 1, 5, 5), 1 * 5 * 5),
        'conv1_b': u(keys[1], (6,), 1 * 5 * 5),
        'conv2_w': u(keys[2], (16, 6, 5, 5), 6 * 5 * 5),
        'conv2_b': u(keys[3], (16,), 6 * 5 * 5),
        'rconv1_w': u(keys[4], (16, 16, 3, 3), 16 * 3 * 3),
        'rconv2_w': u(keys[5], (16, 16, 3, 3), 16 * 3 * 3),
        # BatchNorm2d defaults: weight=1, bias=0, running_mean=0, running_var=1
        'bn1_gamma': jnp.ones((16,), jnp.float32),
        'bn1_beta': jnp.zeros((16,), jnp.float32),
        'bn1_mean': jnp.zeros((16,), jnp.float32),
        'bn1_var': jnp.ones((16,), jnp.float32),
        'bn2_gamma': jnp.ones((16,), jnp.float32),
        'bn2_beta': jnp.zeros((16,), jnp.float32),
        'bn2_mean': jnp.zeros((16,), jnp.float32),
        'bn2_var': jnp.ones((16,), jnp.float32),
        'fc1_w': u(keys[6], (120, 16 * 4 * 4), 16 * 4 * 4),
        'fc1_b': u(keys[7], (120,), 16 * 4 * 4),
        'fc2_w': u(keys[8], (84, 120), 120),
        'fc2_b': u(keys[9], (84,), 120),
        'fc3_w': u(keys[10], (10, 84), 84),
        'fc3_b': u(keys[11], (10,), 84),
    }

    # 28x28 input is implied by fc1 (16*4*4): 28 -conv5-> 24 -pool-> 12 -conv5-> 8 -pool-> 4
    x = jax.random.normal(keys[12], (2, 1, 28, 28), jnp.float32)

    kp = prepare_kernel_params(params)      # one-time host-side weight re-layout
    out = net_forward(x, kp)
    jax.block_until_ready(out)
    assert out.shape == (2, 10) and out.dtype == jnp.float32

    ref = reference_forward(x, params)
    tol = 5e-2 * (1.0 + float(jnp.max(jnp.abs(ref))))   # bf16 MXU inputs, f32 accumulation
    err = float(jnp.max(jnp.abs(out - ref)))
    assert err < tol, f"kernel/reference mismatch: max abs err {err} (tol {tol})"
    print("KERNEL_OK")
</pallas_src>

<mosaic_0001>
module attributes {stable_mosaic.version = 11 : i64} {
  func.func @_net_kernel(%arg0: memref<56x28xbf16, #tpu.memory_space<vmem>>, %arg1: memref<5x28x256xbf16, #tpu.memory_space<vmem>>, %arg2: memref<1x128xf32, #tpu.memory_space<vmem>>, %arg3: memref<5x128x256xbf16, #tpu.memory_space<vmem>>, %arg4: memref<1x128xf32, #tpu.memory_space<vmem>>, %arg5: memref<3x128x128xbf16, #tpu.memory_space<vmem>>, %arg6: memref<1x128xf32, #tpu.memory_space<vmem>>, %arg7: memref<3x128x128xbf16, #tpu.memory_space<vmem>>, %arg8: memref<1x128xf32, #tpu.memory_space<vmem>>, %arg9: memref<4x128x128xbf16, #tpu.memory_space<vmem>>, %arg10: memref<1x128xf32, #tpu.memory_space<vmem>>, %arg11: memref<128x128xbf16, #tpu.memory_space<vmem>>, %arg12: memref<1x128xf32, #tpu.memory_space<vmem>>, %arg13: memref<128x128xbf16, #tpu.memory_space<vmem>>, %arg14: memref<1x128xf32, #tpu.memory_space<vmem>>, %arg15: memref<2x128xf32, #tpu.memory_space<vmem>>, %arg16: memref<52x128xf32, #tpu.memory_space<vmem>>, %arg17: memref<22x128xf32, #tpu.memory_space<vmem>>, %arg18: memref<16x128xf32, #tpu.memory_space<vmem>>, %arg19: memref<16x128xf32, #tpu.memory_space<vmem>>, %arg20: memref<11x128xf32, #tpu.memory_space<vmem>>) attributes {dimension_semantics = [], scalar_prefetch = 0 : i64, scratch_operands = 5 : i64, tpu.core_type = #tpu.core_type<tc>} {
    %c0 = arith.constant 0 : index
    %c0_0 = arith.constant 0 : index
    %0 = vector.load %arg0[%c0, %c0_0] : memref<56x28xbf16, #tpu.memory_space<vmem>>, vector<56x28xbf16>
    %cst = arith.constant 0.000000e+00 : f32
    %1 = vector.broadcast %cst : f32 to vector<52x256xf32>
    %2 = vector.extract_strided_slice %0 {offsets = [0, 0], sizes = [52, 28], strides = [1, 1]} : vector<56x28xbf16> to vector<52x28xbf16>
    %c0_1 = arith.constant 0 : index
    %c0_2 = arith.constant 0 : index
    %c0_3 = arith.constant 0 : index
    %3 = vector.load %arg1[%c0_1, %c0_2, %c0_3] : memref<5x28x256xbf16, #tpu.memory_space<vmem>>, vector<1x28x256xbf16>
    %4 = vector.shape_cast %3 : vector<1x28x256xbf16> to vector<28x256xbf16>
    %cst_4 = arith.constant dense<0.000000e+00> : vector<52x256xf32>
    %5 = tpu.matmul %2, %4, %cst_4 {dimension_numbers = #tpu.dot_dimension_numbers<[1], [0], [0], [1], [0, 0, 1, 1], [], []>} : vector<52x28xbf16>, vector<28x256xbf16>, vector<52x256xf32> -> vector<52x256xf32>
    %6 = arith.addf %1, %5 : vector<52x256xf32>
    %7 = vector.extract_strided_slice %0 {offsets = [1, 0], sizes = [52, 28], strides = [1, 1]} : vector<56x28xbf16> to vector<52x28xbf16>
    %c1 = arith.constant 1 : index
    %c0_5 = arith.constant 0 : index
    %c0_6 = arith.constant 0 : index
    %8 = vector.load %arg1[%c1, %c0_5, %c0_6] : memref<5x28x256xbf16, #tpu.memory_space<vmem>>, vector<1x28x256xbf16>
    %9 = vector.shape_cast %8 : vector<1x28x256xbf16> to vector<28x256xbf16>
    %cst_7 = arith.constant dense<0.000000e+00> : vector<52x256xf32>
    %10 = tpu.matmul %7, %9, %cst_7 {dimension_numbers = #tpu.dot_dimension_numbers<[1], [0], [0], [1], [0, 0, 1, 1], [], []>} : vector<52x28xbf16>, vector<28x256xbf16>, vector<52x256xf32> -> vector<52x256xf32>
    %11 = arith.addf %6, %10 : vector<52x256xf32>
    %12 = vector.extract_strided_slice %0 {offsets = [2, 0], sizes = [52, 28], strides = [1, 1]} : vector<56x28xbf16> to vector<52x28xbf16>
    %c2 = arith.constant 2 : index
    %c0_8 = arith.constant 0 : index
    %c0_9 = arith.constant 0 : index
    %13 = vector.load %arg1[%c2, %c0_8, %c0_9] : memref<5x28x256xbf16, #tpu.memory_space<vmem>>, vector<1x28x256xbf16>
    %14 = vector.shape_cast %13 : vector<1x28x256xbf16> to vector<28x256xbf16>
    %cst_10 = arith.constant dense<0.000000e+00> : vector<52x256xf32>
    %15 = tpu.matmul %12, %14, %cst_10 {dimension_numbers = #tpu.dot_dimension_numbers<[1], [0], [0], [1], [0, 0, 1, 1], [], []>} : vector<52x28xbf16>, vector<28x256xbf16>, vector<52x256xf32> -> vector<52x256xf32>
    %16 = arith.addf %11, %15 : vector<52x256xf32>
    %17 = vector.extract_strided_slice %0 {offsets = [3, 0], sizes = [52, 28], strides = [1, 1]} : vector<56x28xbf16> to vector<52x28xbf16>
    %c3 = arith.constant 3 : index
    %c0_11 = arith.constant 0 : index
    %c0_12 = arith.constant 0 : index
    %18 = vector.load %arg1[%c3, %c0_11, %c0_12] : memref<5x28x256xbf16, #tpu.memory_space<vmem>>, vector<1x28x256xbf16>
    %19 = vector.shape_cast %18 : vector<1x28x256xbf16> to vector<28x256xbf16>
    %cst_13 = arith.constant dense<0.000000e+00> : vector<52x256xf32>
    %20 = tpu.matmul %17, %19, %cst_13 {dimension_numbers = #tpu.dot_dimension_numbers<[1], [0], [0], [1], [0, 0, 1, 1], [], []>} : vector<52x28xbf16>, vector<28x256xbf16>, vector<52x256xf32> -> vector<52x256xf32>
    %21 = arith.addf %16, %20 : vector<52x256xf32>
    %22 = vector.extract_strided_slice %0 {offsets = [4, 0], sizes = [52, 28], strides = [1, 1]} : vector<56x28xbf16> to vector<52x28xbf16>
    %c4 = arith.constant 4 : index
    %c0_14 = arith.constant 0 : index
    %c0_15 = arith.constant 0 : index
    %23 = vector.load %arg1[%c4, %c0_14, %c0_15] : memref<5x28x256xbf16, #tpu.memory_space<vmem>>, vector<1x28x256xbf16>
    %24 = vector.shape_cast %23 : vector<1x28x256xbf16> to vector<28x256xbf16>
    %cst_16 = arith.constant dense<0.000000e+00> : vector<52x256xf32>
    %25 = tpu.matmul %22, %24, %cst_16 {dimension_numbers = #tpu.dot_dimension_numbers<[1], [0], [0], [1], [0, 0, 1, 1], [], []>} : vector<52x28xbf16>, vector<28x256xbf16>, vector<52x256xf32> -> vector<52x256xf32>
    %26 = arith.addf %21, %25 : vector<52x256xf32>
    %27 = vector.extract_strided_slice %26 {offsets = [0, 0], sizes = [52, 128], strides = [1, 1]} : vector<52x256xf32> to vector<52x128xf32>
    %28 = vector.extract_strided_slice %26 {offsets = [0, 128], sizes = [52, 128], strides = [1, 1]} : vector<52x256xf32> to vector<52x128xf32>
    %29 = arith.maximumf %27, %28 : vector<52x128xf32>
    %c0_17 = arith.constant 0 : index
    %c0_18 = arith.constant 0 : index
    %30 = vector.load %arg2[%c0_17, %c0_18] : memref<1x128xf32, #tpu.memory_space<vmem>>, vector<1x128xf32>
    %31 = vector.broadcast %30 : vector<1x128xf32> to vector<52x128xf32>
    %32 = arith.addf %29, %31 : vector<52x128xf32>
    %cst_19 = arith.constant 0.000000e+00 : f32
    %33 = vector.broadcast %cst_19 : f32 to vector<52x128xf32>
    %34 = arith.maximumf %32, %33 : vector<52x128xf32>
    %c0_20 = arith.constant 0 : index
    %c0_21 = arith.constant 0 : index
    %35 = vector.load %arg16[%c0_20, %c0_21] : memref<52x128xf32, #tpu.memory_space<vmem>>, vector<52x128xf32>
    tpu.vector_store %arg16[%c0_20, %c0_21], %34 {strides = array<i32>} : memref<52x128xf32, #tpu.memory_space<vmem>>, vector<52x128xf32>,
    %c0_22 = arith.constant 0 : index
    %c0_23 = arith.constant 0 : index
    %36 = tpu.strided_load %arg16[%c0_22, %c0_23] {strides = array<i32: 2, 1>} : memref<52x128xf32, #tpu.memory_space<vmem>>, vector<26x128xf32>
    %c1_24 = arith.constant 1 : index
    %c0_25 = arith.constant 0 : index
    %37 = tpu.strided_load %arg16[%c1_24, %c0_25] {strides = array<i32: 2, 1>} : memref<52x128xf32, #tpu.memory_space<vmem>>, vector<26x128xf32>
    %38 = arith.maximumf %36, %37 : vector<26x128xf32>
    %39 = arith.truncf %38 : vector<26x128xf32> to vector<26x128xbf16>
    %cst_26 = arith.constant 0.000000e+00 : f32
    %40 = vector.broadcast %cst_26 : f32 to vector<22x256xf32>
    %41 = vector.extract_strided_slice %39 {offsets = [0, 0], sizes = [22, 128], strides = [1, 1]} : vector<26x128xbf16> to vector<22x128xbf16>
    %c0_27 = arith.constant 0 : index
    %c0_28 = arith.constant 0 : index
    %c0_29 = arith.constant 0 : index
    %42 = vector.load %arg3[%c0_27, %c0_28, %c0_29] : memref<5x128x256xbf16, #tpu.memory_space<vmem>>, vector<1x128x256xbf16>
    %43 = vector.shape_cast %42 : vector<1x128x256xbf16> to vector<128x256xbf16>
    %cst_30 = arith.constant dense<0.000000e+00> : vector<22x256xf32>
    %44 = tpu.matmul %41, %43, %cst_30 {dimension_numbers = #tpu.dot_dimension_numbers<[1], [0], [0], [1], [0, 0, 1, 1], [], []>} : vector<22x128xbf16>, vector<128x256xbf16>, vector<22x256xf32> -> vector<22x256xf32>
    %45 = arith.addf %40, %44 : vector<22x256xf32>
    %46 = vector.extract_strided_slice %39 {offsets = [1, 0], sizes = [22, 128], strides = [1, 1]} : vector<26x128xbf16> to vector<22x128xbf16>
    %c1_31 = arith.constant 1 : index
    %c0_32 = arith.constant 0 : index
    %c0_33 = arith.constant 0 : index
    %47 = vector.load %arg3[%c1_31, %c0_32, %c0_33] : memref<5x128x256xbf16, #tpu.memory_space<vmem>>, vector<1x128x256xbf16>
    %48 = vector.shape_cast %47 : vector<1x128x256xbf16> to vector<128x256xbf16>
    %cst_34 = arith.constant dense<0.000000e+00> : vector<22x256xf32>
    %49 = tpu.matmul %46, %48, %cst_34 {dimension_numbers = #tpu.dot_dimension_numbers<[1], [0], [0], [1], [0, 0, 1, 1], [], []>} : vector<22x128xbf16>, vector<128x256xbf16>, vector<22x256xf32> -> vector<22x256xf32>
    %50 = arith.addf %45, %49 : vector<22x256xf32>
    %51 = vector.extract_strided_slice %39 {offsets = [2, 0], sizes = [22, 128], strides = [1, 1]} : vector<26x128xbf16> to vector<22x128xbf16>
    %c2_35 = arith.constant 2 : index
    %c0_36 = arith.constant 0 : index
    %c0_37 = arith.constant 0 : index
    %52 = vector.load %arg3[%c2_35, %c0_36, %c0_37] : memref<5x128x256xbf16, #tpu.memory_space<vmem>>, vector<1x128x256xbf16>
    %53 = vector.shape_cast %52 : vector<1x128x256xbf16> to vector<128x256xbf16>
    %cst_38 = arith.constant dense<0.000000e+00> : vector<22x256xf32>
    %54 = tpu.matmul %51, %53, %cst_38 {dimension_numbers = #tpu.dot_dimension_numbers<[1], [0], [0], [1], [0, 0, 1, 1], [], []>} : vector<22x128xbf16>, vector<128x256xbf16>, vector<22x256xf32> -> vector<22x256xf32>
    %55 = arith.addf %50, %54 : vector<22x256xf32>
    %56 = vector.extract_strided_slice %39 {offsets = [3, 0], sizes = [22, 128], strides = [1, 1]} : vector<26x128xbf16> to vector<22x128xbf16>
    %c3_39 = arith.constant 3 : index
    %c0_40 = arith.constant 0 : index
    %c0_41 = arith.constant 0 : index
    %57 = vector.load %arg3[%c3_39, %c0_40, %c0_41] : memref<5x128x256xbf16, #tpu.memory_space<vmem>>, vector<1x128x256xbf16>
    %58 = vector.shape_cast %57 : vector<1x128x256xbf16> to vector<128x256xbf16>
    %cst_42 = arith.constant dense<0.000000e+00> : vector<22x256xf32>
    %59 = tpu.matmul %56, %58, %cst_42 {dimension_numbers = #tpu.dot_dimension_numbers<[1], [0], [0], [1], [0, 0, 1, 1], [], []>} : vector<22x128xbf16>, vector<128x256xbf16>, vector<22x256xf32> -> vector<22x256xf32>
    %60 = arith.addf %55, %59 : vector<22x256xf32>
    %61 = vector.extract_strided_slice %39 {offsets = [4, 0], sizes = [22, 128], strides = [1, 1]} : vector<26x128xbf16> to vector<22x128xbf16>
    %c4_43 = arith.constant 4 : index
    %c0_44 = arith.constant 0 : index
    %c0_45 = arith.constant 0 : index
    %62 = vector.load %arg3[%c4_43, %c0_44, %c0_45] : memref<5x128x256xbf16, #tpu.memory_space<vmem>>, vector<1x128x256xbf16>
    %63 = vector.shape_cast %62 : vector<1x128x256xbf16> to vector<128x256xbf16>
    %cst_46 = arith.constant dense<0.000000e+00> : vector<22x256xf32>
    %64 = tpu.matmul %61, %63, %cst_46 {dimension_numbers = #tpu.dot_dimension_numbers<[1], [0], [0], [1], [0, 0, 1, 1], [], []>} : vector<22x128xbf16>, vector<128x256xbf16>, vector<22x256xf32> -> vector<22x256xf32>
    %65 = arith.addf %60, %64 : vector<22x256xf32>
    %66 = vector.extract_strided_slice %65 {offsets = [0, 0], sizes = [22, 128], strides = [1, 1]} : vector<22x256xf32> to vector<22x128xf32>
    %67 = vector.extract_strided_slice %65 {offsets = [0, 128], sizes = [22, 128], strides = [1, 1]} : vector<22x256xf32> to vector<22x128xf32>
    %68 = arith.maximumf %66, %67 : vector<22x128xf32>
    %c0_47 = arith.constant 0 : index
    %c0_48 = arith.constant 0 : index
    %69 = vector.load %arg4[%c0_47, %c0_48] : memref<1x128xf32, #tpu.memory_space<vmem>>, vector<1x128xf32>
    %70 = vector.broadcast %69 : vector<1x128xf32> to vector<22x128xf32>
    %71 = arith.addf %68, %70 : vector<22x128xf32>
    %cst_49 = arith.constant 0.000000e+00 : f32
    %72 = vector.broadcast %cst_49 : f32 to vector<22x128xf32>
    %73 = arith.maximumf %71, %72 : vector<22x128xf32>
    %c0_50 = arith.constant 0 : index
    %c0_51 = arith.constant 0 : index
    %74 = vector.load %arg17[%c0_50, %c0_51] : memref<22x128xf32, #tpu.memory_space<vmem>>, vector<22x128xf32>
    tpu.vector_store %arg17[%c0_50, %c0_51], %73 {strides = array<i32>} : memref<22x128xf32, #tpu.memory_space<vmem>>, vector<22x128xf32>,
    %c0_52 = arith.constant 0 : index
    %c0_53 = arith.constant 0 : index
    %75 = tpu.strided_load %arg17[%c0_52, %c0_53] {strides = array<i32: 2, 1>} : memref<22x128xf32, #tpu.memory_space<vmem>>, vector<11x128xf32>
    %c1_54 = arith.constant 1 : index
    %c0_55 = arith.constant 0 : index
    %76 = tpu.strided_load %arg17[%c1_54, %c0_55] {strides = array<i32: 2, 1>} : memref<22x128xf32, #tpu.memory_space<vmem>>, vector<11x128xf32>
    %77 = arith.maximumf %75, %76 : vector<11x128xf32>
    %cst_56 = arith.constant 0.000000e+00 : f32
    %78 = vector.broadcast %cst_56 : f32 to vector<16x128xf32>
    %c0_57 = arith.constant 0 : index
    %c0_58 = arith.constant 0 : index
    %79 = vector.load %arg18[%c0_57, %c0_58] : memref<16x128xf32, #tpu.memory_space<vmem>>, vector<16x128xf32>
    tpu.vector_store %arg18[%c0_57, %c0_58], %78 {strides = array<i32>} : memref<16x128xf32, #tpu.memory_space<vmem>>, vector<16x128xf32>,
    %c1_59 = arith.constant 1 : index
    %c0_60 = arith.constant 0 : index
    %80 = vector.load %arg18[%c1_59, %c0_60] : memref<16x128xf32, #tpu.memory_space<vmem>>, vector<11x128xf32>
    tpu.vector_store %arg18[%c1_59, %c0_60], %77 {strides = array<i32>} : memref<16x128xf32, #tpu.memory_space<vmem>>, vector<11x128xf32>,
    %cst_61 = arith.constant 0.000000e+00 : f32
    %81 = vector.broadcast %cst_61 : f32 to vector<3x128xf32>
    %c5 = arith.constant 5 : index
    %c0_62 = arith.constant 0 : index
    %82 = vector.load %arg18[%c5, %c0_62] : memref<16x128xf32, #tpu.memory_space<vmem>>, vector<3x128xf32>
    tpu.vector_store %arg18[%c5, %c0_62], %81 {strides = array<i32>} : memref<16x128xf32, #tpu.memory_space<vmem>>, vector<3x128xf32>,
    %c0_63 = arith.constant 0 : index
    %c0_64 = arith.constant 0 : index
    %83 = vector.load %arg18[%c0_63, %c0_64] : memref<16x128xf32, #tpu.memory_space<vmem>>, vector<16x128xf32>
    %84 = arith.truncf %83 : vector<16x128xf32> to vector<16x128xbf16>
    %cst_65 = arith.constant 0.000000e+00 : f32
    %85 = vector.broadcast %cst_65 : f32 to vector<11x128xf32>
    %86 = vector.extract_strided_slice %84 {offsets = [0, 0], sizes = [11, 128], strides = [1, 1]} : vector<16x128xbf16> to vector<11x128xbf16>
    %c0_66 = arith.constant 0 : index
    %c0_67 = arith.constant 0 : index
    %c0_68 = arith.constant 0 : index
    %87 = vector.load %arg5[%c0_66, %c0_67, %c0_68] : memref<3x128x128xbf16, #tpu.memory_space<vmem>>, vector<1x128x128xbf16>
    %88 = vector.shape_cast %87 : vector<1x128x128xbf16> to vector<128x128xbf16>
    %cst_69 = arith.constant dense<0.000000e+00> : vector<11x128xf32>
    %89 = tpu.matmul %86, %88, %cst_69 {dimension_numbers = #tpu.dot_dimension_numbers<[1], [0], [0], [1], [0, 0, 1, 1], [], []>} : vector<11x128xbf16>, vector<128x128xbf16>, vector<11x128xf32> -> vector<11x128xf32>
    %90 = arith.addf %85, %89 : vector<11x128xf32>
    %91 = vector.extract_strided_slice %84 {offsets = [1, 0], sizes = [11, 128], strides = [1, 1]} : vector<16x128xbf16> to vector<11x128xbf16>
    %c1_70 = arith.constant 1 : index
    %c0_71 = arith.constant 0 : index
    %c0_72 = arith.constant 0 : index
    %92 = vector.load %arg5[%c1_70, %c0_71, %c0_72] : memref<3x128x128xbf16, #tpu.memory_space<vmem>>, vector<1x128x128xbf16>
    %93 = vector.shape_cast %92 : vector<1x128x128xbf16> to vector<128x128xbf16>
    %cst_73 = arith.constant dense<0.000000e+00> : vector<11x128xf32>
    %94 = tpu.matmul %91, %93, %cst_73 {dimension_numbers = #tpu.dot_dimension_numbers<[1], [0], [0], [1], [0, 0, 1, 1], [], []>} : vector<11x128xbf16>, vector<128x128xbf16>, vector<11x128xf32> -> vector<11x128xf32>
    %95 = arith.addf %90, %94 : vector<11x128xf32>
    %96 = vector.extract_strided_slice %84 {offsets = [2, 0], sizes = [11, 128], strides = [1, 1]} : vector<16x128xbf16> to vector<11x128xbf16>
    %c2_74 = arith.constant 2 : index
    %c0_75 = arith.constant 0 : index
    %c0_76 = arith.constant 0 : index
    %97 = vector.load %arg5[%c2_74, %c0_75, %c0_76] : memref<3x128x128xbf16, #tpu.memory_space<vmem>>, vector<1x128x128xbf16>
    %98 = vector.shape_cast %97 : vector<1x128x128xbf16> to vector<128x128xbf16>
    %cst_77 = arith.constant dense<0.000000e+00> : vector<11x128xf32>
    %99 = tpu.matmul %96, %98, %cst_77 {dimension_numbers = #tpu.dot_dimension_numbers<[1], [0], [0], [1], [0, 0, 1, 1], [], []>} : vector<11x128xbf16>, vector<128x128xbf16>, vector<11x128xf32> -> vector<11x128xf32>
    %100 = arith.addf %95, %99 : vector<11x128xf32>
    %c0_78 = arith.constant 0 : index
    %c0_79 = arith.constant 0 : index
    %101 = vector.load %arg6[%c0_78, %c0_79] : memref<1x128xf32, #tpu.memory_space<vmem>>, vector<1x128xf32>
    %102 = vector.broadcast %101 : vector<1x128xf32> to vector<11x128xf32>
    %103 = arith.addf %100, %102 : vector<11x128xf32>
    %cst_80 = arith.constant 0.000000e+00 : f32
    %104 = vector.broadcast %cst_80 : f32 to vector<11x128xf32>
    %105 = arith.maximumf %103, %104 : vector<11x128xf32>
    %cst_81 = arith.constant 0.000000e+00 : f32
    %106 = vector.broadcast %cst_81 : f32 to vector<16x128xf32>
    %c0_82 = arith.constant 0 : index
    %c0_83 = arith.constant 0 : index
    %107 = vector.load %arg19[%c0_82, %c0_83] : memref<16x128xf32, #tpu.memory_space<vmem>>, vector<16x128xf32>
    tpu.vector_store %arg19[%c0_82, %c0_83], %106 {strides = array<i32>} : memref<16x128xf32, #tpu.memory_space<vmem>>, vector<16x128xf32>,
    %c1_84 = arith.constant 1 : index
    %c0_85 = arith.constant 0 : index
    %108 = vector.load %arg19[%c1_84, %c0_85] : memref<16x128xf32, #tpu.memory_space<vmem>>, vector<11x128xf32>
    tpu.vector_store %arg19[%c1_84, %c0_85], %105 {strides = array<i32>} : memref<16x128xf32, #tpu.memory_space<vmem>>, vector<11x128xf32>,
    %cst_86 = arith.constant 0.000000e+00 : f32
    %109 = vector.broadcast %cst_86 : f32 to vector<3x128xf32>
    %c5_87 = arith.constant 5 : index
    %c0_88 = arith.constant 0 : index
    %110 = vector.load %arg19[%c5_87, %c0_88] : memref<16x128xf32, #tpu.memory_space<vmem>>, vector<3x128xf32>
    tpu.vector_store %arg19[%c5_87, %c0_88], %109 {strides = array<i32>} : memref<16x128xf32, #tpu.memory_space<vmem>>, vector<3x128xf32>,
    %c0_89 = arith.constant 0 : index
    %c0_90 = arith.constant 0 : index
    %111 = vector.load %arg19[%c0_89, %c0_90] : memref<16x128xf32, #tpu.memory_space<vmem>>, vector<16x128xf32>
    %112 = arith.truncf %111 : vector<16x128xf32> to vector<16x128xbf16>
    %cst_91 = arith.constant 0.000000e+00 : f32
    %113 = vector.broadcast %cst_91 : f32 to vector<11x128xf32>
    %114 = vector.extract_strided_slice %112 {offsets = [0, 0], sizes = [11, 128], strides = [1, 1]} : vector<16x128xbf16> to vector<11x128xbf16>
    %c0_92 = arith.constant 0 : index
    %c0_93 = arith.constant 0 : index
    %c0_94 = arith.constant 0 : index
    %115 = vector.load %arg7[%c0_92, %c0_93, %c0_94] : memref<3x128x128xbf16, #tpu.memory_space<vmem>>, vector<1x128x128xbf16>
    %116 = vector.shape_cast %115 : vector<1x128x128xbf16> to vector<128x128xbf16>
    %cst_95 = arith.constant dense<0.000000e+00> : vector<11x128xf32>
    %117 = tpu.matmul %114, %116, %cst_95 {dimension_numbers = #tpu.dot_dimension_numbers<[1], [0], [0], [1], [0, 0, 1, 1], [], []>} : vector<11x128xbf16>, vector<128x128xbf16>, vector<11x128xf32> -> vector<11x128xf32>
    %118 = arith.addf %113, %117 : vector<11x128xf32>
    %119 = vector.extract_strided_slice %112 {offsets = [1, 0], sizes = [11, 128], strides = [1, 1]} : vector<16x128xbf16> to vector<11x128xbf16>
    %c1_96 = arith.constant 1 : index
    %c0_97 = arith.constant 0 : index
    %c0_98 = arith.constant 0 : index
    %120 = vector.load %arg7[%c1_96, %c0_97, %c0_98] : memref<3x128x128xbf16, #tpu.memory_space<vmem>>, vector<1x128x128xbf16>
    %121 = vector.shape_cast %120 : vector<1x128x128xbf16> to vector<128x128xbf16>
    %cst_99 = arith.constant dense<0.000000e+00> : vector<11x128xf32>
    %122 = tpu.matmul %119, %121, %cst_99 {dimension_numbers = #tpu.dot_dimension_numbers<[1], [0], [0], [1], [0, 0, 1, 1], [], []>} : vector<11x128xbf16>, vector<128x128xbf16>, vector<11x128xf32> -> vector<11x128xf32>
    %123 = arith.addf %118, %122 : vector<11x128xf32>
    %124 = vector.extract_strided_slice %112 {offsets = [2, 0], sizes = [11, 128], strides = [1, 1]} : vector<16x128xbf16> to vector<11x128xbf16>
    %c2_100 = arith.constant 2 : index
    %c0_101 = arith.constant 0 : index
    %c0_102 = arith.constant 0 : index
    %125 = vector.load %arg7[%c2_100, %c0_101, %c0_102] : memref<3x128x128xbf16, #tpu.memory_space<vmem>>, vector<1x128x128xbf16>
    %126 = vector.shape_cast %125 : vector<1x128x128xbf16> to vector<128x128xbf16>
    %cst_103 = arith.constant dense<0.000000e+00> : vector<11x128xf32>
    %127 = tpu.matmul %124, %126, %cst_103 {dimension_numbers = #tpu.dot_dimension_numbers<[1], [0], [0], [1], [0, 0, 1, 1], [], []>} : vector<11x128xbf16>, vector<128x128xbf16>, vector<11x128xf32> -> vector<11x128xf32>
    %128 = arith.addf %123, %127 : vector<11x128xf32>
    %c0_104 = arith.constant 0 : index
    %c0_105 = arith.constant 0 : index
    %129 = vector.load %arg8[%c0_104, %c0_105] : memref<1x128xf32, #tpu.memory_space<vmem>>, vector<1x128xf32>
    %130 = vector.broadcast %129 : vector<1x128xf32> to vector<11x128xf32>
    %131 = arith.addf %128, %130 : vector<11x128xf32>
    %132 = arith.addf %131, %77 : vector<11x128xf32>
    %cst_106 = arith.constant 0.000000e+00 : f32
    %133 = vector.broadcast %cst_106 : f32 to vector<11x128xf32>
    %134 = arith.maximumf %132, %133 : vector<11x128xf32>
    %c0_107 = arith.constant 0 : index
    %c0_108 = arith.constant 0 : index
    %135 = vector.load %arg20[%c0_107, %c0_108] : memref<11x128xf32, #tpu.memory_space<vmem>>, vector<11x128xf32>
    tpu.vector_store %arg20[%c0_107, %c0_108], %134 {strides = array<i32>} : memref<11x128xf32, #tpu.memory_space<vmem>>, vector<11x128xf32>,
    %cst_109 = arith.constant 0.000000e+00 : f32
    %136 = vector.broadcast %cst_109 : f32 to vector<2x128xf32>
    %c0_110 = arith.constant 0 : index
    %c0_111 = arith.constant 0 : index
    %137 = tpu.strided_load %arg20[%c0_110, %c0_111] {strides = array<i32: 7, 1>} : memref<11x128xf32, #tpu.memory_space<vmem>>, vector<2x128xf32>
    %138 = arith.truncf %137 : vector<2x128xf32> to vector<2x128xbf16>
    %c0_112 = arith.constant 0 : index
    %c0_113 = arith.constant 0 : index
    %c0_114 = arith.constant 0 : index
    %139 = vector.load %arg9[%c0_112, %c0_113, %c0_114] : memref<4x128x128xbf16, #tpu.memory_space<vmem>>, vector<1x128x128xbf16>
    %140 = vector.shape_cast %139 : vector<1x128x128xbf16> to vector<128x128xbf16>
    %cst_115 = arith.constant dense<0.000000e+00> : vector<2x128xf32>
    %141 = tpu.matmul %138, %140, %cst_115 {dimension_numbers = #tpu.dot_dimension_numbers<[1], [0], [0], [1], [0, 0, 1, 1], [], []>} : vector<2x128xbf16>, vector<128x128xbf16>, vector<2x128xf32> -> vector<2x128xf32>
    %142 = arith.addf %136, %141 : vector<2x128xf32>
    %c1_116 = arith.constant 1 : index
    %c0_117 = arith.constant 0 : index
    %143 = tpu.strided_load %arg20[%c1_116, %c0_117] {strides = array<i32: 7, 1>} : memref<11x128xf32, #tpu.memory_space<vmem>>, vector<2x128xf32>
    %144 = arith.truncf %143 : vector<2x128xf32> to vector<2x128xbf16>
    %c1_118 = arith.constant 1 : index
    %c0_119 = arith.constant 0 : index
    %c0_120 = arith.constant 0 : index
    %145 = vector.load %arg9[%c1_118, %c0_119, %c0_120] : memref<4x128x128xbf16, #tpu.memory_space<vmem>>, vector<1x128x128xbf16>
    %146 = vector.shape_cast %145 : vector<1x128x128xbf16> to vector<128x128xbf16>
    %cst_121 = arith.constant dense<0.000000e+00> : vector<2x128xf32>
    %147 = tpu.matmul %144, %146, %cst_121 {dimension_numbers = #tpu.dot_dimension_numbers<[1], [0], [0], [1], [0, 0, 1, 1], [], []>} : vector<2x128xbf16>, vector<128x128xbf16>, vector<2x128xf32> -> vector<2x128xf32>
    %148 = arith.addf %142, %147 : vector<2x128xf32>
    %c2_122 = arith.constant 2 : index
    %c0_123 = arith.constant 0 : index
    %149 = tpu.strided_load %arg20[%c2_122, %c0_123] {strides = array<i32: 7, 1>} : memref<11x128xf32, #tpu.memory_space<vmem>>, vector<2x128xf32>
    %150 = arith.truncf %149 : vector<2x128xf32> to vector<2x128xbf16>
    %c2_124 = arith.constant 2 : index
    %c0_125 = arith.constant 0 : index
    %c0_126 = arith.constant 0 : index
    %151 = vector.load %arg9[%c2_124, %c0_125, %c0_126] : memref<4x128x128xbf16, #tpu.memory_space<vmem>>, vector<1x128x128xbf16>
    %152 = vector.shape_cast %151 : vector<1x128x128xbf16> to vector<128x128xbf16>
    %cst_127 = arith.constant dense<0.000000e+00> : vector<2x128xf32>
    %153 = tpu.matmul %150, %152, %cst_127 {dimension_numbers = #tpu.dot_dimension_numbers<[1], [0], [0], [1], [0, 0, 1, 1], [], []>} : vector<2x128xbf16>, vector<128x128xbf16>, vector<2x128xf32> -> vector<2x128xf32>
    %154 = arith.addf %148, %153 : vector<2x128xf32>
    %c3_128 = arith.constant 3 : index
    %c0_129 = arith.constant 0 : index
    %155 = tpu.strided_load %arg20[%c3_128, %c0_129] {strides = array<i32: 7, 1>} : memref<11x128xf32, #tpu.memory_space<vmem>>, vector<2x128xf32>
    %156 = arith.truncf %155 : vector<2x128xf32> to vector<2x128xbf16>
    %c3_130 = arith.constant 3 : index
    %c0_131 = arith.constant 0 : index
    %c0_132 = arith.constant 0 : index
    %157 = vector.load %arg9[%c3_130, %c0_131, %c0_132] : memref<4x128x128xbf16, #tpu.memory_space<vmem>>, vector<1x128x128xbf16>
    %158 = vector.shape_cast %157 : vector<1x128x128xbf16> to vector<128x128xbf16>
    %cst_133 = arith.constant dense<0.000000e+00> : vector<2x128xf32>
    %159 = tpu.matmul %156, %158, %cst_133 {dimension_numbers = #tpu.dot_dimension_numbers<[1], [0], [0], [1], [0, 0, 1, 1], [], []>} : vector<2x128xbf16>, vector<128x128xbf16>, vector<2x128xf32> -> vector<2x128xf32>
    %160 = arith.addf %154, %159 : vector<2x128xf32>
    %c0_134 = arith.constant 0 : index
    %c0_135 = arith.constant 0 : index
    %161 = vector.load %arg10[%c0_134, %c0_135] : memref<1x128xf32, #tpu.memory_space<vmem>>, vector<1x128xf32>
    %162 = vector.broadcast %161 : vector<1x128xf32> to vector<2x128xf32>
    %163 = arith.addf %160, %162 : vector<2x128xf32>
    %cst_136 = arith.constant 0.000000e+00 : f32
    %164 = vector.broadcast %cst_136 : f32 to vector<2x128xf32>
    %165 = arith.maximumf %163, %164 : vector<2x128xf32>
    %166 = arith.truncf %165 : vector<2x128xf32> to vector<2x128xbf16>
    %c0_137 = arith.constant 0 : index
    %c0_138 = arith.constant 0 : index
    %167 = vector.load %arg11[%c0_137, %c0_138] : memref<128x128xbf16, #tpu.memory_space<vmem>>, vector<128x128xbf16>
    %cst_139 = arith.constant dense<0.000000e+00> : vector<2x128xf32>
    %168 = tpu.matmul %166, %167, %cst_139 {dimension_numbers = #tpu.dot_dimension_numbers<[1], [0], [0], [1], [0, 0, 1, 1], [], []>} : vector<2x128xbf16>, vector<128x128xbf16>, vector<2x128xf32> -> vector<2x128xf32>
    %c0_140 = arith.constant 0 : index
    %c0_141 = arith.constant 0 : index
    %169 = vector.load %arg12[%c0_140, %c0_141] : memref<1x128xf32, #tpu.memory_space<vmem>>, vector<1x128xf32>
    %170 = vector.broadcast %169 : vector<1x128xf32> to vector<2x128xf32>
    %171 = arith.addf %168, %170 : vector<2x128xf32>
    %cst_142 = arith.constant 0.000000e+00 : f32
    %172 = vector.broadcast %cst_142 : f32 to vector<2x128xf32>
    %173 = arith.maximumf %171, %172 : vector<2x128xf32>
    %174 = arith.truncf %173 : vector<2x128xf32> to vector<2x128xbf16>
    %c0_143 = arith.constant 0 : index
    %c0_144 = arith.constant 0 : index
    %175 = vector.load %arg13[%c0_143, %c0_144] : memref<128x128xbf16, #tpu.memory_space<vmem>>, vector<128x128xbf16>
    %cst_145 = arith.constant dense<0.000000e+00> : vector<2x128xf32>
    %176 = tpu.matmul %174, %175, %cst_145 {dimension_numbers = #tpu.dot_dimension_numbers<[1], [0], [0], [1], [0, 0, 1, 1], [], []>} : vector<2x128xbf16>, vector<128x128xbf16>, vector<2x128xf32> -> vector<2x128xf32>
    %c0_146 = arith.constant 0 : index
    %c0_147 = arith.constant 0 : index
    %177 = vector.load %arg14[%c0_146, %c0_147] : memref<1x128xf32, #tpu.memory_space<vmem>>, vector<1x128xf32>
    %178 = vector.broadcast %177 : vector<1x128xf32> to vector<2x128xf32>
    %179 = arith.addf %176, %178 : vector<2x128xf32>
    %c0_148 = arith.constant 0 : index
    %c0_149 = arith.constant 0 : index
    %180 = vector.load %arg15[%c0_148, %c0_149] : memref<2x128xf32, #tpu.memory_space<vmem>>, vector<2x128xf32>
    tpu.vector_store %arg15[%c0_148, %c0_149], %179 {strides = array<i32>} : memref<2x128xf32, #tpu.memory_space<vmem>>, vector<2x128xf32>,
    return
  }
}

</mosaic_0001>

<llo_original>
// kernel: net_forward.1
$region0: #{net_forward.1}
  #allocation0 [shape = 'u32[]', space=smem, size = 0x4, offset = 0x4, fixed_abs, tag = 'smem constant byte address 0x4 - core index']
  #allocation1 [shape = 'u32[144,128]{1,0:T(1,128)}', space=vmem, size = 0x12000, scoped, tag = 'internal scratch']
  #allocation2 [shape = 'f32[52,128]{1,0:T(8,128)}', space=vmem, size = 0x7000, scoped, tag = 'scratch operand']
  #allocation3 [shape = 'f32[22,128]{1,0:T(8,128)}', space=vmem, size = 0x3000, scoped, tag = 'scratch operand']
  #allocation4 [shape = 'f32[16,128]{1,0:T(8,128)}', space=vmem, size = 0x2000, scoped, tag = 'scratch operand']
  #allocation5 [shape = 'f32[16,128]{1,0:T(8,128)}', space=vmem, size = 0x2000, scoped, tag = 'scratch operand']
  #allocation6 [shape = 'f32[11,128]{1,0:T(8,128)}', space=vmem, size = 0x2000, scoped, tag = 'scratch operand']
  %s0 = inlined_call_operand.vmem [shape: bf16[56,28], index: 0, kind: input, shape index: {}]
  %s1 = inlined_call_operand.vmem [shape: bf16[5,28,256], index: 1, kind: input, shape index: {}]
  %s2 = inlined_call_operand.vmem [shape: f32[1,128], index: 2, kind: input, shape index: {}]
  %s3 = inlined_call_operand.hbm [shape: bf16[5,128,256], index: 3, kind: input, shape index: {}]
  %s4 = inlined_call_operand.vmem [shape: f32[1,128], index: 4, kind: input, shape index: {}]
  %s5 = inlined_call_operand.hbm [shape: bf16[3,128,128], index: 5, kind: input, shape index: {}]
  %s6 = inlined_call_operand.hbm [shape: f32[1,128], index: 6, kind: input, shape index: {}]
  %s7 = inlined_call_operand.hbm [shape: bf16[3,128,128], index: 7, kind: input, shape index: {}]
  %s8 = inlined_call_operand.hbm [shape: f32[1,128], index: 8, kind: input, shape index: {}]
  %s9 = inlined_call_operand.hbm [shape: bf16[4,128,128], index: 9, kind: input, shape index: {}]
  %s10 = inlined_call_operand.hbm [shape: f32[1,128], index: 10, kind: input, shape index: {}]
  %s11 = inlined_call_operand.hbm [shape: bf16[128,128], index: 11, kind: input, shape index: {}]
  %s12 = inlined_call_operand.hbm [shape: f32[1,128], index: 12, kind: input, shape index: {}]
  %s13 = inlined_call_operand.hbm [shape: bf16[128,128], index: 13, kind: input, shape index: {}]
  %s14 = inlined_call_operand.hbm [shape: f32[1,128], index: 14, kind: input, shape index: {}]
  %s15 = inlined_call_operand.hbm [shape: f32[2,128], index: 15, kind: output, shape index: {}]
  %s16 = sld [smem:[#allocation0]]
  $region114: #{net_forward.1} parent=0
    _
  %s18 = ssub.s32 1, %s16
  %s19 = scalar_select 0, %s18, %s16
  $region1: #{net_forward.1} parent=0
    #allocation7 [shape = 'u8[327680]{0}', space=vmem, size = 0x50000, scoped, tag = 'input window, operand 3, single buffered']
    #allocation8 [shape = 's32[1]{0}', space=sflag, size = 0x4, scoped, tag = 'scoped memory for net_forward.1']
    #allocation9 [shape = 's32[1]{0}', space=sflag, size = 0x4, scoped, tag = 'scoped memory for net_forward.1']
    #allocation10 [shape = 'u8[98304]{0}', space=vmem, size = 0x18000, scoped, tag = 'input window, operand 5, single buffered']
    #allocation11 [shape = 's32[1]{0}', space=sflag, size = 0x4, scoped, tag = 'scoped memory for net_forward.1']
    #allocation12 [shape = 'u8[512]{0}', space=vmem, size = 0x400, scoped, tag = 'input window, operand 6, single buffered']
    #allocation13 [shape = 'u8[98304]{0}', space=vmem, size = 0x18000, scoped, tag = 'input window, operand 7, single buffered']
    #allocation14 [shape = 's32[1]{0}', space=sflag, size = 0x4, scoped, tag = 'scoped memory for net_forward.1']
    #allocation15 [shape = 'u8[512]{0}', space=vmem, size = 0x400, scoped, tag = 'input window, operand 8, single buffered']
    #allocation16 [shape = 'u8[131072]{0}', space=vmem, size = 0x20000, scoped, tag = 'input window, operand 9, single buffered']
    #allocation17 [shape = 's32[1]{0}', space=sflag, size = 0x4, scoped, tag = 'scoped memory for net_forward.1']
    #allocation18 [shape = 'u8[512]{0}', space=vmem, size = 0x400, scoped, tag = 'input window, operand 10, single buffered']
    #allocation19 [shape = 'u8[32768]{0}', space=vmem, size = 0x8000, scoped, tag = 'input window, operand 11, single buffered']
    #allocation20 [shape = 's32[1]{0}', space=sflag, size = 0x4, scoped, tag = 'scoped memory for net_forward.1']
    #allocation21 [shape = 'u8[512]{0}', space=vmem, size = 0x400, scoped, tag = 'input window, operand 12, single buffered']
    #allocation22 [shape = 'u8[32768]{0}', space=vmem, size = 0x8000, scoped, tag = 'input window, operand 13, single buffered']
    #allocation23 [shape = 's32[1]{0}', space=sflag, size = 0x4, scoped, tag = 'scoped memory for net_forward.1']
    #allocation24 [shape = 'u8[512]{0}', space=vmem, size = 0x400, scoped, tag = 'input window, operand 14, single buffered']
    #allocation25 [shape = 'u8[1024]{0}', space=vmem, size = 0x400, scoped, tag = 'output window, operand 0, single buffered']
    %20 = vsyncpa [#allocation8], 0
    %21 = vsyncpa [#allocation11], 0
    %22 = vsyncpa [#allocation14], 0
    %23 = vsyncpa [#allocation17], 0
    %24 = vsyncpa [#allocation20], 0
    %25 = vsyncpa [#allocation23], 0
    %26 = vsyncpa [#allocation9], 0
    // Predicated region
    $region2: #{net_forward.1} parent=1 // pred_check
      _
    $region3: #{net_forward.1} parent=1 // pred_check_branch
      %28 = sbr.rel (0) target = $region5
    $region4: #{net_forward.1} parent=1 // pred_region
      _
    $region5: #{net_forward.1} parent=1 // pred_fallthru
      _
    // Predicated region
    $region6: #{net_forward.1} parent=1 // pred_check
      _
    $region7: #{net_forward.1} parent=1 // pred_check_branch
      %30 = sbr.rel (0) target = $region9
    $region8: #{net_forward.1} parent=1 // pred_region
      _
    $region9: #{net_forward.1} parent=1 // pred_fallthru
      _
    // Predicated region
    $region10: #{net_forward.1} parent=1 // pred_check
      _
    $region11: #{net_forward.1} parent=1 // pred_check_branch
      %32 = sbr.rel (0) target = $region13
    $region12: #{net_forward.1} parent=1 // pred_region
      _
    $region13: #{net_forward.1} parent=1 // pred_fallthru
      _
    // Predicated region
    $region14: #{net_forward.1} parent=1 // pred_check
      _
    $region15: #{net_forward.1} parent=1 // pred_check_branch
      %34 = sbr.rel (0) target = $region17
    $region16: #{net_forward.1} parent=1 // pred_region
      %s36 = ssub.s32 10240, 10240
      %37 = vsyncadd [#allocation8], %s36
      %s38 = sshll.u32 [#allocation7], 4
      %s39 = int_to_ptr.vmem [resolvable:$true] %s38
      %44 = dma.hbm_to_vmem [thread:$0]  %s3, 10240, %s39, [#allocation8], 128, 128, 8
    $region17: #{net_forward.1} parent=1 // pred_fallthru
      _
    // Predicated region
    $region18: #{net_forward.1} parent=1 // pred_check
      _
    $region19: #{net_forward.1} parent=1 // pred_check_branch
      %46 = sbr.rel (0) target = $region21
    $region20: #{net_forward.1} parent=1 // pred_region
      _
    $region21: #{net_forward.1} parent=1 // pred_fallthru
      _
    // Predicated region
    $region22: #{net_forward.1} parent=1 // pred_check
      _
    $region23: #{net_forward.1} parent=1 // pred_check_branch
      %48 = sbr.rel (0) target = $region25
    $region24: #{net_forward.1} parent=1 // pred_region
      %s50 = ssub.s32 3072, 3072
      %51 = vsyncadd [#allocation11], %s50
      %s52 = sshll.u32 [#allocation10], 4
      %s53 = int_to_ptr.vmem [resolvable:$true] %s52
      %58 = dma.hbm_to_vmem [thread:$0]  %s5, 3072, %s53, [#allocation11], 64, 64, 4
    $region25: #{net_forward.1} parent=1 // pred_fallthru
      _
    // Predicated region
    $region26: #{net_forward.1} parent=1 // pred_check
      _
    $region27: #{net_forward.1} parent=1 // pred_check_branch
      %60 = sbr.rel (0) target = $region29
    $region28: #{net_forward.1} parent=1 // pred_region
      %s62 = ssub.s32 16, 16
      %63 = vsyncadd [#allocation11], %s62
      %s65 = sshll.u32 [#allocation12], 4
      %s66 = int_to_ptr.vmem [resolvable:$true] %s65
      %68 = dma.hbm_to_vmem [thread:$0]  %s6, 16, %s66, [#allocation11]
    $region29: #{net_forward.1} parent=1 // pred_fallthru
      _
    // Predicated region
    $region30: #{net_forward.1} parent=1 // pred_check
      _
    $region31: #{net_forward.1} parent=1 // pred_check_branch
      %70 = sbr.rel (0) target = $region33
    $region32: #{net_forward.1} parent=1 // pred_region
      %s72 = ssub.s32 3072, 3072
      %73 = vsyncadd [#allocation14], %s72
      %s74 = sshll.u32 [#allocation13], 4
      %s75 = int_to_ptr.vmem [resolvable:$true] %s74
      %80 = dma.hbm_to_vmem [thread:$0]  %s7, 3072, %s75, [#allocation14], 64, 64, 4
    $region33: #{net_forward.1} parent=1 // pred_fallthru
      _
    // Predicated region
    $region34: #{net_forward.1} parent=1 // pred_check
      _
    $region35: #{net_forward.1} parent=1 // pred_check_branch
      %82 = sbr.rel (0) target = $region37
    $region36: #{net_forward.1} parent=1 // pred_region
      %s84 = ssub.s32 16, 16
      %85 = vsyncadd [#allocation14], %s84
      %s87 = sshll.u32 [#allocation15], 4
      %s88 = int_to_ptr.vmem [resolvable:$true] %s87
      %90 = dma.hbm_to_vmem [thread:$0]  %s8, 16, %s88, [#allocation14]
    $region37: #{net_forward.1} parent=1 // pred_fallthru
      _
    // Predicated region
    $region38: #{net_forward.1} parent=1 // pred_check
      _
    $region39: #{net_forward.1} parent=1 // pred_check_branch
      %92 = sbr.rel (0) target = $region41
    $region40: #{net_forward.1} parent=1 // pred_region
      %s94 = ssub.s32 4096, 4096
      %95 = vsyncadd [#allocation17], %s94
      %s96 = sshll.u32 [#allocation16], 4
      %s97 = int_to_ptr.vmem [resolvable:$true] %s96
      %102 = dma.hbm_to_vmem [thread:$0]  %s9, 4096, %s97, [#allocation17], 64, 64, 4
    $region41: #{net_forward.1} parent=1 // pred_fallthru
      _
    // Predicated region
    $region42: #{net_forward.1} parent=1 // pred_check
      _
    $region43: #{net_forward.1} parent=1 // pred_check_branch
      %104 = sbr.rel (0) target = $region45
    $region44: #{net_forward.1} parent=1 // pred_region
      %s106 = ssub.s32 16, 16
      %107 = vsyncadd [#allocation17], %s106
      %s109 = sshll.u32 [#allocation18], 4
      %s110 = int_to_ptr.vmem [resolvable:$true] %s109
      %112 = dma.hbm_to_vmem [thread:$0]  %s10, 16, %s110, [#allocation17]
    $region45: #{net_forward.1} parent=1 // pred_fallthru
      _
    // Predicated region
    $region46: #{net_forward.1} parent=1 // pred_check
      _
    $region47: #{net_forward.1} parent=1 // pred_check_branch
      %114 = sbr.rel (0) target = $region49
    $region48: #{net_forward.1} parent=1 // pred_region
      %s116 = ssub.s32 1024, 1024
      %117 = vsyncadd [#allocation20], %s116
      %s118 = sshll.u32 [#allocation19], 4
      %s119 = int_to_ptr.vmem [resolvable:$true] %s118
      %124 = dma.hbm_to_vmem [thread:$0]  %s11, 1024, %s119, [#allocation20], 64, 64, 4
    $region49: #{net_forward.1} parent=1 // pred_fallthru
      _
    // Predicated region
    $region50: #{net_forward.1} parent=1 // pred_check
      _
    $region51: #{net_forward.1} parent=1 // pred_check_branch
      %126 = sbr.rel (0) target = $region53
    $region52: #{net_forward.1} parent=1 // pred_region
      %s128 = ssub.s32 16, 16
      %129 = vsyncadd [#allocation20], %s128
      %s131 = sshll.u32 [#allocation21], 4
      %s132 = int_to_ptr.vmem [resolvable:$true] %s131
      %134 = dma.hbm_to_vmem [thread:$0]  %s12, 16, %s132, [#allocation20]
    $region53: #{net_forward.1} parent=1 // pred_fallthru
      _
    // Predicated region
    $region54: #{net_forward.1} parent=1 // pred_check
      _
    $region55: #{net_forward.1} parent=1 // pred_check_branch
      %136 = sbr.rel (0) target = $region57
    $region56: #{net_forward.1} parent=1 // pred_region
      %s138 = ssub.s32 1024, 1024
      %139 = vsyncadd [#allocation23], %s138
      %s140 = sshll.u32 [#allocation22], 4
      %s141 = int_to_ptr.vmem [resolvable:$true] %s140
      %146 = dma.hbm_to_vmem [thread:$0]  %s13, 1024, %s141, [#allocation23], 64, 64, 4
    $region57: #{net_forward.1} parent=1 // pred_fallthru
      _
    // Predicated region
    $region58: #{net_forward.1} parent=1 // pred_check
      _
    $region59: #{net_forward.1} parent=1 // pred_check_branch
      %148 = sbr.rel (0) target = $region61
    $region60: #{net_forward.1} parent=1 // pred_region
      %s150 = ssub.s32 16, 16
      %151 = vsyncadd [#allocation23], %s150
      %s153 = sshll.u32 [#allocation24], 4
      %s154 = int_to_ptr.vmem [resolvable:$true] %s153
      %156 = dma.hbm_to_vmem [thread:$0]  %s14, 16, %s154, [#allocation23]
    $region61: #{net_forward.1} parent=1 // pred_fallthru
      _
    // Predicated region
    $region62: #{net_forward.1} parent=1 // pred_check
      _
    $region63: #{net_forward.1} parent=1 // pred_check_branch
      %158 = sbr.rel (0) target = $region65
    $region64: #{net_forward.1} parent=1 // pred_region
      %159 = dma.done [#allocation8], 10240
    $region65: #{net_forward.1} parent=1 // pred_fallthru
      _
    // Predicated region
    $region66: #{net_forward.1} parent=1 // pred_check
      _
    $region67: #{net_forward.1} parent=1 // pred_check_branch
      %161 = sbr.rel (0) target = $region69
    $region68: #{net_forward.1} parent=1 // pred_region
      %162 = dma.done [#allocation11], 3072
    $region69: #{net_forward.1} parent=1 // pred_fallthru
      _
    // Predicated region
    $region70: #{net_forward.1} parent=1 // pred_check
      _
    $region71: #{net_forward.1} parent=1 // pred_check_branch
      %164 = sbr.rel (0) target = $region73
    $region72: #{net_forward.1} parent=1 // pred_region
      %165 = dma.done [#allocation11], 16
    $region73: #{net_forward.1} parent=1 // pred_fallthru
      _
    // Predicated region
    $region74: #{net_forward.1} parent=1 // pred_check
      _
    $region75: #{net_forward.1} parent=1 // pred_check_branch
      %167 = sbr.rel (0) target = $region77
    $region76: #{net_forward.1} parent=1 // pred_region
      %168 = dma.done [#allocation14], 3072
    $region77: #{net_forward.1} parent=1 // pred_fallthru
      _
    // Predicated region
    $region78: #{net_forward.1} parent=1 // pred_check
      _
    $region79: #{net_forward.1} parent=1 // pred_check_branch
      %170 = sbr.rel (0) target = $region81
    $region80: #{net_forward.1} parent=1 // pred_region
      %171 = dma.done [#allocation14], 16
    $region81: #{net_forward.1} parent=1 // pred_fallthru
      _
    // Predicated region
    $region82: #{net_forward.1} parent=1 // pred_check
      _
    $region83: #{net_forward.1} parent=1 // pred_check_branch
      %173 = sbr.rel (0) target = $region85
    $region84: #{net_forward.1} parent=1 // pred_region
      %174 = dma.done [#allocation17], 4096
    $region85: #{net_forward.1} parent=1 // pred_fallthru
      _
    // Predicated region
    $region86: #{net_forward.1} parent=1 // pred_check
      _
    $region87: #{net_forward.1} parent=1 // pred_check_branch
      %176 = sbr.rel (0) target = $region89
    $region88: #{net_forward.1} parent=1 // pred_region
      %177 = dma.done [#allocation17], 16
    $region89: #{net_forward.1} parent=1 // pred_fallthru
      _
    // Predicated region
    $region90: #{net_forward.1} parent=1 // pred_check
      _
    $region91: #{net_forward.1} parent=1 // pred_check_branch
      %179 = sbr.rel (0) target = $region93
    $region92: #{net_forward.1} parent=1 // pred_region
      %180 = dma.done [#allocation20], 1024
    $region93: #{net_forward.1} parent=1 // pred_fallthru
      _
    // Predicated region
    $region94: #{net_forward.1} parent=1 // pred_check
      _
    $region95: #{net_forward.1} parent=1 // pred_check_branch
      %182 = sbr.rel (0) target = $region97
    $region96: #{net_forward.1} parent=1 // pred_region
      %183 = dma.done [#allocation20], 16
    $region97: #{net_forward.1} parent=1 // pred_fallthru
      _
    // Predicated region
    $region98: #{net_forward.1} parent=1 // pred_check
      _
    $region99: #{net_forward.1} parent=1 // pred_check_branch
      %185 = sbr.rel (0) target = $region101
    $region100: #{net_forward.1} parent=1 // pred_region
      %186 = dma.done [#allocation23], 1024
    $region101: #{net_forward.1} parent=1 // pred_fallthru
      _
    // Predicated region
    $region102: #{net_forward.1} parent=1 // pred_check
      _
    $region103: #{net_forward.1} parent=1 // pred_check_branch
      %188 = sbr.rel (0) target = $region105
    $region104: #{net_forward.1} parent=1 // pred_region
      %189 = dma.done [#allocation23], 16
    $region105: #{net_forward.1} parent=1 // pred_fallthru
      _
    %v191 = vld [vmem:[%s0] sm:$0xf]
    %v192 = vld [vmem:[%s0 + $0x4] sm:$0xf]
    %v193 = vld [vmem:[%s0 + $0x8] sm:$0xf]
    %v194 = vld [vmem:[%s0 + $0xc] sm:$0xf]
    %v195 = vld [vmem:[%s0 + $0x10] sm:$0xf]
    %v196 = vld [vmem:[%s0 + $0x14] sm:$0xf]
    %v197 = vld [vmem:[%s0 + $0x18] sm:$0xf]
    %v198 = vld [vmem:[%s1] sm:$0xff]
    %v199 = vld [vmem:[%s1 + $0x8] sm:$0xff]
    %v200 = vld [vmem:[%s1 + $0x10] sm:$0xff]
    %v201 = vld [vmem:[%s1 + $0x18] sm:$0x33]
    %s202 = scalar_lea.vmem %s1, 32
    %v203 = vld [vmem:[%s202] sm:$0xff]
    %v204 = vld [vmem:[%s202 + $0x8] sm:$0xff]
    %v205 = vld [vmem:[%s202 + $0x10] sm:$0xff]
    %v206 = vld [vmem:[%s202 + $0x18] sm:$0x33]
    %v214 = vunpack.c.l.b16 %v191
    %v215 = vunpack.c.l.b16 %v192
    %v216 = vunpack.c.l.b16 %v193
    %v217 = vunpack.c.l.b16 %v194
    %v218 = vunpack.c.l.b16 %v195
    %v219 = vunpack.c.l.b16 %v196
    %v220 = vunpack.c.l.b16 %v197
    %v221 = vpack.c.b16 %v215, %v214
    %v222 = vpack.c.b16 %v217, %v216
    %v223 = vpack.c.b16 %v219, %v218
    %v224 = vpack.c.b16 %v220, %v220
    %vm225 = vsmask.f32 7424
    %v227 = vshrl.u32 %v221, 16
    %v229 = vshll.u32 %v221, 16
    %v231 = vrot.slane %v229, 1
    %v232 = vor.u32 %v227, %v231
    %v234 = vshll.u32 %v222, 16
    %v236 = vrot.slane %v234, 1
    %v237 = vsel %vm225, %v232, %v236
    %v238 = vshrl.u32 %v222, 16
    %v240 = vor.u32 %v238, %v236
    %v242 = vshll.u32 %v223, 16
    %v244 = vrot.slane %v242, 1
    %v245 = vsel %vm225, %v240, %v244
    %v246 = vshrl.u32 %v223, 16
    %v248 = vor.u32 %v246, %v244
    %v250 = vshll.u32 %v224, 16
    %v252 = vrot.slane %v250, 1
    %v253 = vsel %vm225, %v248, %v252
    %v254 = vshrl.u32 %v224, 16
    %v256 = vor.u32 %v254, %v252
    %v261 = vunpack.c.l.b16 %v203
    %v262 = vunpack.c.h.b16 %v203
    %v263 = vunpack.c.l.b16 %v204
    %v264 = vunpack.c.h.b16 %v204
    %v265 = vunpack.c.l.b16 %v205
    %v266 = vunpack.c.h.b16 %v205
    %v267 = vunpack.c.l.b16 %v206
    %v268 = vunpack.c.h.b16 %v206
    %v269 = vpack.c.b16 %v263, %v261
    %v270 = vpack.c.b16 %v264, %v262
    %v271 = vpack.c.b16 %v267, %v265
    %v272 = vpack.c.b16 %v268, %v266
    %vm275 = vcmask 228352
    %v277 = vsel %vm275, %v237, 0
    %v280 = vsel %vm275, %v245, 0
    %v283 = vsel %vm275, %v253, 0
    %v286 = vsel %vm275, %v256, 0
    %vm288 = vcmask 1045504
    %v290 = vsel %vm288, %v271, 0
    %v293 = vsel %vm288, %v272, 0
    %295 = vmatprep.subr.bf16.mxu0 0
    %296 = vmatpush1.bf16.msra.mxu0 0
    %297 = vmatprep.subr.bf16.mxu0 0
    %298 = vmatpush1.bf16.msra.mxu0 0
    %299 = vmatprep.subr.bf16.mxu0 0
    %300 = vmatpush1.bf16.msra.mxu0 0
    %301 = vmatprep.subr.bf16.mxu0 0
    %302 = vmatpush1.bf16.msra.mxu0 0
    %303 = vmatprep.subr.bf16.mxu0 0
    %304 = vmatpush1.bf16.msra.mxu0 0
    %305 = vmatprep.subr.bf16.mxu0 0
    %306 = vmatpush1.bf16.msra.mxu0 0
    %307 = vmatprep.subr.bf16.mxu0 %v293
    %308 = vmatpush1.bf16.msra.mxu0 %v290
    %309 = vmatprep.subr.bf16.mxu0 %v270
    %310 = vmatpush1.bf16.msra.mxu0 %v269
    %311 = vmatprep.subr.bf16.mxu0 0
    %312 = vmatpush2.bf16.msra.mxu0 0
    %313 = vmatprep.subr.bf16.mxu0 0
    %314 = vmatpush2.bf16.msra.mxu0 0
    %315 = vmatprep.subr.bf16.mxu0 0
    %316 = vmatpush2.bf16.msra.mxu0 0
    %317 = vmatprep.subr.bf16.mxu0 0
    %318 = vmatpush2.bf16.msra.mxu0 0
    %319 = vmatprep.subr.bf16.mxu0 0
    %320 = vmatpush2.bf16.msra.mxu0 0
    %321 = vmatprep.subr.bf16.mxu0 0
    %322 = vmatpush2.bf16.msra.mxu0 0
    %323 = vmatprep.subr.bf16.mxu0 0
    %324 = vmatpush2.bf16.msra.mxu0 0
    %325 = vmatprep.subr.bf16.mxu0 0
    %326 = vmatpush2.bf16.msra.mxu0 0
    %327 = vmatprep.mubr.bf16.mxu0 0
    %328 = vmatmul.mubr.bf16.gmra.mxu0 %v277
    %v329 = vpop.f32.mrf.mxu0
    %v330 = vadd.f32 0.0, %v329
    %v331 = vpop.f32.mrf.mxu0
    %v332 = vadd.f32 0.0, %v331
    %v333 = vpop.f32.mrf.mxu0
    %v334 = vadd.f32 0.0, %v333
    %v335 = vpop.f32.mrf.mxu0
    %v336 = vadd.f32 0.0, %v335
    %337 = vmatprep.mubr.bf16.mxu0 0
    %338 = vmatmul.mubr.bf16.gmra.mxu0 %v280
    %v339 = vpop.f32.mrf.mxu0
    %v340 = vadd.f32 0.0, %v339
    %v341 = vpop.f32.mrf.mxu0
    %v342 = vadd.f32 0.0, %v341
    %v343 = vpop.f32.mrf.mxu0
    %v344 = vadd.f32 0.0, %v343
    %v345 = vpop.f32.mrf.mxu0
    %v346 = vadd.f32 0.0, %v345
    %347 = vmatprep.mubr.bf16.mxu0 0
    %348 = vmatmul.mubr.bf16.gmra.mxu0 %v283
    %v349 = vpop.f32.mrf.mxu0
    %v350 = vadd.f32 0.0, %v349
    %v351 = vpop.f32.mrf.mxu0
    %v352 = vadd.f32 0.0, %v351
    %v353 = vpop.f32.mrf.mxu0
    %v354 = vadd.f32 0.0, %v353
    %v355 = vpop.f32.mrf.mxu0
    %v356 = vadd.f32 0.0, %v355
    %357 = vmatprep.mubr.bf16.mxu0 0
    %358 = vmatmul.mubr.bf16.gmra.mxu0 %v286
    %v359 = vpop.f32.mrf.mxu0
    %v360 = vadd.f32 0.0, %v359
    %v361 = vpop.f32.mrf.mxu0
    %v362 = vadd.f32 0.0, %v361
    %v363 = vpop.f32.mrf.mxu0
    %v364 = vpop.f32.mrf.mxu0
    %365 = vdwg.mxu0
    %v370 = vunpack.c.l.b16 %v198
    %v371 = vunpack.c.h.b16 %v198
    %v372 = vunpack.c.l.b16 %v199
    %v373 = vunpack.c.h.b16 %v199
    %v374 = vunpack.c.l.b16 %v200
    %v375 = vunpack.c.h.b16 %v200
    %v376 = vunpack.c.l.b16 %v201
    %v377 = vunpack.c.h.b16 %v201
    %v378 = vpack.c.b16 %v372, %v370
    %v379 = vpack.c.b16 %v373, %v371
    %v380 = vpack.c.b16 %v376, %v374
    %v381 = vpack.c.b16 %v377, %v375
    %v384 = vsel %vm275, %v221, 0
    %v386 = vsel %vm275, %v222, 0
    %v388 = vsel %vm275, %v223, 0
    %v390 = vsel %vm275, %v224, 0
    %v393 = vsel %vm288, %v380, 0
    %v396 = vsel %vm288, %v381, 0
    %398 = vmatprep.subr.bf16.mxu0 0
    %399 = vmatpush1.bf16.msra.mxu0 0
    %400 = vmatprep.subr.bf16.mxu0 0
    %401 = vmatpush1.bf16.msra.mxu0 0
    %402 = vmatprep.subr.bf16.mxu0 0
    %403 = vmatpush1.bf16.msra.mxu0 0
    %404 = vmatprep.subr.bf16.mxu0 0
    %405 = vmatpush1.bf16.msra.mxu0 0
    %406 = vmatprep.subr.bf16.mxu0 0
    %407 = vmatpush1.bf16.msra.mxu0 0
    %408 = vmatprep.subr.bf16.mxu0 0
    %409 = vmatpush1.bf16.msra.mxu0 0
    %410 = vmatprep.subr.bf16.mxu0 %v396
    %411 = vmatpush1.bf16.msra.mxu0 %v393
    %412 = vmatprep.subr.bf16.mxu0 %v379
    %413 = vmatpush1.bf16.msra.mxu0 %v378
    %414 = vmatprep.subr.bf16.mxu0 0
    %415 = vmatpush2.bf16.msra.mxu0 0
    %416 = vmatprep.subr.bf16.mxu0 0
    %417 = vmatpush2.bf16.msra.mxu0 0
    %418 = vmatprep.subr.bf16.mxu0 0
    %419 = vmatpush2.bf16.msra.mxu0 0
    %420 = vmatprep.subr.bf16.mxu0 0
    %421 = vmatpush2.bf16.msra.mxu0 0
    %422 = vmatprep.subr.bf16.mxu0 0
    %423 = vmatpush2.bf16.msra.mxu0 0
    %424 = vmatprep.subr.bf16.mxu0 0
    %425 = vmatpush2.bf16.msra.mxu0 0
    %426 = vmatprep.subr.bf16.mxu0 0
    %427 = vmatpush2.bf16.msra.mxu0 0
    %428 = vmatprep.subr.bf16.mxu0 0
    %429 = vmatpush2.bf16.msra.mxu0 0
    %430 = vmatprep.mubr.bf16.mxu0 0
    %431 = vmatmul.mubr.bf16.gmra.mxu0 %v384
    %v432 = vpop.f32.mrf.mxu0
    %v433 = vadd.f32 %v330, %v432
    %v434 = vpop.f32.mrf.mxu0
    %v435 = vadd.f32 %v332, %v434
    %v436 = vpop.f32.mrf.mxu0
    %v437 = vadd.f32 %v334, %v436
    %v438 = vpop.f32.mrf.mxu0
    %v439 = vadd.f32 %v336, %v438
    %440 = vmatprep.mubr.bf16.mxu0 0
    %441 = vmatmul.mubr.bf16.gmra.mxu0 %v386
    %v442 = vpop.f32.mrf.mxu0
    %v443 = vadd.f32 %v340, %v442
    %v444 = vpop.f32.mrf.mxu0
    %v445 = vadd.f32 %v342, %v444
    %v446 = vpop.f32.mrf.mxu0
    %v447 = vadd.f32 %v344, %v446
    %v448 = vpop.f32.mrf.mxu0
    %v449 = vadd.f32 %v346, %v448
    %450 = vmatprep.mubr.bf16.mxu0 0
    %451 = vmatmul.mubr.bf16.gmra.mxu0 %v388
    %v452 = vpop.f32.mrf.mxu0
    %v453 = vadd.f32 %v350, %v452
    %v454 = vpop.f32.mrf.mxu0
    %v455 = vadd.f32 %v352, %v454
    %v456 = vpop.f32.mrf.mxu0
    %v457 = vadd.f32 %v354, %v456
    %v458 = vpop.f32.mrf.mxu0
    %v459 = vadd.f32 %v356, %v458
    %460 = vmatprep.mubr.bf16.mxu0 0
    %461 = vmatmul.mubr.bf16.gmra.mxu0 %v390
    %v462 = vpop.f32.mrf.mxu0
    %v463 = vadd.f32 %v360, %v462
    %v464 = vpop.f32.mrf.mxu0
    %v465 = vadd.f32 %v362, %v464
    %v466 = vpop.f32.mrf.mxu0
    %v467 = vpop.f32.mrf.mxu0
    %468 = vdwg.mxu0
    %s469 = scalar_lea.vmem %s1, 64
    %v470 = vld [vmem:[%s469] sm:$0xff]
    %v471 = vld [vmem:[%s469 + $0x8] sm:$0xff]
    %v472 = vld [vmem:[%s469 + $0x10] sm:$0xff]
    %v473 = vld [vmem:[%s469 + $0x18] sm:$0x33]
    %vm474 = vcmask 1046528
    %v475 = vrot.slane %v221, 1
    %v476 = vrot.slane %v222, 1
    %v477 = vsel %vm474, %v475, %v476
    %v478 = vrot.slane %v223, 1
    %v479 = vsel %vm474, %v476, %v478
    %v480 = vrot.slane %v224, 1
    %v481 = vsel %vm474, %v478, %v480
    %v486 = vunpack.c.l.b16 %v470
    %v487 = vunpack.c.h.b16 %v470
    %v488 = vunpack.c.l.b16 %v471
    %v489 = vunpack.c.h.b16 %v471
    %v490 = vunpack.c.l.b16 %v472
    %v491 = vunpack.c.h.b16 %v472
    %v492 = vunpack.c.l.b16 %v473
    %v493 = vunpack.c.h.b16 %v473
    %v494 = vpack.c.b16 %v488, %v486
    %v495 = vpack.c.b16 %v489, %v487
    %v496 = vpack.c.b16 %v492, %v490
    %v497 = vpack.c.b16 %v493, %v491
    %v501 = vsel %vm275, %v477, 0
    %v504 = vsel %vm275, %v479, 0
    %v507 = vsel %vm275, %v481, 0
    %v510 = vsel %vm275, %v480, 0
    %v513 = vsel %vm288, %v496, 0
    %v516 = vsel %vm288, %v497, 0
    %518 = vmatprep.subr.bf16.mxu0 0
    %519 = vmatpush1.bf16.msra.mxu0 0
    %520 = vmatprep.subr.bf16.mxu0 0
    %521 = vmatpush1.bf16.msra.mxu0 0
    %522 = vmatprep.subr.bf16.mxu0 0
    %523 = vmatpush1.bf16.msra.mxu0 0
    %524 = vmatprep.subr.bf16.mxu0 0
    %525 = vmatpush1.bf16.msra.mxu0 0
    %526 = vmatprep.subr.bf16.mxu0 0
    %527 = vmatpush1.bf16.msra.mxu0 0
    %528 = vmatprep.subr.bf16.mxu0 0
    %529 = vmatpush1.bf16.msra.mxu0 0
    %530 = vmatprep.subr.bf16.mxu0 %v516
    %531 = vmatpush1.bf16.msra.mxu0 %v513
    %532 = vmatprep.subr.bf16.mxu0 %v495
    %533 = vmatpush1.bf16.msra.mxu0 %v494
    %534 = vmatprep.subr.bf16.mxu0 0
    %535 = vmatpush2.bf16.msra.mxu0 0
    %536 = vmatprep.subr.bf16.mxu0 0
    %537 = vmatpush2.bf16.msra.mxu0 0
    %538 = vmatprep.subr.bf16.mxu0 0
    %539 = vmatpush2.bf16.msra.mxu0 0
    %540 = vmatprep.subr.bf16.mxu0 0
    %541 = vmatpush2.bf16.msra.mxu0 0
    %542 = vmatprep.subr.bf16.mxu0 0
    %543 = vmatpush2.bf16.msra.mxu0 0
    %544 = vmatprep.subr.bf16.mxu0 0
    %545 = vmatpush2.bf16.msra.mxu0 0
    %546 = vmatprep.subr.bf16.mxu0 0
    %547 = vmatpush2.bf16.msra.mxu0 0
    %548 = vmatprep.subr.bf16.mxu0 0
    %549 = vmatpush2.bf16.msra.mxu0 0
    %550 = vmatprep.mubr.bf16.mxu0 0
    %551 = vmatmul.mubr.bf16.gmra.mxu0 %v501
    %v552 = vpop.f32.mrf.mxu0
    %v553 = vadd.f32 0.0, %v552
    %v554 = vpop.f32.mrf.mxu0
    %v555 = vadd.f32 0.0, %v554
    %v556 = vpop.f32.mrf.mxu0
    %v557 = vadd.f32 0.0, %v556
    %v558 = vpop.f32.mrf.mxu0
    %v559 = vadd.f32 0.0, %v558
    %560 = vmatprep.mubr.bf16.mxu0 0
    %561 = vmatmul.mubr.bf16.gmra.mxu0 %v504
    %v562 = vpop.f32.mrf.mxu0
    %v563 = vadd.f32 0.0, %v562
    %v564 = vpop.f32.mrf.mxu0
    %v565 = vadd.f32 0.0, %v564
    %v566 = vpop.f32.mrf.mxu0
    %v567 = vadd.f32 0.0, %v566
    %v568 = vpop.f32.mrf.mxu0
    %v569 = vadd.f32 0.0, %v568
    %570 = vmatprep.mubr.bf16.mxu0 0
    %571 = vmatmul.mubr.bf16.gmra.mxu0 %v507
    %v572 = vpop.f32.mrf.mxu0
    %v573 = vadd.f32 0.0, %v572
    %v574 = vpop.f32.mrf.mxu0
    %v575 = vadd.f32 0.0, %v574
    %v576 = vpop.f32.mrf.mxu0
    %v577 = vadd.f32 0.0, %v576
    %v578 = vpop.f32.mrf.mxu0
    %v579 = vadd.f32 0.0, %v578
    %580 = vmatprep.mubr.bf16.mxu0 0
    %581 = vmatmul.mubr.bf16.gmra.mxu0 %v510
    %v582 = vpop.f32.mrf.mxu0
    %v583 = vadd.f32 0.0, %v582
    %v584 = vpop.f32.mrf.mxu0
    %v585 = vadd.f32 0.0, %v584
    %v586 = vpop.f32.mrf.mxu0
    %v587 = vpop.f32.mrf.mxu0
    %588 = vdwg.mxu0
    %v589 = vadd.f32 %v433, %v553
    %v590 = vadd.f32 %v435, %v555
    %v591 = vadd.f32 %v437, %v557
    %v592 = vadd.f32 %v439, %v559
    %v593 = vadd.f32 %v443, %v563
    %v594 = vadd.f32 %v445, %v565
    %v595 = vadd.f32 %v447, %v567
    %v596 = vadd.f32 %v449, %v569
    %v597 = vadd.f32 %v453, %v573
    %v598 = vadd.f32 %v455, %v575
    %v599 = vadd.f32 %v457, %v577
    %v600 = vadd.f32 %v459, %v579
    %v601 = vadd.f32 %v463, %v583
    %v602 = vadd.f32 %v465, %v585
    %s603 = scalar_lea.vmem %s1, 96
    %v604 = vld [vmem:[%s603] sm:$0xff]
    %v605 = vld [vmem:[%s603 + $0x8] sm:$0xff]
    %v606 = vld [vmem:[%s603 + $0x10] sm:$0xff]
    %v607 = vld [vmem:[%s603 + $0x18] sm:$0x33]
    %vm608 = vsmask.f32 6400
    %v609 = vrot.slane %v227, 1
    %v610 = vrot.slane %v229, 2
    %v611 = vor.u32 %v609, %v610
    %v612 = vrot.slane %v238, 1
    %v613 = vrot.slane %v234, 2
    %v614 = vor.u32 %v612, %v613
    %v615 = vsel %vm608, %v611, %v614
    %v616 = vrot.slane %v246, 1
    %v617 = vrot.slane %v242, 2
    %v618 = vor.u32 %v616, %v617
    %v619 = vsel %vm608, %v614, %v618
    %v620 = vrot.slane %v254, 1
    %v621 = vrot.slane %v250, 2
    %v622 = vor.u32 %v620, %v621
    %v623 = vsel %vm608, %v618, %v622
    %v628 = vunpack.c.l.b16 %v604
    %v629 = vunpack.c.h.b16 %v604
    %v630 = vunpack.c.l.b16 %v605
    %v631 = vunpack.c.h.b16 %v605
    %v632 = vunpack.c.l.b16 %v606
    %v633 = vunpack.c.h.b16 %v606
    %v634 = vunpack.c.l.b16 %v607
    %v635 = vunpack.c.h.b16 %v607
    %v636 = vpack.c.b16 %v630, %v628
    %v637 = vpack.c.b16 %v631, %v629
    %v638 = vpack.c.b16 %v634, %v632
    %v639 = vpack.c.b16 %v635, %v633
    %v643 = vsel %vm275, %v615, 0
    %v646 = vsel %vm275, %v619, 0
    %v649 = vsel %vm275, %v623, 0
    %v652 = vsel %vm275, %v622, 0
    %v655 = vsel %vm288, %v638, 0
    %v658 = vsel %vm288, %v639, 0
    %660 = vmatprep.subr.bf16.mxu0 0
    %661 = vmatpush1.bf16.msra.mxu0 0
    %662 = vmatprep.subr.bf16.mxu0 0
    %663 = vmatpush1.bf16.msra.mxu0 0
    %664 = vmatprep.subr.bf16.mxu0 0
    %665 = vmatpush1.bf16.msra.mxu0 0
    %666 = vmatprep.subr.bf16.mxu0 0
    %667 = vmatpush1.bf16.msra.mxu0 0
    %668 = vmatprep.subr.bf16.mxu0 0
    %669 = vmatpush1.bf16.msra.mxu0 0
    %670 = vmatprep.subr.bf16.mxu0 0
    %671 = vmatpush1.bf16.msra.mxu0 0
    %672 = vmatprep.subr.bf16.mxu0 %v658
    %673 = vmatpush1.bf16.msra.mxu0 %v655
    %674 = vmatprep.subr.bf16.mxu0 %v637
    %675 = vmatpush1.bf16.msra.mxu0 %v636
    %676 = vmatprep.subr.bf16.mxu0 0
    %677 = vmatpush2.bf16.msra.mxu0 0
    %678 = vmatprep.subr.bf16.mxu0 0
    %679 = vmatpush2.bf16.msra.mxu0 0
    %680 = vmatprep.subr.bf16.mxu0 0
    %681 = vmatpush2.bf16.msra.mxu0 0
    %682 = vmatprep.subr.bf16.mxu0 0
    %683 = vmatpush2.bf16.msra.mxu0 0
    %684 = vmatprep.subr.bf16.mxu0 0
    %685 = vmatpush2.bf16.msra.mxu0 0
    %686 = vmatprep.subr.bf16.mxu0 0
    %687 = vmatpush2.bf16.msra.mxu0 0
    %688 = vmatprep.subr.bf16.mxu0 0
    %689 = vmatpush2.bf16.msra.mxu0 0
    %690 = vmatprep.subr.bf16.mxu0 0
    %691 = vmatpush2.bf16.msra.mxu0 0
    %692 = vmatprep.mubr.bf16.mxu0 0
    %693 = vmatmul.mubr.bf16.gmra.mxu0 %v643
    %v694 = vpop.f32.mrf.mxu0
    %v695 = vadd.f32 0.0, %v694
    %v696 = vpop.f32.mrf.mxu0
    %v697 = vadd.f32 0.0, %v696
    %v698 = vpop.f32.mrf.mxu0
    %v699 = vadd.f32 0.0, %v698
    %v700 = vpop.f32.mrf.mxu0
    %v701 = vadd.f32 0.0, %v700
    %702 = vmatprep.mubr.bf16.mxu0 0
    %703 = vmatmul.mubr.bf16.gmra.mxu0 %v646
    %v704 = vpop.f32.mrf.mxu0
    %v705 = vadd.f32 0.0, %v704
    %v706 = vpop.f32.mrf.mxu0
    %v707 = vadd.f32 0.0, %v706
    %v708 = vpop.f32.mrf.mxu0
    %v709 = vadd.f32 0.0, %v708
    %v710 = vpop.f32.mrf.mxu0
    %v711 = vadd.f32 0.0, %v710
    %712 = vmatprep.mubr.bf16.mxu0 0
    %713 = vmatmul.mubr.bf16.gmra.mxu0 %v649
    %v714 = vpop.f32.mrf.mxu0
    %v715 = vadd.f32 0.0, %v714
    %v716 = vpop.f32.mrf.mxu0
    %v717 = vadd.f32 0.0, %v716
    %v718 = vpop.f32.mrf.mxu0
    %v719 = vadd.f32 0.0, %v718
    %v720 = vpop.f32.mrf.mxu0
    %v721 = vadd.f32 0.0, %v720
    %722 = vmatprep.mubr.bf16.mxu0 0
    %723 = vmatmul.mubr.bf16.gmra.mxu0 %v652
    %v724 = vpop.f32.mrf.mxu0
    %v725 = vadd.f32 0.0, %v724
    %v726 = vpop.f32.mrf.mxu0
    %v727 = vadd.f32 0.0, %v726
    %v728 = vpop.f32.mrf.mxu0
    %v729 = vpop.f32.mrf.mxu0
    %730 = vdwg.mxu0
    %v731 = vadd.f32 %v589, %v695
    %v732 = vadd.f32 %v590, %v697
    %v733 = vadd.f32 %v591, %v699
    %v734 = vadd.f32 %v592, %v701
    %v735 = vadd.f32 %v593, %v705
    %v736 = vadd.f32 %v594, %v707
    %v737 = vadd.f32 %v595, %v709
    %v738 = vadd.f32 %v596, %v711
    %v739 = vadd.f32 %v597, %v715
    %v740 = vadd.f32 %v598, %v717
    %v741 = vadd.f32 %v599, %v719
    %v742 = vadd.f32 %v600, %v721
    %v743 = vadd.f32 %v601, %v725
    %v744 = vadd.f32 %v602, %v727
    %s745 = scalar_lea.vmem %s1, 128
    %v746 = vld [vmem:[%s745] sm:$0xff]
    %v747 = vld [vmem:[%s745 + $0x8] sm:$0xff]
    %v748 = vld [vmem:[%s745 + $0x10] sm:$0xff]
    %v749 = vld [vmem:[%s745 + $0x18] sm:$0x33]
    %vm750 = vcmask 1045504
    %v751 = vrot.slane %v221, 2
    %v752 = vrot.slane %v222, 2
    %v753 = vsel %vm750, %v751, %v752
    %v754 = vrot.slane %v223, 2
    %v755 = vsel %vm750, %v752, %v754
    %v756 = vrot.slane %v224, 2
    %v757 = vsel %vm750, %v754, %v756
    %v762 = vunpack.c.l.b16 %v746
    %v763 = vunpack.c.h.b16 %v746
    %v764 = vunpack.c.l.b16 %v747
    %v765 = vunpack.c.h.b16 %v747
    %v766 = vunpack.c.l.b16 %v748
    %v767 = vunpack.c.h.b16 %v748
    %v768 = vunpack.c.l.b16 %v749
    %v769 = vunpack.c.h.b16 %v749
    %v770 = vpack.c.b16 %v764, %v762
    %v771 = vpack.c.b16 %v765, %v763
    %v772 = vpack.c.b16 %v768, %v766
    %v773 = vpack.c.b16 %v769, %v767
    %v777 = vsel %vm275, %v753, 0
    %v780 = vsel %vm275, %v755, 0
    %v783 = vsel %vm275, %v757, 0
    %v786 = vsel %vm275, %v756, 0
    %v789 = vsel %vm288, %v772, 0
    %v792 = vsel %vm288, %v773, 0
    %794 = vmatprep.subr.bf16.mxu0 0
    %795 = vmatpush1.bf16.msra.mxu0 0
    %796 = vmatprep.subr.bf16.mxu0 0
    %797 = vmatpush1.bf16.msra.mxu0 0
    %798 = vmatprep.subr.bf16.mxu0 0
    %799 = vmatpush1.bf16.msra.mxu0 0
    %800 = vmatprep.subr.bf16.mxu0 0
    %801 = vmatpush1.bf16.msra.mxu0 0
    %802 = vmatprep.subr.bf16.mxu0 0
    %803 = vmatpush1.bf16.msra.mxu0 0
    %804 = vmatprep.subr.bf16.mxu0 0
    %805 = vmatpush1.bf16.msra.mxu0 0
    %806 = vmatprep.subr.bf16.mxu0 %v792
    %807 = vmatpush1.bf16.msra.mxu0 %v789
    %808 = vmatprep.subr.bf16.mxu0 %v771
    %809 = vmatpush1.bf16.msra.mxu0 %v770
    %810 = vmatprep.subr.bf16.mxu0 0
    %811 = vmatpush2.bf16.msra.mxu0 0
    %812 = vmatprep.subr.bf16.mxu0 0
    %813 = vmatpush2.bf16.msra.mxu0 0
    %814 = vmatprep.subr.bf16.mxu0 0
    %815 = vmatpush2.bf16.msra.mxu0 0
    %816 = vmatprep.subr.bf16.mxu0 0
    %817 = vmatpush2.bf16.msra.mxu0 0
    %818 = vmatprep.subr.bf16.mxu0 0
    %819 = vmatpush2.bf16.msra.mxu0 0
    %820 = vmatprep.subr.bf16.mxu0 0
    %821 = vmatpush2.bf16.msra.mxu0 0
    %822 = vmatprep.subr.bf16.mxu0 0
    %823 = vmatpush2.bf16.msra.mxu0 0
    %824 = vmatprep.subr.bf16.mxu0 0
    %825 = vmatpush2.bf16.msra.mxu0 0
    %826 = vmatprep.mubr.bf16.mxu0 0
    %827 = vmatmul.mubr.bf16.gmra.mxu0 %v777
    %v828 = vpop.f32.mrf.mxu0
    %v829 = vadd.f32 0.0, %v828
    %v830 = vpop.f32.mrf.mxu0
    %v831 = vadd.f32 0.0, %v830
    %v832 = vpop.f32.mrf.mxu0
    %v833 = vadd.f32 0.0, %v832
    %v834 = vpop.f32.mrf.mxu0
    %v835 = vadd.f32 0.0, %v834
    %836 = vmatprep.mubr.bf16.mxu0 0
    %837 = vmatmul.mubr.bf16.gmra.mxu0 %v780
    %v838 = vpop.f32.mrf.mxu0
    %v839 = vadd.f32 0.0, %v838
    %v840 = vpop.f32.mrf.mxu0
    %v841 = vadd.f32 0.0, %v840
    %v842 = vpop.f32.mrf.mxu0
    %v843 = vadd.f32 0.0, %v842
    %v844 = vpop.f32.mrf.mxu0
    %v845 = vadd.f32 0.0, %v844
    %846 = vmatprep.mubr.bf16.mxu0 0
    %847 = vmatmul.mubr.bf16.gmra.mxu0 %v783
    %v848 = vpop.f32.mrf.mxu0
    %v849 = vadd.f32 0.0, %v848
    %v850 = vpop.f32.mrf.mxu0
    %v851 = vadd.f32 0.0, %v850
    %v852 = vpop.f32.mrf.mxu0
    %v853 = vadd.f32 0.0, %v852
    %v854 = vpop.f32.mrf.mxu0
    %v855 = vadd.f32 0.0, %v854
    %856 = vmatprep.mubr.bf16.mxu0 0
    %857 = vmatmul.mubr.bf16.gmra.mxu0 %v786
    %v858 = vpop.f32.mrf.mxu0
    %v859 = vadd.f32 0.0, %v858
    %v860 = vpop.f32.mrf.mxu0
    %v861 = vadd.f32 0.0, %v860
    %v862 = vpop.f32.mrf.mxu0
    %v863 = vpop.f32.mrf.mxu0
    %864 = vdwg.mxu0
    %v865 = vadd.f32 %v731, %v829
    %v866 = vadd.f32 %v732, %v831
    %v867 = vadd.f32 %v733, %v833
    %v868 = vadd.f32 %v734, %v835
    %v869 = vadd.f32 %v735, %v839
    %v870 = vadd.f32 %v736, %v841
    %v871 = vadd.f32 %v737, %v843
    %v872 = vadd.f32 %v738, %v845
    %v873 = vadd.f32 %v739, %v849
    %v874 = vadd.f32 %v740, %v851
    %v875 = vadd.f32 %v741, %v853
    %v876 = vadd.f32 %v742, %v855
    %v877 = vadd.f32 %v743, %v859
    %v878 = vadd.f32 %v744, %v861
    %v879 = vmax.f32 %v865, %v866
    %v880 = vmax.f32 %v867, %v868
    %v881 = vmax.f32 %v869, %v870
    %v882 = vmax.f32 %v871, %v872
    %v883 = vmax.f32 %v873, %v874
    %v884 = vmax.f32 %v875, %v876
    %v885 = vmax.f32 %v877, %v878
    %v886 = vld [vmem:[%s2] sm:$0x1]
    %v888 = vlaneseq
    %v889 = vshrl.u32 %v888, 7
    %v890 = vsub.s32 0, %v889
    %v891 = vrot.slane %v886, %v890
    %v893 = vadd.f32 %v879, %v891
    %v894 = vadd.f32 %v880, %v891
    %v895 = vadd.f32 %v881, %v891
    %v896 = vadd.f32 %v882, %v891
    %v897 = vadd.f32 %v883, %v891
    %v898 = vadd.f32 %v884, %v891
    %v899 = vadd.f32 %v885, %v891
    %v900 = vmax.f32 %v893, 0.0
    %v901 = vmax.f32 %v894, 0.0
    %v902 = vmax.f32 %v895, 0.0
    %v903 = vmax.f32 %v896, 0.0
    %v904 = vmax.f32 %v897, 0.0
    %v905 = vmax.f32 %v898, 0.0
    %v906 = vmax.f32 %v899, 0.0
    %907 = vst [vmem:[#allocation2] sm:$0xff] %v900
    %908 = vst [vmem:[#allocation2 + $0x8] sm:$0xff] %v901
    %909 = vst [vmem:[#allocation2 + $0x10] sm:$0xff] %v902
    %910 = vst [vmem:[#allocation2 + $0x18] sm:$0xff] %v903
    %911 = vst [vmem:[#allocation2 + $0x20] sm:$0xff] %v904
    %912 = vst [vmem:[#allocation2 + $0x28] sm:$0xff] %v905
    %913 = vst [vmem:[#allocation2 + $0x30] sm:$0xf] %v906
    %v914 = vld [vmem:[#allocation2] ss:$2 sm:$0xff]
    %s915 = scalar_lea.vmem [#allocation2], 16
    %v916 = vld [vmem:[%s915] ss:$2 sm:$0xff]
    %s917 = scalar_lea.vmem [#allocation2], 32
    %v918 = vld [vmem:[%s917] ss:$2 sm:$0xff]
    %s919 = scalar_lea.vmem [#allocation2], 48
    %v920 = vld [vmem:[%s919] ss:$2 sm:$0x3]
    %s921 = scalar_lea.vmem [#allocation2], 1
    %v922 = vld [vmem:[%s921] ss:$2 sm:$0xff]
    %s923 = scalar_lea.vmem [#allocation2], 17
    %v924 = vld [vmem:[%s923] ss:$2 sm:$0xff]
    %s925 = scalar_lea.vmem [#allocation2], 33
    %v926 = vld [vmem:[%s925] ss:$2 sm:$0xff]
    %s927 = scalar_lea.vmem [#allocation2], 49
    %v928 = vld [vmem:[%s927] ss:$2 sm:$0x3]
    %v929 = vmax.f32 %v914, %v922
    %v930 = vmax.f32 %v916, %v924
    %v931 = vmax.f32 %v918, %v926
    %v932 = vmax.f32 %v920, %v928
    %v933 = vpack.c.bf16 %v930, %v929
    %v934 = vpack.c.bf16 %v932, %v931
    %v935 = vld [vmem:[#allocation7] sm:$0xff]
    %v936 = vld [vmem:[#allocation7 + $0x8] sm:$0xff]
    %v937 = vld [vmem:[#allocation7 + $0x10] sm:$0xff]
    %v938 = vld [vmem:[#allocation7 + $0x18] sm:$0xff]
    %v939 = vld [vmem:[#allocation7 + $0x20] sm:$0xff]
    %v940 = vld [vmem:[#allocation7 + $0x28] sm:$0xff]
    %v941 = vld [vmem:[#allocation7 + $0x30] sm:$0xff]
    %v942 = vld [vmem:[#allocation7 + $0x38] sm:$0xff]
    %v943 = vld [vmem:[#allocation7 + $0x40] sm:$0xff]
    %v944 = vld [vmem:[#allocation7 + $0x48] sm:$0xff]
    %v945 = vld [vmem:[#allocation7 + $0x50] sm:$0xff]
    %v946 = vld [vmem:[#allocation7 + $0x58] sm:$0xff]
    %v947 = vld [vmem:[#allocation7 + $0x60] sm:$0xff]
    %v948 = vld [vmem:[#allocation7 + $0x68] sm:$0xff]
    %v949 = vld [vmem:[#allocation7 + $0x70] sm:$0xff]
    %v950 = vld [vmem:[#allocation7 + $0x78] sm:$0xff]
    %s951 = scalar_lea.vmem [#allocation7], 128
    %v952 = vld [vmem:[%s951] sm:$0xff]
    %v953 = vld [vmem:[%s951 + $0x8] sm:$0xff]
    %v954 = vld [vmem:[%s951 + $0x10] sm:$0xff]
    %v955 = vld [vmem:[%s951 + $0x18] sm:$0xff]
    %v956 = vld [vmem:[%s951 + $0x20] sm:$0xff]
    %v957 = vld [vmem:[%s951 + $0x28] sm:$0xff]
    %v958 = vld [vmem:[%s951 + $0x30] sm:$0xff]
    %v959 = vld [vmem:[%s951 + $0x38] sm:$0xff]
    %v960 = vld [vmem:[%s951 + $0x40] sm:$0xff]
    %v961 = vld [vmem:[%s951 + $0x48] sm:$0xff]
    %v962 = vld [vmem:[%s951 + $0x50] sm:$0xff]
    %v963 = vld [vmem:[%s951 + $0x58] sm:$0xff]
    %v964 = vld [vmem:[%s951 + $0x60] sm:$0xff]
    %v965 = vld [vmem:[%s951 + $0x68] sm:$0xff]
    %v966 = vld [vmem:[%s951 + $0x70] sm:$0xff]
    %v967 = vld [vmem:[%s951 + $0x78] sm:$0xff]
    %v969 = vshrl.u32 %v933, 16
    %v971 = vshll.u32 %v933, 16
    %v973 = vrot.slane %v971, 1
    %v974 = vor.u32 %v969, %v973
    %v976 = vshll.u32 %v934, 16
    %v978 = vrot.slane %v976, 1
    %v979 = vsel %vm225, %v974, %v978
    %v980 = vshrl.u32 %v934, 16
    %v982 = vor.u32 %v980, %v978
    %v1001 = vunpack.c.l.b16 %v952
    %v1002 = vunpack.c.h.b16 %v952
    %v1003 = vunpack.c.l.b16 %v953
    %v1004 = vunpack.c.h.b16 %v953
    %v1005 = vunpack.c.l.b16 %v954
    %v1006 = vunpack.c.h.b16 %v954
    %v1007 = vunpack.c.l.b16 %v955
    %v1008 = vunpack.c.h.b16 %v955
    %v1009 = vunpack.c.l.b16 %v956
    %v1010 = vunpack.c.h.b16 %v956
    %v1011 = vunpack.c.l.b16 %v957
    %v1012 = vunpack.c.h.b16 %v957
    %v1013 = vunpack.c.l.b16 %v958
    %v1014 = vunpack.c.h.b16 %v958
    %v1015 = vunpack.c.l.b16 %v959
    %v1016 = vunpack.c.h.b16 %v959
    %v1017 = vunpack.c.l.b16 %v960
    %v1018 = vunpack.c.h.b16 %v960
    %v1019 = vunpack.c.l.b16 %v961
    %v1020 = vunpack.c.h.b16 %v961
    %v1021 = vunpack.c.l.b16 %v962
    %v1022 = vunpack.c.h.b16 %v962
    %v1023 = vunpack.c.l.b16 %v963
    %v1024 = vunpack.c.h.b16 %v963
    %v1025 = vunpack.c.l.b16 %v964
    %v1026 = vunpack.c.h.b16 %v964
    %v1027 = vunpack.c.l.b16 %v965
    %v1028 = vunpack.c.h.b16 %v965
    %v1029 = vunpack.c.l.b16 %v966
    %v1030 = vunpack.c.h.b16 %v966
    %v1031 = vunpack.c.l.b16 %v967
    %v1032 = vunpack.c.h.b16 %v967
    %v1033 = vpack.c.b16 %v1003, %v1001
    %v1034 = vpack.c.b16 %v1004, %v1002
    %v1035 = vpack.c.b16 %v1007, %v1005
    %v1036 = vpack.c.b16 %v1008, %v1006
    %v1037 = vpack.c.b16 %v1011, %v1009
    %v1038 = vpack.c.b16 %v1012, %v1010
    %v1039 = vpack.c.b16 %v1015, %v1013
    %v1040 = vpack.c.b16 %v1016, %v1014
    %v1041 = vpack.c.b16 %v1019, %v1017
    %v1042 = vpack.c.b16 %v1020, %v1018
    %v1043 = vpack.c.b16 %v1023, %v1021
    %v1044 = vpack.c.b16 %v1024, %v1022
    %v1045 = vpack.c.b16 %v1027, %v1025
    %v1046 = vpack.c.b16 %v1028, %v1026
    %v1047 = vpack.c.b16 %v1031, %v1029
    %v1048 = vpack.c.b16 %v1032, %v1030
    %1065 = vmatprep.subr.bf16.mxu0 %v1048
    %1066 = vmatpush1.bf16.msra.mxu0 %v1047
    %1067 = vmatprep.subr.bf16.mxu0 %v1046
    %1068 = vmatpush1.bf16.msra.mxu0 %v1045
    %1069 = vmatprep.subr.bf16.mxu0 %v1044
    %1070 = vmatpush1.bf16.msra.mxu0 %v1043
    %1071 = vmatprep.subr.bf16.mxu0 %v1042
    %1072 = vmatpush1.bf16.msra.mxu0 %v1041
    %1073 = vmatprep.subr.bf16.mxu0 %v1040
    %1074 = vmatpush1.bf16.msra.mxu0 %v1039
    %1075 = vmatprep.subr.bf16.mxu0 %v1038
    %1076 = vmatpush1.bf16.msra.mxu0 %v1037
    %1077 = vmatprep.subr.bf16.mxu0 %v1036
    %1078 = vmatpush1.bf16.msra.mxu0 %v1035
    %1079 = vmatprep.subr.bf16.mxu0 %v1034
    %1080 = vmatpush1.bf16.msra.mxu0 %v1033
    %1081 = vmatprep.subr.bf16.mxu0 0
    %1082 = vmatpush2.bf16.msra.mxu0 0
    %1083 = vmatprep.subr.bf16.mxu0 0
    %1084 = vmatpush2.bf16.msra.mxu0 0
    %1085 = vmatprep.subr.bf16.mxu0 0
    %1086 = vmatpush2.bf16.msra.mxu0 0
    %1087 = vmatprep.subr.bf16.mxu0 0
    %1088 = vmatpush2.bf16.msra.mxu0 0
    %1089 = vmatprep.subr.bf16.mxu0 0
    %1090 = vmatpush2.bf16.msra.mxu0 0
    %1091 = vmatprep.subr.bf16.mxu0 0
    %1092 = vmatpush2.bf16.msra.mxu0 0
    %1093 = vmatprep.subr.bf16.mxu0 0
    %1094 = vmatpush2.bf16.msra.mxu0 0
    %1095 = vmatprep.subr.bf16.mxu0 0
    %1096 = vmatpush2.bf16.msra.mxu0 0
    %1097 = vmatprep.mubr.bf16.mxu0 0
    %1098 = vmatmul.mubr.bf16.gmra.mxu0 %v979
    %v1099 = vpop.f32.mrf.mxu0
    %v1100 = vadd.f32 0.0, %v1099
    %v1101 = vpop.f32.mrf.mxu0
    %v1102 = vadd.f32 0.0, %v1101
    %v1103 = vpop.f32.mrf.mxu0
    %v1104 = vadd.f32 0.0, %v1103
    %v1105 = vpop.f32.mrf.mxu0
    %v1106 = vadd.f32 0.0, %v1105
    %1107 = vmatprep.mubr.bf16.mxu0 0
    %1108 = vmatmul.mubr.bf16.gmra.mxu0 %v982
    %v1109 = vpop.f32.mrf.mxu0
    %v1110 = vadd.f32 0.0, %v1109
    %v1111 = vpop.f32.mrf.mxu0
    %v1112 = vadd.f32 0.0, %v1111
    %v1113 = vpop.f32.mrf.mxu0
    %v1114 = vpop.f32.mrf.mxu0
    %1115 = vdwg.mxu0
    %v1132 = vunpack.c.l.b16 %v935
    %v1133 = vunpack.c.h.b16 %v935
    %v1134 = vunpack.c.l.b16 %v936
    %v1135 = vunpack.c.h.b16 %v936
    %v1136 = vunpack.c.l.b16 %v937
    %v1137 = vunpack.c.h.b16 %v937
    %v1138 = vunpack.c.l.b16 %v938
    %v1139 = vunpack.c.h.b16 %v938
    %v1140 = vunpack.c.l.b16 %v939
    %v1141 = vunpack.c.h.b16 %v939
    %v1142 = vunpack.c.l.b16 %v940
    %v1143 = vunpack.c.h.b16 %v940
    %v1144 = vunpack.c.l.b16 %v941
    %v1145 = vunpack.c.h.b16 %v941
    %v1146 = vunpack.c.l.b16 %v942
    %v1147 = vunpack.c.h.b16 %v942
    %v1148 = vunpack.c.l.b16 %v943
    %v1149 = vunpack.c.h.b16 %v943
    %v1150 = vunpack.c.l.b16 %v944
    %v1151 = vunpack.c.h.b16 %v944
    %v1152 = vunpack.c.l.b16 %v945
    %v1153 = vunpack.c.h.b16 %v945
    %v1154 = vunpack.c.l.b16 %v946
    %v1155 = vunpack.c.h.b16 %v946
    %v1156 = vunpack.c.l.b16 %v947
    %v1157 = vunpack.c.h.b16 %v947
    %v1158 = vunpack.c.l.b16 %v948
    %v1159 = vunpack.c.h.b16 %v948
    %v1160 = vunpack.c.l.b16 %v949
    %v1161 = vunpack.c.h.b16 %v949
    %v1162 = vunpack.c.l.b16 %v950
    %v1163 = vunpack.c.h.b16 %v950
    %v1164 = vpack.c.b16 %v1134, %v1132
    %v1165 = vpack.c.b16 %v1135, %v1133
    %v1166 = vpack.c.b16 %v1138, %v1136
    %v1167 = vpack.c.b16 %v1139, %v1137
    %v1168 = vpack.c.b16 %v1142, %v1140
    %v1169 = vpack.c.b16 %v1143, %v1141
    %v1170 = vpack.c.b16 %v1146, %v1144
    %v1171 = vpack.c.b16 %v1147, %v1145
    %v1172 = vpack.c.b16 %v1150, %v1148
    %v1173 = vpack.c.b16 %v1151, %v1149
    %v1174 = vpack.c.b16 %v1154, %v1152
    %v1175 = vpack.c.b16 %v1155, %v1153
    %v1176 = vpack.c.b16 %v1158, %v1156
    %v1177 = vpack.c.b16 %v1159, %v1157
    %v1178 = vpack.c.b16 %v1162, %v1160
    %v1179 = vpack.c.b16 %v1163, %v1161
    %1196 = vmatprep.subr.bf16.mxu0 %v1179
    %1197 = vmatpush1.bf16.msra.mxu0 %v1178
    %1198 = vmatprep.subr.bf16.mxu0 %v1177
    %1199 = vmatpush1.bf16.msra.mxu0 %v1176
    %1200 = vmatprep.subr.bf16.mxu0 %v1175
    %1201 = vmatpush1.bf16.msra.mxu0 %v1174
    %1202 = vmatprep.subr.bf16.mxu0 %v1173
    %1203 = vmatpush1.bf16.msra.mxu0 %v1172
    %1204 = vmatprep.subr.bf16.mxu0 %v1171
    %1205 = vmatpush1.bf16.msra.mxu0 %v1170
    %1206 = vmatprep.subr.bf16.mxu0 %v1169
    %1207 = vmatpush1.bf16.msra.mxu0 %v1168
    %1208 = vmatprep.subr.bf16.mxu0 %v1167
    %1209 = vmatpush1.bf16.msra.mxu0 %v1166
    %1210 = vmatprep.subr.bf16.mxu0 %v1165
    %1211 = vmatpush1.bf16.msra.mxu0 %v1164
    %1212 = vmatprep.subr.bf16.mxu0 0
    %1213 = vmatpush2.bf16.msra.mxu0 0
    %1214 = vmatprep.subr.bf16.mxu0 0
    %1215 = vmatpush2.bf16.msra.mxu0 0
    %1216 = vmatprep.subr.bf16.mxu0 0
    %1217 = vmatpush2.bf16.msra.mxu0 0
    %1218 = vmatprep.subr.bf16.mxu0 0
    %1219 = vmatpush2.bf16.msra.mxu0 0
    %1220 = vmatprep.subr.bf16.mxu0 0
    %1221 = vmatpush2.bf16.msra.mxu0 0
    %1222 = vmatprep.subr.bf16.mxu0 0
    %1223 = vmatpush2.bf16.msra.mxu0 0
    %1224 = vmatprep.subr.bf16.mxu0 0
    %1225 = vmatpush2.bf16.msra.mxu0 0
    %1226 = vmatprep.subr.bf16.mxu0 0
    %1227 = vmatpush2.bf16.msra.mxu0 0
    %1228 = vmatprep.mubr.bf16.mxu0 0
    %1229 = vmatmul.mubr.bf16.gmra.mxu0 %v933
    %v1230 = vpop.f32.mrf.mxu0
    %v1231 = vadd.f32 %v1100, %v1230
    %v1232 = vpop.f32.mrf.mxu0
    %v1233 = vadd.f32 %v1102, %v1232
    %v1234 = vpop.f32.mrf.mxu0
    %v1235 = vadd.f32 %v1104, %v1234
    %v1236 = vpop.f32.mrf.mxu0
    %v1237 = vadd.f32 %v1106, %v1236
    %1238 = vmatprep.mubr.bf16.mxu0 0
    %1239 = vmatmul.mubr.bf16.gmra.mxu0 %v934
    %v1240 = vpop.f32.mrf.mxu0
    %v1241 = vadd.f32 %v1110, %v1240
    %v1242 = vpop.f32.mrf.mxu0
    %v1243 = vadd.f32 %v1112, %v1242
    %v1244 = vpop.f32.mrf.mxu0
    %v1245 = vpop.f32.mrf.mxu0
    %1246 = vdwg.mxu0
    %s1247 = scalar_lea.vmem [#allocation7], 256
    %v1248 = vld [vmem:[%s1247] sm:$0xff]
    %v1249 = vld [vmem:[%s1247 + $0x8] sm:$0xff]
    %v1250 = vld [vmem:[%s1247 + $0x10] sm:$0xff]
    %v1251 = vld [vmem:[%s1247 + $0x18] sm:$0xff]
    %v1252 = vld [vmem:[%s1247 + $0x20] sm:$0xff]
    %v1253 = vld [vmem:[%s1247 + $0x28] sm:$0xff]
    %v1254 = vld [vmem:[%s1247 + $0x30] sm:$0xff]
    %v1255 = vld [vmem:[%s1247 + $0x38] sm:$0xff]
    %v1256 = vld [vmem:[%s1247 + $0x40] sm:$0xff]
    %v1257 = vld [vmem:[%s1247 + $0x48] sm:$0xff]
    %v1258 = vld [vmem:[%s1247 + $0x50] sm:$0xff]
    %v1259 = vld [vmem:[%s1247 + $0x58] sm:$0xff]
    %v1260 = vld [vmem:[%s1247 + $0x60] sm:$0xff]
    %v1261 = vld [vmem:[%s1247 + $0x68] sm:$0xff]
    %v1262 = vld [vmem:[%s1247 + $0x70] sm:$0xff]
    %v1263 = vld [vmem:[%s1247 + $0x78] sm:$0xff]
    %v1266 = vrot.slane %v933, 1
    %v1267 = vrot.slane %v934, 1
    %v1268 = vsel %vm474, %v1266, %v1267
    %v1287 = vunpack.c.l.b16 %v1248
    %v1288 = vunpack.c.h.b16 %v1248
    %v1289 = vunpack.c.l.b16 %v1249
    %v1290 = vunpack.c.h.b16 %v1249
    %v1291 = vunpack.c.l.b16 %v1250
    %v1292 = vunpack.c.h.b16 %v1250
    %v1293 = vunpack.c.l.b16 %v1251
    %v1294 = vunpack.c.h.b16 %v1251
    %v1295 = vunpack.c.l.b16 %v1252
    %v1296 = vunpack.c.h.b16 %v1252
    %v1297 = vunpack.c.l.b16 %v1253
    %v1298 = vunpack.c.h.b16 %v1253
    %v1299 = vunpack.c.l.b16 %v1254
    %v1300 = vunpack.c.h.b16 %v1254
    %v1301 = vunpack.c.l.b16 %v1255
    %v1302 = vunpack.c.h.b16 %v1255
    %v1303 = vunpack.c.l.b16 %v1256
    %v1304 = vunpack.c.h.b16 %v1256
    %v1305 = vunpack.c.l.b16 %v1257
    %v1306 = vunpack.c.h.b16 %v1257
    %v1307 = vunpack.c.l.b16 %v1258
    %v1308 = vunpack.c.h.b16 %v1258
    %v1309 = vunpack.c.l.b16 %v1259
    %v1310 = vunpack.c.h.b16 %v1259
    %v1311 = vunpack.c.l.b16 %v1260
    %v1312 = vunpack.c.h.b16 %v1260
    %v1313 = vunpack.c.l.b16 %v1261
    %v1314 = vunpack.c.h.b16 %v1261
    %v1315 = vunpack.c.l.b16 %v1262
    %v1316 = vunpack.c.h.b16 %v1262
    %v1317 = vunpack.c.l.b16 %v1263
    %v1318 = vunpack.c.h.b16 %v1263
    %v1319 = vpack.c.b16 %v1289, %v1287
    %v1320 = vpack.c.b16 %v1290, %v1288
    %v1321 = vpack.c.b16 %v1293, %v1291
    %v1322 = vpack.c.b16 %v1294, %v1292
    %v1323 = vpack.c.b16 %v1297, %v1295
    %v1324 = vpack.c.b16 %v1298, %v1296
    %v1325 = vpack.c.b16 %v1301, %v1299
    %v1326 = vpack.c.b16 %v1302, %v1300
    %v1327 = vpack.c.b16 %v1305, %v1303
    %v1328 = vpack.c.b16 %v1306, %v1304
    %v1329 = vpack.c.b16 %v1309, %v1307
    %v1330 = vpack.c.b16 %v1310, %v1308
    %v1331 = vpack.c.b16 %v1313, %v1311
    %v1332 = vpack.c.b16 %v1314, %v1312
    %v1333 = vpack.c.b16 %v1317, %v1315
    %v1334 = vpack.c.b16 %v1318, %v1316
    %1351 = vmatprep.subr.bf16.mxu0 %v1334
    %1352 = vmatpush1.bf16.msra.mxu0 %v1333
    %1353 = vmatprep.subr.bf16.mxu0 %v1332
    %1354 = vmatpush1.bf16.msra.mxu0 %v1331
    %1355 = vmatprep.subr.bf16.mxu0 %v1330
    %1356 = vmatpush1.bf16.msra.mxu0 %v1329
    %1357 = vmatprep.subr.bf16.mxu0 %v1328
    %1358 = vmatpush1.bf16.msra.mxu0 %v1327
    %1359 = vmatprep.subr.bf16.mxu0 %v1326
    %1360 = vmatpush1.bf16.msra.mxu0 %v1325
    %1361 = vmatprep.subr.bf16.mxu0 %v1324
    %1362 = vmatpush1.bf16.msra.mxu0 %v1323
    %1363 = vmatprep.subr.bf16.mxu0 %v1322
    %1364 = vmatpush1.bf16.msra.mxu0 %v1321
    %1365 = vmatprep.subr.bf16.mxu0 %v1320
    %1366 = vmatpush1.bf16.msra.mxu0 %v1319
    %1367 = vmatprep.subr.bf16.mxu0 0
    %1368 = vmatpush2.bf16.msra.mxu0 0
    %1369 = vmatprep.subr.bf16.mxu0 0
    %1370 = vmatpush2.bf16.msra.mxu0 0
    %1371 = vmatprep.subr.bf16.mxu0 0
    %1372 = vmatpush2.bf16.msra.mxu0 0
    %1373 = vmatprep.subr.bf16.mxu0 0
    %1374 = vmatpush2.bf16.msra.mxu0 0
    %1375 = vmatprep.subr.bf16.mxu0 0
    %1376 = vmatpush2.bf16.msra.mxu0 0
    %1377 = vmatprep.subr.bf16.mxu0 0
    %1378 = vmatpush2.bf16.msra.mxu0 0
    %1379 = vmatprep.subr.bf16.mxu0 0
    %1380 = vmatpush2.bf16.msra.mxu0 0
    %1381 = vmatprep.subr.bf16.mxu0 0
    %1382 = vmatpush2.bf16.msra.mxu0 0
    %1383 = vmatprep.mubr.bf16.mxu0 0
    %1384 = vmatmul.mubr.bf16.gmra.mxu0 %v1268
    %v1385 = vpop.f32.mrf.mxu0
    %v1386 = vadd.f32 0.0, %v1385
    %v1387 = vpop.f32.mrf.mxu0
    %v1388 = vadd.f32 0.0, %v1387
    %v1389 = vpop.f32.mrf.mxu0
    %v1390 = vadd.f32 0.0, %v1389
    %v1391 = vpop.f32.mrf.mxu0
    %v1392 = vadd.f32 0.0, %v1391
    %1393 = vmatprep.mubr.bf16.mxu0 0
    %1394 = vmatmul.mubr.bf16.gmra.mxu0 %v1267
    %v1395 = vpop.f32.mrf.mxu0
    %v1396 = vadd.f32 0.0, %v1395
    %v1397 = vpop.f32.mrf.mxu0
    %v1398 = vadd.f32 0.0, %v1397
    %v1399 = vpop.f32.mrf.mxu0
    %v1400 = vpop.f32.mrf.mxu0
    %1401 = vdwg.mxu0
    %v1402 = vadd.f32 %v1231, %v1386
    %v1403 = vadd.f32 %v1233, %v1388
    %v1404 = vadd.f32 %v1235, %v1390
    %v1405 = vadd.f32 %v1237, %v1392
    %v1406 = vadd.f32 %v1241, %v1396
    %v1407 = vadd.f32 %v1243, %v1398
    %s1408 = scalar_lea.vmem [#allocation7], 384
    %v1409 = vld [vmem:[%s1408] sm:$0xff]
    %v1410 = vld [vmem:[%s1408 + $0x8] sm:$0xff]
    %v1411 = vld [vmem:[%s1408 + $0x10] sm:$0xff]
    %v1412 = vld [vmem:[%s1408 + $0x18] sm:$0xff]
    %v1413 = vld [vmem:[%s1408 + $0x20] sm:$0xff]
    %v1414 = vld [vmem:[%s1408 + $0x28] sm:$0xff]
    %v1415 = vld [vmem:[%s1408 + $0x30] sm:$0xff]
    %v1416 = vld [vmem:[%s1408 + $0x38] sm:$0xff]
    %v1417 = vld [vmem:[%s1408 + $0x40] sm:$0xff]
    %v1418 = vld [vmem:[%s1408 + $0x48] sm:$0xff]
    %v1419 = vld [vmem:[%s1408 + $0x50] sm:$0xff]
    %v1420 = vld [vmem:[%s1408 + $0x58] sm:$0xff]
    %v1421 = vld [vmem:[%s1408 + $0x60] sm:$0xff]
    %v1422 = vld [vmem:[%s1408 + $0x68] sm:$0xff]
    %v1423 = vld [vmem:[%s1408 + $0x70] sm:$0xff]
    %v1424 = vld [vmem:[%s1408 + $0x78] sm:$0xff]
    %v1425 = vrot.slane %v969, 1
    %v1426 = vrot.slane %v971, 2
    %v1427 = vor.u32 %v1425, %v1426
    %v1428 = vrot.slane %v980, 1
    %v1429 = vrot.slane %v976, 2
    %v1430 = vor.u32 %v1428, %v1429
    %v1431 = vsel %vm608, %v1427, %v1430
    %v1450 = vunpack.c.l.b16 %v1409
    %v1451 = vunpack.c.h.b16 %v1409
    %v1452 = vunpack.c.l.b16 %v1410
    %v1453 = vunpack.c.h.b16 %v1410
    %v1454 = vunpack.c.l.b16 %v1411
    %v1455 = vunpack.c.h.b16 %v1411
    %v1456 = vunpack.c.l.b16 %v1412
    %v1457 = vunpack.c.h.b16 %v1412
    %v1458 = vunpack.c.l.b16 %v1413
    %v1459 = vunpack.c.h.b16 %v1413
    %v1460 = vunpack.c.l.b16 %v1414
    %v1461 = vunpack.c.h.b16 %v1414
    %v1462 = vunpack.c.l.b16 %v1415
    %v1463 = vunpack.c.h.b16 %v1415
    %v1464 = vunpack.c.l.b16 %v1416
    %v1465 = vunpack.c.h.b16 %v1416
    %v1466 = vunpack.c.l.b16 %v1417
    %v1467 = vunpack.c.h.b16 %v1417
    %v1468 = vunpack.c.l.b16 %v1418
    %v1469 = vunpack.c.h.b16 %v1418
    %v1470 = vunpack.c.l.b16 %v1419
    %v1471 = vunpack.c.h.b16 %v1419
    %v1472 = vunpack.c.l.b16 %v1420
    %v1473 = vunpack.c.h.b16 %v1420
    %v1474 = vunpack.c.l.b16 %v1421
    %v1475 = vunpack.c.h.b16 %v1421
    %v1476 = vunpack.c.l.b16 %v1422
    %v1477 = vunpack.c.h.b16 %v1422
    %v1478 = vunpack.c.l.b16 %v1423
    %v1479 = vunpack.c.h.b16 %v1423
    %v1480 = vunpack.c.l.b16 %v1424
    %v1481 = vunpack.c.h.b16 %v1424
    %v1482 = vpack.c.b16 %v1452, %v1450
    %v1483 = vpack.c.b16 %v1453, %v1451
    %v1484 = vpack.c.b16 %v1456, %v1454
    %v1485 = vpack.c.b16 %v1457, %v1455
    %v1486 = vpack.c.b16 %v1460, %v1458
    %v1487 = vpack.c.b16 %v1461, %v1459
    %v1488 = vpack.c.b16 %v1464, %v1462
    %v1489 = vpack.c.b16 %v1465, %v1463
    %v1490 = vpack.c.b16 %v1468, %v1466
    %v1491 = vpack.c.b16 %v1469, %v1467
    %v1492 = vpack.c.b16 %v1472, %v1470
    %v1493 = vpack.c.b16 %v1473, %v1471
    %v1494 = vpack.c.b16 %v1476, %v1474
    %v1495 = vpack.c.b16 %v1477, %v1475
    %v1496 = vpack.c.b16 %v1480, %v1478
    %v1497 = vpack.c.b16 %v1481, %v1479
    %1514 = vmatprep.subr.bf16.mxu0 %v1497
    %1515 = vmatpush1.bf16.msra.mxu0 %v1496
    %1516 = vmatprep.subr.bf16.mxu0 %v1495
    %1517 = vmatpush1.bf16.msra.mxu0 %v1494
    %1518 = vmatprep.subr.bf16.mxu0 %v1493
    %1519 = vmatpush1.bf16.msra.mxu0 %v1492
    %1520 = vmatprep.subr.bf16.mxu0 %v1491
    %1521 = vmatpush1.bf16.msra.mxu0 %v1490
    %1522 = vmatprep.subr.bf16.mxu0 %v1489
    %1523 = vmatpush1.bf16.msra.mxu0 %v1488
    %1524 = vmatprep.subr.bf16.mxu0 %v1487
    %1525 = vmatpush1.bf16.msra.mxu0 %v1486
    %1526 = vmatprep.subr.bf16.mxu0 %v1485
    %1527 = vmatpush1.bf16.msra.mxu0 %v1484
    %1528 = vmatprep.subr.bf16.mxu0 %v1483
    %1529 = vmatpush1.bf16.msra.mxu0 %v1482
    %1530 = vmatprep.subr.bf16.mxu0 0
    %1531 = vmatpush2.bf16.msra.mxu0 0
    %1532 = vmatprep.subr.bf16.mxu0 0
    %1533 = vmatpush2.bf16.msra.mxu0 0
    %1534 = vmatprep.subr.bf16.mxu0 0
    %1535 = vmatpush2.bf16.msra.mxu0 0
    %1536 = vmatprep.subr.bf16.mxu0 0
    %1537 = vmatpush2.bf16.msra.mxu0 0
    %1538 = vmatprep.subr.bf16.mxu0 0
    %1539 = vmatpush2.bf16.msra.mxu0 0
    %1540 = vmatprep.subr.bf16.mxu0 0
    %1541 = vmatpush2.bf16.msra.mxu0 0
    %1542 = vmatprep.subr.bf16.mxu0 0
    %1543 = vmatpush2.bf16.msra.mxu0 0
    %1544 = vmatprep.subr.bf16.mxu0 0
    %1545 = vmatpush2.bf16.msra.mxu0 0
    %1546 = vmatprep.mubr.bf16.mxu0 0
    %1547 = vmatmul.mubr.bf16.gmra.mxu0 %v1431
    %v1548 = vpop.f32.mrf.mxu0
    %v1549 = vadd.f32 0.0, %v1548
    %v1550 = vpop.f32.mrf.mxu0
    %v1551 = vadd.f32 0.0, %v1550
    %v1552 = vpop.f32.mrf.mxu0
    %v1553 = vadd.f32 0.0, %v1552
    %v1554 = vpop.f32.mrf.mxu0
    %v1555 = vadd.f32 0.0, %v1554
    %1556 = vmatprep.mubr.bf16.mxu0 0
    %1557 = vmatmul.mubr.bf16.gmra.mxu0 %v1430
    %v1558 = vpop.f32.mrf.mxu0
    %v1559 = vadd.f32 0.0, %v1558
    %v1560 = vpop.f32.mrf.mxu0
    %v1561 = vadd.f32 0.0, %v1560
    %v1562 = vpop.f32.mrf.mxu0
    %v1563 = vpop.f32.mrf.mxu0
    %1564 = vdwg.mxu0
    %v1565 = vadd.f32 %v1402, %v1549
    %v1566 = vadd.f32 %v1403, %v1551
    %v1567 = vadd.f32 %v1404, %v1553
    %v1568 = vadd.f32 %v1405, %v1555
    %v1569 = vadd.f32 %v1406, %v1559
    %v1570 = vadd.f32 %v1407, %v1561
    %s1571 = scalar_lea.vmem [#allocation7], 512
    %v1572 = vld [vmem:[%s1571] sm:$0xff]
    %v1573 = vld [vmem:[%s1571 + $0x8] sm:$0xff]
    %v1574 = vld [vmem:[%s1571 + $0x10] sm:$0xff]
    %v1575 = vld [vmem:[%s1571 + $0x18] sm:$0xff]
    %v1576 = vld [vmem:[%s1571 + $0x20] sm:$0xff]
    %v1577 = vld [vmem:[%s1571 + $0x28] sm:$0xff]
    %v1578 = vld [vmem:[%s1571 + $0x30] sm:$0xff]
    %v1579 = vld [vmem:[%s1571 + $0x38] sm:$0xff]
    %v1580 = vld [vmem:[%s1571 + $0x40] sm:$0xff]
    %v1581 = vld [vmem:[%s1571 + $0x48] sm:$0xff]
    %v1582 = vld [vmem:[%s1571 + $0x50] sm:$0xff]
    %v1583 = vld [vmem:[%s1571 + $0x58] sm:$0xff]
    %v1584 = vld [vmem:[%s1571 + $0x60] sm:$0xff]
    %v1585 = vld [vmem:[%s1571 + $0x68] sm:$0xff]
    %v1586 = vld [vmem:[%s1571 + $0x70] sm:$0xff]
    %v1587 = vld [vmem:[%s1571 + $0x78] sm:$0xff]
    %v1588 = vrot.slane %v933, 2
    %v1589 = vrot.slane %v934, 2
    %v1590 = vsel %vm750, %v1588, %v1589
    %v1609 = vunpack.c.l.b16 %v1572
    %v1610 = vunpack.c.h.b16 %v1572
    %v1611 = vunpack.c.l.b16 %v1573
    %v1612 = vunpack.c.h.b16 %v1573
    %v1613 = vunpack.c.l.b16 %v1574
    %v1614 = vunpack.c.h.b16 %v1574
    %v1615 = vunpack.c.l.b16 %v1575
    %v1616 = vunpack.c.h.b16 %v1575
    %v1617 = vunpack.c.l.b16 %v1576
    %v1618 = vunpack.c.h.b16 %v1576
    %v1619 = vunpack.c.l.b16 %v1577
    %v1620 = vunpack.c.h.b16 %v1577
    %v1621 = vunpack.c.l.b16 %v1578
    %v1622 = vunpack.c.h.b16 %v1578
    %v1623 = vunpack.c.l.b16 %v1579
    %v1624 = vunpack.c.h.b16 %v1579
    %v1625 = vunpack.c.l.b16 %v1580
    %v1626 = vunpack.c.h.b16 %v1580
    %v1627 = vunpack.c.l.b16 %v1581
    %v1628 = vunpack.c.h.b16 %v1581
    %v1629 = vunpack.c.l.b16 %v1582
    %v1630 = vunpack.c.h.b16 %v1582
    %v1631 = vunpack.c.l.b16 %v1583
    %v1632 = vunpack.c.h.b16 %v1583
    %v1633 = vunpack.c.l.b16 %v1584
    %v1634 = vunpack.c.h.b16 %v1584
    %v1635 = vunpack.c.l.b16 %v1585
    %v1636 = vunpack.c.h.b16 %v1585
    %v1637 = vunpack.c.l.b16 %v1586
    %v1638 = vunpack.c.h.b16 %v1586
    %v1639 = vunpack.c.l.b16 %v1587
    %v1640 = vunpack.c.h.b16 %v1587
    %v1641 = vpack.c.b16 %v1611, %v1609
    %v1642 = vpack.c.b16 %v1612, %v1610
    %v1643 = vpack.c.b16 %v1615, %v1613
    %v1644 = vpack.c.b16 %v1616, %v1614
    %v1645 = vpack.c.b16 %v1619, %v1617
    %v1646 = vpack.c.b16 %v1620, %v1618
    %v1647 = vpack.c.b16 %v1623, %v1621
    %v1648 = vpack.c.b16 %v1624, %v1622
    %v1649 = vpack.c.b16 %v1627, %v1625
    %v1650 = vpack.c.b16 %v1628, %v1626
    %v1651 = vpack.c.b16 %v1631, %v1629
    %v1652 = vpack.c.b16 %v1632, %v1630
    %v1653 = vpack.c.b16 %v1635, %v1633
    %v1654 = vpack.c.b16 %v1636, %v1634
    %v1655 = vpack.c.b16 %v1639, %v1637
    %v1656 = vpack.c.b16 %v1640, %v1638
    %1673 = vmatprep.subr.bf16.mxu0 %v1656
    %1674 = vmatpush1.bf16.msra.mxu0 %v1655
    %1675 = vmatprep.subr.bf16.mxu0 %v1654
    %1676 = vmatpush1.bf16.msra.mxu0 %v1653
    %1677 = vmatprep.subr.bf16.mxu0 %v1652
    %1678 = vmatpush1.bf16.msra.mxu0 %v1651
    %1679 = vmatprep.subr.bf16.mxu0 %v1650
    %1680 = vmatpush1.bf16.msra.mxu0 %v1649
    %1681 = vmatprep.subr.bf16.mxu0 %v1648
    %1682 = vmatpush1.bf16.msra.mxu0 %v1647
    %1683 = vmatprep.subr.bf16.mxu0 %v1646
    %1684 = vmatpush1.bf16.msra.mxu0 %v1645
    %1685 = vmatprep.subr.bf16.mxu0 %v1644
    %1686 = vmatpush1.bf16.msra.mxu0 %v1643
    %1687 = vmatprep.subr.bf16.mxu0 %v1642
    %1688 = vmatpush1.bf16.msra.mxu0 %v1641
    %1689 = vmatprep.subr.bf16.mxu0 0
    %1690 = vmatpush2.bf16.msra.mxu0 0
    %1691 = vmatprep.subr.bf16.mxu0 0
    %1692 = vmatpush2.bf16.msra.mxu0 0
    %1693 = vmatprep.subr.bf16.mxu0 0
    %1694 = vmatpush2.bf16.msra.mxu0 0
    %1695 = vmatprep.subr.bf16.mxu0 0
    %1696 = vmatpush2.bf16.msra.mxu0 0
    %1697 = vmatprep.subr.bf16.mxu0 0
    %1698 = vmatpush2.bf16.msra.mxu0 0
    %1699 = vmatprep.subr.bf16.mxu0 0
    %1700 = vmatpush2.bf16.msra.mxu0 0
    %1701 = vmatprep.subr.bf16.mxu0 0
    %1702 = vmatpush2.bf16.msra.mxu0 0
    %1703 = vmatprep.subr.bf16.mxu0 0
    %1704 = vmatpush2.bf16.msra.mxu0 0
    %1705 = vmatprep.mubr.bf16.mxu0 0
    %1706 = vmatmul.mubr.bf16.gmra.mxu0 %v1590
    %v1707 = vpop.f32.mrf.mxu0
    %v1708 = vadd.f32 0.0, %v1707
    %v1709 = vpop.f32.mrf.mxu0
    %v1710 = vadd.f32 0.0, %v1709
    %v1711 = vpop.f32.mrf.mxu0
    %v1712 = vadd.f32 0.0, %v1711
    %v1713 = vpop.f32.mrf.mxu0
    %v1714 = vadd.f32 0.0, %v1713
    %1715 = vmatprep.mubr.bf16.mxu0 0
    %1716 = vmatmul.mubr.bf16.gmra.mxu0 %v1589
    %v1717 = vpop.f32.mrf.mxu0
    %v1718 = vadd.f32 0.0, %v1717
    %v1719 = vpop.f32.mrf.mxu0
    %v1720 = vadd.f32 0.0, %v1719
    %v1721 = vpop.f32.mrf.mxu0
    %v1722 = vpop.f32.mrf.mxu0
    %1723 = vdwg.mxu0
    %v1724 = vadd.f32 %v1565, %v1708
    %v1725 = vadd.f32 %v1566, %v1710
    %v1726 = vadd.f32 %v1567, %v1712
    %v1727 = vadd.f32 %v1568, %v1714
    %v1728 = vadd.f32 %v1569, %v1718
    %v1729 = vadd.f32 %v1570, %v1720
    %v1730 = vmax.f32 %v1724, %v1725
    %v1731 = vmax.f32 %v1726, %v1727
    %v1732 = vmax.f32 %v1728, %v1729
    %v1733 = vld [vmem:[%s4] sm:$0x1]
    %v1735 = vlaneseq
    %v1736 = vshrl.u32 %v1735, 7
    %v1737 = vsub.s32 0, %v1736
    %v1738 = vrot.slane %v1733, %v1737
    %v1740 = vadd.f32 %v1730, %v1738
    %v1741 = vadd.f32 %v1731, %v1738
    %v1742 = vadd.f32 %v1732, %v1738
    %v1743 = vmax.f32 %v1740, 0.0
    %v1744 = vmax.f32 %v1741, 0.0
    %v1745 = vmax.f32 %v1742, 0.0
    %1746 = vst [vmem:[#allocation3] sm:$0xff] %v1743
    %1747 = vst [vmem:[#allocation3 + $0x8] sm:$0xff] %v1744
    %1748 = vst [vmem:[#allocation3 + $0x10] sm:$0x3f] %v1745
    %v1749 = vld [vmem:[#allocation3] ss:$2 sm:$0xff]
    %s1750 = scalar_lea.vmem [#allocation3], 16
    %v1751 = vld [vmem:[%s1750] ss:$2 sm:$0x7]
    %s1752 = scalar_lea.vmem [#allocation3], 1
    %v1753 = vld [vmem:[%s1752] ss:$2 sm:$0xff]
    %s1754 = scalar_lea.vmem [#allocation3], 17
    %v1755 = vld [vmem:[%s1754] ss:$2 sm:$0x7]
    %v1756 = vmax.f32 %v1749, %v1753
    %v1757 = vmax.f32 %v1751, %v1755
    %1758 = vst [vmem:[#allocation4] sm:$0xff] 0.0
    %1759 = vst [vmem:[#allocation4 + $0x8] sm:$0xff] 0.0
    %1760 = vst [vmem:[#allocation4 + $0x1] sm:$0xff] %v1756
    %1761 = vst [vmem:[#allocation4 + $0x9] sm:$0x7] %v1757
    %1762 = vst [vmem:[#allocation4 + $0x5] sm:$0x7] 0.0
    %v1763 = vld [vmem:[#allocation4] sm:$0xff]
    %v1764 = vld [vmem:[#allocation4 + $0x8] sm:$0xff]
    %v1765 = vpack.c.bf16 %v1764, %v1763
    %v1766 = vld [vmem:[#allocation10] sm:$0xf]
    %v1767 = vld [vmem:[#allocation10 + $0x4] sm:$0xf]
    %v1768 = vld [vmem:[#allocation10 + $0x8] sm:$0xf]
    %v1769 = vld [vmem:[#allocation10 + $0xc] sm:$0xf]
    %v1770 = vld [vmem:[#allocation10 + $0x10] sm:$0xf]
    %v1771 = vld [vmem:[#allocation10 + $0x14] sm:$0xf]
    %v1772 = vld [vmem:[#allocation10 + $0x18] sm:$0xf]
    %v1773 = vld [vmem:[#allocation10 + $0x1c] sm:$0xf]
    %v1774 = vld [vmem:[#allocation10 + $0x20] sm:$0xf]
    %v1775 = vld [vmem:[#allocation10 + $0x24] sm:$0xf]
    %v1776 = vld [vmem:[#allocation10 + $0x28] sm:$0xf]
    %v1777 = vld [vmem:[#allocation10 + $0x2c] sm:$0xf]
    %v1778 = vld [vmem:[#allocation10 + $0x30] sm:$0xf]
    %v1779 = vld [vmem:[#allocation10 + $0x34] sm:$0xf]
    %v1780 = vld [vmem:[#allocation10 + $0x38] sm:$0xf]
    %v1781 = vld [vmem:[#allocation10 + $0x3c] sm:$0xf]
    %s1782 = scalar_lea.vmem [#allocation10], 64
    %v1783 = vld [vmem:[%s1782] sm:$0xf]
    %v1784 = vld [vmem:[%s1782 + $0x4] sm:$0xf]
    %v1785 = vld [vmem:[%s1782 + $0x8] sm:$0xf]
    %v1786 = vld [vmem:[%s1782 + $0xc] sm:$0xf]
    %v1787 = vld [vmem:[%s1782 + $0x10] sm:$0xf]
    %v1788 = vld [vmem:[%s1782 + $0x14] sm:$0xf]
    %v1789 = vld [vmem:[%s1782 + $0x18] sm:$0xf]
    %v1790 = vld [vmem:[%s1782 + $0x1c] sm:$0xf]
    %v1791 = vld [vmem:[%s1782 + $0x20] sm:$0xf]
    %v1792 = vld [vmem:[%s1782 + $0x24] sm:$0xf]
    %v1793 = vld [vmem:[%s1782 + $0x28] sm:$0xf]
    %v1794 = vld [vmem:[%s1782 + $0x2c] sm:$0xf]
    %v1795 = vld [vmem:[%s1782 + $0x30] sm:$0xf]
    %v1796 = vld [vmem:[%s1782 + $0x34] sm:$0xf]
    %v1797 = vld [vmem:[%s1782 + $0x38] sm:$0xf]
    %v1798 = vld [vmem:[%s1782 + $0x3c] sm:$0xf]
    %v1800 = vshrl.u32 %v1765, 16
    %v1802 = vshll.u32 %v1765, 16
    %v1804 = vrot.slane %v1802, 1
    %v1805 = vor.u32 %v1800, %v1804
    %v1823 = vunpack.c.l.b16 %v1783
    %v1824 = vunpack.c.l.b16 %v1784
    %v1825 = vunpack.c.l.b16 %v1785
    %v1826 = vunpack.c.l.b16 %v1786
    %v1827 = vunpack.c.l.b16 %v1787
    %v1828 = vunpack.c.l.b16 %v1788
    %v1829 = vunpack.c.l.b16 %v1789
    %v1830 = vunpack.c.l.b16 %v1790
    %v1831 = vunpack.c.l.b16 %v1791
    %v1832 = vunpack.c.l.b16 %v1792
    %v1833 = vunpack.c.l.b16 %v1793
    %v1834 = vunpack.c.l.b16 %v1794
    %v1835 = vunpack.c.l.b16 %v1795
    %v1836 = vunpack.c.l.b16 %v1796
    %v1837 = vunpack.c.l.b16 %v1797
    %v1838 = vunpack.c.l.b16 %v1798
    %v1839 = vpack.c.b16 %v1824, %v1823
    %v1840 = vpack.c.b16 %v1826, %v1825
    %v1841 = vpack.c.b16 %v1828, %v1827
    %v1842 = vpack.c.b16 %v1830, %v1829
    %v1843 = vpack.c.b16 %v1832, %v1831
    %v1844 = vpack.c.b16 %v1834, %v1833
    %v1845 = vpack.c.b16 %v1836, %v1835
    %v1846 = vpack.c.b16 %v1838, %v1837
    %1855 = vmatprep.subr.bf16.mxu0 0
    %1856 = vmatpush1.bf16.msra.mxu0 %v1846
    %1857 = vmatprep.subr.bf16.mxu0 0
    %1858 = vmatpush1.bf16.msra.mxu0 %v1845
    %1859 = vmatprep.subr.bf16.mxu0 0
    %1860 = vmatpush1.bf16.msra.mxu0 %v1844
    %1861 = vmatprep.subr.bf16.mxu0 0
    %1862 = vmatpush1.bf16.msra.mxu0 %v1843
    %1863 = vmatprep.subr.bf16.mxu0 0
    %1864 = vmatpush1.bf16.msra.mxu0 %v1842
    %1865 = vmatprep.subr.bf16.mxu0 0
    %1866 = vmatpush1.bf16.msra.mxu0 %v1841
    %1867 = vmatprep.subr.bf16.mxu0 0
    %1868 = vmatpush1.bf16.msra.mxu0 %v1840
    %1869 = vmatprep.subr.bf16.mxu0 0
    %1870 = vmatpush1.bf16.msra.mxu0 %v1839
    %1871 = vmatprep.subr.bf16.mxu0 0
    %1872 = vmatpush2.bf16.msra.mxu0 0
    %1873 = vmatprep.subr.bf16.mxu0 0
    %1874 = vmatpush2.bf16.msra.mxu0 0
    %1875 = vmatprep.subr.bf16.mxu0 0
    %1876 = vmatpush2.bf16.msra.mxu0 0
    %1877 = vmatprep.subr.bf16.mxu0 0
    %1878 = vmatpush2.bf16.msra.mxu0 0
    %1879 = vmatprep.subr.bf16.mxu0 0
    %1880 = vmatpush2.bf16.msra.mxu0 0
    %1881 = vmatprep.subr.bf16.mxu0 0
    %1882 = vmatpush2.bf16.msra.mxu0 0
    %1883 = vmatprep.subr.bf16.mxu0 0
    %1884 = vmatpush2.bf16.msra.mxu0 0
    %1885 = vmatprep.subr.bf16.mxu0 0
    %1886 = vmatpush2.bf16.msra.mxu0 0
    %1887 = vmatprep.mubr.bf16.mxu0 0
    %1888 = vmatmul.mubr.bf16.gmra.mxu0 %v1805
    %v1889 = vpop.f32.mrf.mxu0
    %v1890 = vadd.f32 0.0, %v1889
    %v1891 = vpop.f32.mrf.mxu0
    %v1892 = vpop.f32.mrf.mxu0
    %v1893 = vadd.f32 0.0, %v1892
    %v1894 = vpop.f32.mrf.mxu0
    %1895 = vdwg.mxu0
    %v1912 = vunpack.c.l.b16 %v1766
    %v1913 = vunpack.c.l.b16 %v1767
    %v1914 = vunpack.c.l.b16 %v1768
    %v1915 = vunpack.c.l.b16 %v1769
    %v1916 = vunpack.c.l.b16 %v1770
    %v1917 = vunpack.c.l.b16 %v1771
    %v1918 = vunpack.c.l.b16 %v1772
    %v1919 = vunpack.c.l.b16 %v1773
    %v1920 = vunpack.c.l.b16 %v1774
    %v1921 = vunpack.c.l.b16 %v1775
    %v1922 = vunpack.c.l.b16 %v1776
    %v1923 = vunpack.c.l.b16 %v1777
    %v1924 = vunpack.c.l.b16 %v1778
    %v1925 = vunpack.c.l.b16 %v1779
    %v1926 = vunpack.c.l.b16 %v1780
    %v1927 = vunpack.c.l.b16 %v1781
    %v1928 = vpack.c.b16 %v1913, %v1912
    %v1929 = vpack.c.b16 %v1915, %v1914
    %v1930 = vpack.c.b16 %v1917, %v1916
    %v1931 = vpack.c.b16 %v1919, %v1918
    %v1932 = vpack.c.b16 %v1921, %v1920
    %v1933 = vpack.c.b16 %v1923, %v1922
    %v1934 = vpack.c.b16 %v1925, %v1924
    %v1935 = vpack.c.b16 %v1927, %v1926
    %1944 = vmatprep.subr.bf16.mxu0 0
    %1945 = vmatpush1.bf16.msra.mxu0 %v1935
    %1946 = vmatprep.subr.bf16.mxu0 0
    %1947 = vmatpush1.bf16.msra.mxu0 %v1934
    %1948 = vmatprep.subr.bf16.mxu0 0
    %1949 = vmatpush1.bf16.msra.mxu0 %v1933
    %1950 = vmatprep.subr.bf16.mxu0 0
    %1951 = vmatpush1.bf16.msra.mxu0 %v1932
    %1952 = vmatprep.subr.bf16.mxu0 0
    %1953 = vmatpush1.bf16.msra.mxu0 %v1931
    %1954 = vmatprep.subr.bf16.mxu0 0
    %1955 = vmatpush1.bf16.msra.mxu0 %v1930
    %1956 = vmatprep.subr.bf16.mxu0 0
    %1957 = vmatpush1.bf16.msra.mxu0 %v1929
    %1958 = vmatprep.subr.bf16.mxu0 0
    %1959 = vmatpush1.bf16.msra.mxu0 %v1928
    %1960 = vmatprep.subr.bf16.mxu0 0
    %1961 = vmatpush2.bf16.msra.mxu0 0
    %1962 = vmatprep.subr.bf16.mxu0 0
    %1963 = vmatpush2.bf16.msra.mxu0 0
    %1964 = vmatprep.subr.bf16.mxu0 0
    %1965 = vmatpush2.bf16.msra.mxu0 0
    %1966 = vmatprep.subr.bf16.mxu0 0
    %1967 = vmatpush2.bf16.msra.mxu0 0
    %1968 = vmatprep.subr.bf16.mxu0 0
    %1969 = vmatpush2.bf16.msra.mxu0 0
    %1970 = vmatprep.subr.bf16.mxu0 0
    %1971 = vmatpush2.bf16.msra.mxu0 0
    %1972 = vmatprep.subr.bf16.mxu0 0
    %1973 = vmatpush2.bf16.msra.mxu0 0
    %1974 = vmatprep.subr.bf16.mxu0 0
    %1975 = vmatpush2.bf16.msra.mxu0 0
    %1976 = vmatprep.mubr.bf16.mxu0 0
    %1977 = vmatmul.mubr.bf16.gmra.mxu0 %v1765
    %v1978 = vpop.f32.mrf.mxu0
    %v1979 = vadd.f32 %v1890, %v1978
    %v1980 = vpop.f32.mrf.mxu0
    %v1981 = vpop.f32.mrf.mxu0
    %v1982 = vadd.f32 %v1893, %v1981
    %v1983 = vpop.f32.mrf.mxu0
    %1984 = vdwg.mxu0
    %s1985 = scalar_lea.vmem [#allocation10], 128
    %v1986 = vld [vmem:[%s1985] sm:$0xf]
    %v1987 = vld [vmem:[%s1985 + $0x4] sm:$0xf]
    %v1988 = vld [vmem:[%s1985 + $0x8] sm:$0xf]
    %v1989 = vld [vmem:[%s1985 + $0xc] sm:$0xf]
    %v1990 = vld [vmem:[%s1985 + $0x10] sm:$0xf]
    %v1991 = vld [vmem:[%s1985 + $0x14] sm:$0xf]
    %v1992 = vld [vmem:[%s1985 + $0x18] sm:$0xf]
    %v1993 = vld [vmem:[%s1985 + $0x1c] sm:$0xf]
    %v1994 = vld [vmem:[%s1985 + $0x20] sm:$0xf]
    %v1995 = vld [vmem:[%s1985 + $0x24] sm:$0xf]
    %v1996 = vld [vmem:[%s1985 + $0x28] sm:$0xf]
    %v1997 = vld [vmem:[%s1985 + $0x2c] sm:$0xf]
    %v1998 = vld [vmem:[%s1985 + $0x30] sm:$0xf]
    %v1999 = vld [vmem:[%s1985 + $0x34] sm:$0xf]
    %v2000 = vld [vmem:[%s1985 + $0x38] sm:$0xf]
    %v2001 = vld [vmem:[%s1985 + $0x3c] sm:$0xf]
    %v2003 = vrot.slane %v1765, 1
    %v2021 = vunpack.c.l.b16 %v1986
    %v2022 = vunpack.c.l.b16 %v1987
    %v2023 = vunpack.c.l.b16 %v1988
    %v2024 = vunpack.c.l.b16 %v1989
    %v2025 = vunpack.c.l.b16 %v1990
    %v2026 = vunpack.c.l.b16 %v1991
    %v2027 = vunpack.c.l.b16 %v1992
    %v2028 = vunpack.c.l.b16 %v1993
    %v2029 = vunpack.c.l.b16 %v1994
    %v2030 = vunpack.c.l.b16 %v1995
    %v2031 = vunpack.c.l.b16 %v1996
    %v2032 = vunpack.c.l.b16 %v1997
    %v2033 = vunpack.c.l.b16 %v1998
    %v2034 = vunpack.c.l.b16 %v1999
    %v2035 = vunpack.c.l.b16 %v2000
    %v2036 = vunpack.c.l.b16 %v2001
    %v2037 = vpack.c.b16 %v2022, %v2021
    %v2038 = vpack.c.b16 %v2024, %v2023
    %v2039 = vpack.c.b16 %v2026, %v2025
    %v2040 = vpack.c.b16 %v2028, %v2027
    %v2041 = vpack.c.b16 %v2030, %v2029
    %v2042 = vpack.c.b16 %v2032, %v2031
    %v2043 = vpack.c.b16 %v2034, %v2033
    %v2044 = vpack.c.b16 %v2036, %v2035
    %2053 = vmatprep.subr.bf16.mxu0 0
    %2054 = vmatpush1.bf16.msra.mxu0 %v2044
    %2055 = vmatprep.subr.bf16.mxu0 0
    %2056 = vmatpush1.bf16.msra.mxu0 %v2043
    %2057 = vmatprep.subr.bf16.mxu0 0
    %2058 = vmatpush1.bf16.msra.mxu0 %v2042
    %2059 = vmatprep.subr.bf16.mxu0 0
    %2060 = vmatpush1.bf16.msra.mxu0 %v2041
    %2061 = vmatprep.subr.bf16.mxu0 0
    %2062 = vmatpush1.bf16.msra.mxu0 %v2040
    %2063 = vmatprep.subr.bf16.mxu0 0
    %2064 = vmatpush1.bf16.msra.mxu0 %v2039
    %2065 = vmatprep.subr.bf16.mxu0 0
    %2066 = vmatpush1.bf16.msra.mxu0 %v2038
    %2067 = vmatprep.subr.bf16.mxu0 0
    %2068 = vmatpush1.bf16.msra.mxu0 %v2037
    %2069 = vmatprep.subr.bf16.mxu0 0
    %2070 = vmatpush2.bf16.msra.mxu0 0
    %2071 = vmatprep.subr.bf16.mxu0 0
    %2072 = vmatpush2.bf16.msra.mxu0 0
    %2073 = vmatprep.subr.bf16.mxu0 0
    %2074 = vmatpush2.bf16.msra.mxu0 0
    %2075 = vmatprep.subr.bf16.mxu0 0
    %2076 = vmatpush2.bf16.msra.mxu0 0
    %2077 = vmatprep.subr.bf16.mxu0 0
    %2078 = vmatpush2.bf16.msra.mxu0 0
    %2079 = vmatprep.subr.bf16.mxu0 0
    %2080 = vmatpush2.bf16.msra.mxu0 0
    %2081 = vmatprep.subr.bf16.mxu0 0
    %2082 = vmatpush2.bf16.msra.mxu0 0
    %2083 = vmatprep.subr.bf16.mxu0 0
    %2084 = vmatpush2.bf16.msra.mxu0 0
    %2085 = vmatprep.mubr.bf16.mxu0 0
    %2086 = vmatmul.mubr.bf16.gmra.mxu0 %v2003
    %v2087 = vpop.f32.mrf.mxu0
    %v2088 = vadd.f32 0.0, %v2087
    %v2089 = vpop.f32.mrf.mxu0
    %v2090 = vpop.f32.mrf.mxu0
    %v2091 = vadd.f32 0.0, %v2090
    %v2092 = vpop.f32.mrf.mxu0
    %2093 = vdwg.mxu0
    %v2094 = vadd.f32 %v1979, %v2088
    %v2095 = vadd.f32 %v1982, %v2091
    %v2096 = vld [vmem:[#allocation12] sm:$0x1]
    %v2098 = vlaneseq
    %v2099 = vshrl.u32 %v2098, 7
    %v2100 = vsub.s32 0, %v2099
    %v2101 = vrot.slane %v2096, %v2100
    %v2103 = vadd.f32 %v2094, %v2101
    %v2104 = vadd.f32 %v2095, %v2101
    %v2105 = vmax.f32 %v2103, 0.0
    %v2106 = vmax.f32 %v2104, 0.0
    %2107 = vst [vmem:[#allocation5] sm:$0xff] 0.0
    %2108 = vst [vmem:[#allocation5 + $0x8] sm:$0xff] 0.0
    %2109 = vst [vmem:[#allocation5 + $0x1] sm:$0xff] %v2105
    %2110 = vst [vmem:[#allocation5 + $0x9] sm:$0x7] %v2106
    %2111 = vst [vmem:[#allocation5 + $0x5] sm:$0x7] 0.0
    %v2112 = vld [vmem:[#allocation5] sm:$0xff]
    %v2113 = vld [vmem:[#allocation5 + $0x8] sm:$0xff]
    %v2114 = vpack.c.bf16 %v2113, %v2112
    %v2115 = vld [vmem:[#allocation13] sm:$0xf]
    %v2116 = vld [vmem:[#allocation13 + $0x4] sm:$0xf]
    %v2117 = vld [vmem:[#allocation13 + $0x8] sm:$0xf]
    %v2118 = vld [vmem:[#allocation13 + $0xc] sm:$0xf]
    %v2119 = vld [vmem:[#allocation13 + $0x10] sm:$0xf]
    %v2120 = vld [vmem:[#allocation13 + $0x14] sm:$0xf]
    %v2121 = vld [vmem:[#allocation13 + $0x18] sm:$0xf]
    %v2122 = vld [vmem:[#allocation13 + $0x1c] sm:$0xf]
    %v2123 = vld [vmem:[#allocation13 + $0x20] sm:$0xf]
    %v2124 = vld [vmem:[#allocation13 + $0x24] sm:$0xf]
    %v2125 = vld [vmem:[#allocation13 + $0x28] sm:$0xf]
    %v2126 = vld [vmem:[#allocation13 + $0x2c] sm:$0xf]
    %v2127 = vld [vmem:[#allocation13 + $0x30] sm:$0xf]
    %v2128 = vld [vmem:[#allocation13 + $0x34] sm:$0xf]
    %v2129 = vld [vmem:[#allocation13 + $0x38] sm:$0xf]
    %v2130 = vld [vmem:[#allocation13 + $0x3c] sm:$0xf]
    %s2131 = scalar_lea.vmem [#allocation13], 64
    %v2132 = vld [vmem:[%s2131] sm:$0xf]
    %v2133 = vld [vmem:[%s2131 + $0x4] sm:$0xf]
    %v2134 = vld [vmem:[%s2131 + $0x8] sm:$0xf]
    %v2135 = vld [vmem:[%s2131 + $0xc] sm:$0xf]
    %v2136 = vld [vmem:[%s2131 + $0x10] sm:$0xf]
    %v2137 = vld [vmem:[%s2131 + $0x14] sm:$0xf]
    %v2138 = vld [vmem:[%s2131 + $0x18] sm:$0xf]
    %v2139 = vld [vmem:[%s2131 + $0x1c] sm:$0xf]
    %v2140 = vld [vmem:[%s2131 + $0x20] sm:$0xf]
    %v2141 = vld [vmem:[%s2131 + $0x24] sm:$0xf]
    %v2142 = vld [vmem:[%s2131 + $0x28] sm:$0xf]
    %v2143 = vld [vmem:[%s2131 + $0x2c] sm:$0xf]
    %v2144 = vld [vmem:[%s2131 + $0x30] sm:$0xf]
    %v2145 = vld [vmem:[%s2131 + $0x34] sm:$0xf]
    %v2146 = vld [vmem:[%s2131 + $0x38] sm:$0xf]
    %v2147 = vld [vmem:[%s2131 + $0x3c] sm:$0xf]
    %v2149 = vshrl.u32 %v2114, 16
    %v2151 = vshll.u32 %v2114, 16
    %v2153 = vrot.slane %v2151, 1
    %v2154 = vor.u32 %v2149, %v2153
    %v2172 = vunpack.c.l.b16 %v2132
    %v2173 = vunpack.c.l.b16 %v2133
    %v2174 = vunpack.c.l.b16 %v2134
    %v2175 = vunpack.c.l.b16 %v2135
    %v2176 = vunpack.c.l.b16 %v2136
    %v2177 = vunpack.c.l.b16 %v2137
    %v2178 = vunpack.c.l.b16 %v2138
    %v2179 = vunpack.c.l.b16 %v2139
    %v2180 = vunpack.c.l.b16 %v2140
    %v2181 = vunpack.c.l.b16 %v2141
    %v2182 = vunpack.c.l.b16 %v2142
    %v2183 = vunpack.c.l.b16 %v2143
    %v2184 = vunpack.c.l.b16 %v2144
    %v2185 = vunpack.c.l.b16 %v2145
    %v2186 = vunpack.c.l.b16 %v2146
    %v2187 = vunpack.c.l.b16 %v2147
    %v2188 = vpack.c.b16 %v2173, %v2172
    %v2189 = vpack.c.b16 %v2175, %v2174
    %v2190 = vpack.c.b16 %v2177, %v2176
    %v2191 = vpack.c.b16 %v2179, %v2178
    %v2192 = vpack.c.b16 %v2181, %v2180
    %v2193 = vpack.c.b16 %v2183, %v2182
    %v2194 = vpack.c.b16 %v2185, %v2184
    %v2195 = vpack.c.b16 %v2187, %v2186
    %2204 = vmatprep.subr.bf16.mxu0 0
    %2205 = vmatpush1.bf16.msra.mxu0 %v2195
    %2206 = vmatprep.subr.bf16.mxu0 0
    %2207 = vmatpush1.bf16.msra.mxu0 %v2194
    %2208 = vmatprep.subr.bf16.mxu0 0
    %2209 = vmatpush1.bf16.msra.mxu0 %v2193
    %2210 = vmatprep.subr.bf16.mxu0 0
    %2211 = vmatpush1.bf16.msra.mxu0 %v2192
    %2212 = vmatprep.subr.bf16.mxu0 0
    %2213 = vmatpush1.bf16.msra.mxu0 %v2191
    %2214 = vmatprep.subr.bf16.mxu0 0
    %2215 = vmatpush1.bf16.msra.mxu0 %v2190
    %2216 = vmatprep.subr.bf16.mxu0 0
    %2217 = vmatpush1.bf16.msra.mxu0 %v2189
    %2218 = vmatprep.subr.bf16.mxu0 0
    %2219 = vmatpush1.bf16.msra.mxu0 %v2188
    %2220 = vmatprep.subr.bf16.mxu0 0
    %2221 = vmatpush2.bf16.msra.mxu0 0
    %2222 = vmatprep.subr.bf16.mxu0 0
    %2223 = vmatpush2.bf16.msra.mxu0 0
    %2224 = vmatprep.subr.bf16.mxu0 0
    %2225 = vmatpush2.bf16.msra.mxu0 0
    %2226 = vmatprep.subr.bf16.mxu0 0
    %2227 = vmatpush2.bf16.msra.mxu0 0
    %2228 = vmatprep.subr.bf16.mxu0 0
    %2229 = vmatpush2.bf16.msra.mxu0 0
    %2230 = vmatprep.subr.bf16.mxu0 0
    %2231 = vmatpush2.bf16.msra.mxu0 0
    %2232 = vmatprep.subr.bf16.mxu0 0
    %2233 = vmatpush2.bf16.msra.mxu0 0
    %2234 = vmatprep.subr.bf16.mxu0 0
    %2235 = vmatpush2.bf16.msra.mxu0 0
    %2236 = vmatprep.mubr.bf16.mxu0 0
    %2237 = vmatmul.mubr.bf16.gmra.mxu0 %v2154
    %v2238 = vpop.f32.mrf.mxu0
    %v2239 = vadd.f32 0.0, %v2238
    %v2240 = vpop.f32.mrf.mxu0
    %v2241 = vpop.f32.mrf.mxu0
    %v2242 = vadd.f32 0.0, %v2241
    %v2243 = vpop.f32.mrf.mxu0
    %2244 = vdwg.mxu0
    %v2261 = vunpack.c.l.b16 %v2115
    %v2262 = vunpack.c.l.b16 %v2116
    %v2263 = vunpack.c.l.b16 %v2117
    %v2264 = vunpack.c.l.b16 %v2118
    %v2265 = vunpack.c.l.b16 %v2119
    %v2266 = vunpack.c.l.b16 %v2120
    %v2267 = vunpack.c.l.b16 %v2121
    %v2268 = vunpack.c.l.b16 %v2122
    %v2269 = vunpack.c.l.b16 %v2123
    %v2270 = vunpack.c.l.b16 %v2124
    %v2271 = vunpack.c.l.b16 %v2125
    %v2272 = vunpack.c.l.b16 %v2126
    %v2273 = vunpack.c.l.b16 %v2127
    %v2274 = vunpack.c.l.b16 %v2128
    %v2275 = vunpack.c.l.b16 %v2129
    %v2276 = vunpack.c.l.b16 %v2130
    %v2277 = vpack.c.b16 %v2262, %v2261
    %v2278 = vpack.c.b16 %v2264, %v2263
    %v2279 = vpack.c.b16 %v2266, %v2265
    %v2280 = vpack.c.b16 %v2268, %v2267
    %v2281 = vpack.c.b16 %v2270, %v2269
    %v2282 = vpack.c.b16 %v2272, %v2271
    %v2283 = vpack.c.b16 %v2274, %v2273
    %v2284 = vpack.c.b16 %v2276, %v2275
    %2293 = vmatprep.subr.bf16.mxu0 0
    %2294 = vmatpush1.bf16.msra.mxu0 %v2284
    %2295 = vmatprep.subr.bf16.mxu0 0
    %2296 = vmatpush1.bf16.msra.mxu0 %v2283
    %2297 = vmatprep.subr.bf16.mxu0 0
    %2298 = vmatpush1.bf16.msra.mxu0 %v2282
    %2299 = vmatprep.subr.bf16.mxu0 0
    %2300 = vmatpush1.bf16.msra.mxu0 %v2281
    %2301 = vmatprep.subr.bf16.mxu0 0
    %2302 = vmatpush1.bf16.msra.mxu0 %v2280
    %2303 = vmatprep.subr.bf16.mxu0 0
    %2304 = vmatpush1.bf16.msra.mxu0 %v2279
    %2305 = vmatprep.subr.bf16.mxu0 0
    %2306 = vmatpush1.bf16.msra.mxu0 %v2278
    %2307 = vmatprep.subr.bf16.mxu0 0
    %2308 = vmatpush1.bf16.msra.mxu0 %v2277
    %2309 = vmatprep.subr.bf16.mxu0 0
    %2310 = vmatpush2.bf16.msra.mxu0 0
    %2311 = vmatprep.subr.bf16.mxu0 0
    %2312 = vmatpush2.bf16.msra.mxu0 0
    %2313 = vmatprep.subr.bf16.mxu0 0
    %2314 = vmatpush2.bf16.msra.mxu0 0
    %2315 = vmatprep.subr.bf16.mxu0 0
    %2316 = vmatpush2.bf16.msra.mxu0 0
    %2317 = vmatprep.subr.bf16.mxu0 0
    %2318 = vmatpush2.bf16.msra.mxu0 0
    %2319 = vmatprep.subr.bf16.mxu0 0
    %2320 = vmatpush2.bf16.msra.mxu0 0
    %2321 = vmatprep.subr.bf16.mxu0 0
    %2322 = vmatpush2.bf16.msra.mxu0 0
    %2323 = vmatprep.subr.bf16.mxu0 0
    %2324 = vmatpush2.bf16.msra.mxu0 0
    %2325 = vmatprep.mubr.bf16.mxu0 0
    %2326 = vmatmul.mubr.bf16.gmra.mxu0 %v2114
    %v2327 = vpop.f32.mrf.mxu0
    %v2328 = vadd.f32 %v2239, %v2327
    %v2329 = vpop.f32.mrf.mxu0
    %v2330 = vpop.f32.mrf.mxu0
    %v2331 = vadd.f32 %v2242, %v2330
    %v2332 = vpop.f32.mrf.mxu0
    %2333 = vdwg.mxu0
    %s2334 = scalar_lea.vmem [#allocation13], 128
    %v2335 = vld [vmem:[%s2334] sm:$0xf]
    %v2336 = vld [vmem:[%s2334 + $0x4] sm:$0xf]
    %v2337 = vld [vmem:[%s2334 + $0x8] sm:$0xf]
    %v2338 = vld [vmem:[%s2334 + $0xc] sm:$0xf]
    %v2339 = vld [vmem:[%s2334 + $0x10] sm:$0xf]
    %v2340 = vld [vmem:[%s2334 + $0x14] sm:$0xf]
    %v2341 = vld [vmem:[%s2334 + $0x18] sm:$0xf]
    %v2342 = vld [vmem:[%s2334 + $0x1c] sm:$0xf]
    %v2343 = vld [vmem:[%s2334 + $0x20] sm:$0xf]
    %v2344 = vld [vmem:[%s2334 + $0x24] sm:$0xf]
    %v2345 = vld [vmem:[%s2334 + $0x28] sm:$0xf]
    %v2346 = vld [vmem:[%s2334 + $0x2c] sm:$0xf]
    %v2347 = vld [vmem:[%s2334 + $0x30] sm:$0xf]
    %v2348 = vld [vmem:[%s2334 + $0x34] sm:$0xf]
    %v2349 = vld [vmem:[%s2334 + $0x38] sm:$0xf]
    %v2350 = vld [vmem:[%s2334 + $0x3c] sm:$0xf]
    %v2352 = vrot.slane %v2114, 1
    %v2370 = vunpack.c.l.b16 %v2335
    %v2371 = vunpack.c.l.b16 %v2336
    %v2372 = vunpack.c.l.b16 %v2337
    %v2373 = vunpack.c.l.b16 %v2338
    %v2374 = vunpack.c.l.b16 %v2339
    %v2375 = vunpack.c.l.b16 %v2340
    %v2376 = vunpack.c.l.b16 %v2341
    %v2377 = vunpack.c.l.b16 %v2342
    %v2378 = vunpack.c.l.b16 %v2343
    %v2379 = vunpack.c.l.b16 %v2344
    %v2380 = vunpack.c.l.b16 %v2345
    %v2381 = vunpack.c.l.b16 %v2346
    %v2382 = vunpack.c.l.b16 %v2347
    %v2383 = vunpack.c.l.b16 %v2348
    %v2384 = vunpack.c.l.b16 %v2349
    %v2385 = vunpack.c.l.b16 %v2350
    %v2386 = vpack.c.b16 %v2371, %v2370
    %v2387 = vpack.c.b16 %v2373, %v2372
    %v2388 = vpack.c.b16 %v2375, %v2374
    %v2389 = vpack.c.b16 %v2377, %v2376
    %v2390 = vpack.c.b16 %v2379, %v2378
    %v2391 = vpack.c.b16 %v2381, %v2380
    %v2392 = vpack.c.b16 %v2383, %v2382
    %v2393 = vpack.c.b16 %v2385, %v2384
    %2402 = vmatprep.subr.bf16.mxu0 0
    %2403 = vmatpush1.bf16.msra.mxu0 %v2393
    %2404 = vmatprep.subr.bf16.mxu0 0
    %2405 = vmatpush1.bf16.msra.mxu0 %v2392
    %2406 = vmatprep.subr.bf16.mxu0 0
    %2407 = vmatpush1.bf16.msra.mxu0 %v2391
    %2408 = vmatprep.subr.bf16.mxu0 0
    %2409 = vmatpush1.bf16.msra.mxu0 %v2390
    %2410 = vmatprep.subr.bf16.mxu0 0
    %2411 = vmatpush1.bf16.msra.mxu0 %v2389
    %2412 = vmatprep.subr.bf16.mxu0 0
    %2413 = vmatpush1.bf16.msra.mxu0 %v2388
    %2414 = vmatprep.subr.bf16.mxu0 0
    %2415 = vmatpush1.bf16.msra.mxu0 %v2387
    %2416 = vmatprep.subr.bf16.mxu0 0
    %2417 = vmatpush1.bf16.msra.mxu0 %v2386
    %2418 = vmatprep.subr.bf16.mxu0 0
    %2419 = vmatpush2.bf16.msra.mxu0 0
    %2420 = vmatprep.subr.bf16.mxu0 0
    %2421 = vmatpush2.bf16.msra.mxu0 0
    %2422 = vmatprep.subr.bf16.mxu0 0
    %2423 = vmatpush2.bf16.msra.mxu0 0
    %2424 = vmatprep.subr.bf16.mxu0 0
    %2425 = vmatpush2.bf16.msra.mxu0 0
    %2426 = vmatprep.subr.bf16.mxu0 0
    %2427 = vmatpush2.bf16.msra.mxu0 0
    %2428 = vmatprep.subr.bf16.mxu0 0
    %2429 = vmatpush2.bf16.msra.mxu0 0
    %2430 = vmatprep.subr.bf16.mxu0 0
    %2431 = vmatpush2.bf16.msra.mxu0 0
    %2432 = vmatprep.subr.bf16.mxu0 0
    %2433 = vmatpush2.bf16.msra.mxu0 0
    %2434 = vmatprep.mubr.bf16.mxu0 0
    %2435 = vmatmul.mubr.bf16.gmra.mxu0 %v2352
    %v2436 = vpop.f32.mrf.mxu0
    %v2437 = vadd.f32 0.0, %v2436
    %v2438 = vpop.f32.mrf.mxu0
    %v2439 = vpop.f32.mrf.mxu0
    %v2440 = vadd.f32 0.0, %v2439
    %v2441 = vpop.f32.mrf.mxu0
    %2442 = vdwg.mxu0
    %v2443 = vadd.f32 %v2328, %v2437
    %v2444 = vadd.f32 %v2331, %v2440
    %v2445 = vld [vmem:[#allocation15] sm:$0x1]
    %v2447 = vlaneseq
    %v2448 = vshrl.u32 %v2447, 7
    %v2449 = vsub.s32 0, %v2448
    %v2450 = vrot.slane %v2445, %v2449
    %v2452 = vadd.f32 %v2443, %v2450
    %v2453 = vadd.f32 %v2444, %v2450
    %v2454 = vadd.f32 %v2452, %v1756
    %v2455 = vadd.f32 %v2453, %v1757
    %v2456 = vmax.f32 %v2454, 0.0
    %v2457 = vmax.f32 %v2455, 0.0
    %2458 = vst [vmem:[#allocation6] sm:$0xff] %v2456
    %2459 = vst [vmem:[#allocation6 + $0x8] sm:$0x7] %v2457
    %v2460 = vld [vmem:[#allocation6] ss:$7 sm:$0x3]
    %v2461 = vpack.c.bf16 %v2460, %v2460
    %v2462 = vld [vmem:[#allocation16] sm:$0xf]
    %v2463 = vld [vmem:[#allocation16 + $0x4] sm:$0xf]
    %v2464 = vld [vmem:[#allocation16 + $0x8] sm:$0xf]
    %v2465 = vld [vmem:[#allocation16 + $0xc] sm:$0xf]
    %v2466 = vld [vmem:[#allocation16 + $0x10] sm:$0xf]
    %v2467 = vld [vmem:[#allocation16 + $0x14] sm:$0xf]
    %v2468 = vld [vmem:[#allocation16 + $0x18] sm:$0xf]
    %v2469 = vld [vmem:[#allocation16 + $0x1c] sm:$0xf]
    %v2470 = vld [vmem:[#allocation16 + $0x20] sm:$0xf]
    %v2471 = vld [vmem:[#allocation16 + $0x24] sm:$0xf]
    %v2472 = vld [vmem:[#allocation16 + $0x28] sm:$0xf]
    %v2473 = vld [vmem:[#allocation16 + $0x2c] sm:$0xf]
    %v2474 = vld [vmem:[#allocation16 + $0x30] sm:$0xf]
    %v2475 = vld [vmem:[#allocation16 + $0x34] sm:$0xf]
    %v2476 = vld [vmem:[#allocation16 + $0x38] sm:$0xf]
    %v2477 = vld [vmem:[#allocation16 + $0x3c] sm:$0xf]
    %s2478 = scalar_lea.vmem [#allocation6], 1
    %v2479 = vld [vmem:[%s2478] ss:$7 sm:$0x3]
    %v2480 = vpack.c.bf16 %v2479, %v2479
    %s2481 = scalar_lea.vmem [#allocation16], 64
    %v2482 = vld [vmem:[%s2481] sm:$0xf]
    %v2483 = vld [vmem:[%s2481 + $0x4] sm:$0xf]
    %v2484 = vld [vmem:[%s2481 + $0x8] sm:$0xf]
    %v2485 = vld [vmem:[%s2481 + $0xc] sm:$0xf]
    %v2486 = vld [vmem:[%s2481 + $0x10] sm:$0xf]
    %v2487 = vld [vmem:[%s2481 + $0x14] sm:$0xf]
    %v2488 = vld [vmem:[%s2481 + $0x18] sm:$0xf]
    %v2489 = vld [vmem:[%s2481 + $0x1c] sm:$0xf]
    %v2490 = vld [vmem:[%s2481 + $0x20] sm:$0xf]
    %v2491 = vld [vmem:[%s2481 + $0x24] sm:$0xf]
    %v2492 = vld [vmem:[%s2481 + $0x28] sm:$0xf]
    %v2493 = vld [vmem:[%s2481 + $0x2c] sm:$0xf]
    %v2494 = vld [vmem:[%s2481 + $0x30] sm:$0xf]
    %v2495 = vld [vmem:[%s2481 + $0x34] sm:$0xf]
    %v2496 = vld [vmem:[%s2481 + $0x38] sm:$0xf]
    %v2497 = vld [vmem:[%s2481 + $0x3c] sm:$0xf]
    %v2514 = vunpack.c.l.b16 %v2482
    %v2515 = vunpack.c.l.b16 %v2483
    %v2516 = vunpack.c.l.b16 %v2484
    %v2517 = vunpack.c.l.b16 %v2485
    %v2518 = vunpack.c.l.b16 %v2486
    %v2519 = vunpack.c.l.b16 %v2487
    %v2520 = vunpack.c.l.b16 %v2488
    %v2521 = vunpack.c.l.b16 %v2489
    %v2522 = vunpack.c.l.b16 %v2490
    %v2523 = vunpack.c.l.b16 %v2491
    %v2524 = vunpack.c.l.b16 %v2492
    %v2525 = vunpack.c.l.b16 %v2493
    %v2526 = vunpack.c.l.b16 %v2494
    %v2527 = vunpack.c.l.b16 %v2495
    %v2528 = vunpack.c.l.b16 %v2496
    %v2529 = vunpack.c.l.b16 %v2497
    %v2530 = vpack.c.b16 %v2515, %v2514
    %v2531 = vpack.c.b16 %v2517, %v2516
    %v2532 = vpack.c.b16 %v2519, %v2518
    %v2533 = vpack.c.b16 %v2521, %v2520
    %v2534 = vpack.c.b16 %v2523, %v2522
    %v2535 = vpack.c.b16 %v2525, %v2524
    %v2536 = vpack.c.b16 %v2527, %v2526
    %v2537 = vpack.c.b16 %v2529, %v2528
    %2546 = vmatprep.subr.bf16.mxu0 0
    %2547 = vmatpush1.bf16.msra.mxu0 %v2537
    %2548 = vmatprep.subr.bf16.mxu0 0
    %2549 = vmatpush1.bf16.msra.mxu0 %v2536
    %2550 = vmatprep.subr.bf16.mxu0 0
    %2551 = vmatpush1.bf16.msra.mxu0 %v2535
    %2552 = vmatprep.subr.bf16.mxu0 0
    %2553 = vmatpush1.bf16.msra.mxu0 %v2534
    %2554 = vmatprep.subr.bf16.mxu0 0
    %2555 = vmatpush1.bf16.msra.mxu0 %v2533
    %2556 = vmatprep.subr.bf16.mxu0 0
    %2557 = vmatpush1.bf16.msra.mxu0 %v2532
    %2558 = vmatprep.subr.bf16.mxu0 0
    %2559 = vmatpush1.bf16.msra.mxu0 %v2531
    %2560 = vmatprep.subr.bf16.mxu0 0
    %2561 = vmatpush1.bf16.msra.mxu0 %v2530
    %2562 = vmatprep.subr.bf16.mxu0 0
    %2563 = vmatpush2.bf16.msra.mxu0 0
    %2564 = vmatprep.subr.bf16.mxu0 0
    %2565 = vmatpush2.bf16.msra.mxu0 0
    %2566 = vmatprep.subr.bf16.mxu0 0
    %2567 = vmatpush2.bf16.msra.mxu0 0
    %2568 = vmatprep.subr.bf16.mxu0 0
    %2569 = vmatpush2.bf16.msra.mxu0 0
    %2570 = vmatprep.subr.bf16.mxu0 0
    %2571 = vmatpush2.bf16.msra.mxu0 0
    %2572 = vmatprep.subr.bf16.mxu0 0
    %2573 = vmatpush2.bf16.msra.mxu0 0
    %2574 = vmatprep.subr.bf16.mxu0 0
    %2575 = vmatpush2.bf16.msra.mxu0 0
    %2576 = vmatprep.subr.bf16.mxu0 0
    %2577 = vmatpush2.bf16.msra.mxu0 0
    %2578 = vmatprep.mubr.bf16.mxu0 0
    %2579 = vmatmul.mubr.bf16.gmra.mxu0 %v2480
    %v2580 = vpop.f32.mrf.mxu0
    %v2581 = vadd.f32 0.0, %v2580
    %v2582 = vpop.f32.mrf.mxu0
    %v2583 = vpop.f32.mrf.mxu0
    %v2584 = vpop.f32.mrf.mxu0
    %2585 = vdwg.mxu0
    %v2602 = vunpack.c.l.b16 %v2462
    %v2603 = vunpack.c.l.b16 %v2463
    %v2604 = vunpack.c.l.b16 %v2464
    %v2605 = vunpack.c.l.b16 %v2465
    %v2606 = vunpack.c.l.b16 %v2466
    %v2607 = vunpack.c.l.b16 %v2467
    %v2608 = vunpack.c.l.b16 %v2468
    %v2609 = vunpack.c.l.b16 %v2469
    %v2610 = vunpack.c.l.b16 %v2470
    %v2611 = vunpack.c.l.b16 %v2471
    %v2612 = vunpack.c.l.b16 %v2472
    %v2613 = vunpack.c.l.b16 %v2473
    %v2614 = vunpack.c.l.b16 %v2474
    %v2615 = vunpack.c.l.b16 %v2475
    %v2616 = vunpack.c.l.b16 %v2476
    %v2617 = vunpack.c.l.b16 %v2477
    %v2618 = vpack.c.b16 %v2603, %v2602
    %v2619 = vpack.c.b16 %v2605, %v2604
    %v2620 = vpack.c.b16 %v2607, %v2606
    %v2621 = vpack.c.b16 %v2609, %v2608
    %v2622 = vpack.c.b16 %v2611, %v2610
    %v2623 = vpack.c.b16 %v2613, %v2612
    %v2624 = vpack.c.b16 %v2615, %v2614
    %v2625 = vpack.c.b16 %v2617, %v2616
    %2634 = vmatprep.subr.bf16.mxu0 0
    %2635 = vmatpush1.bf16.msra.mxu0 %v2625
    %2636 = vmatprep.subr.bf16.mxu0 0
    %2637 = vmatpush1.bf16.msra.mxu0 %v2624
    %2638 = vmatprep.subr.bf16.mxu0 0
    %2639 = vmatpush1.bf16.msra.mxu0 %v2623
    %2640 = vmatprep.subr.bf16.mxu0 0
    %2641 = vmatpush1.bf16.msra.mxu0 %v2622
    %2642 = vmatprep.subr.bf16.mxu0 0
    %2643 = vmatpush1.bf16.msra.mxu0 %v2621
    %2644 = vmatprep.subr.bf16.mxu0 0
    %2645 = vmatpush1.bf16.msra.mxu0 %v2620
    %2646 = vmatprep.subr.bf16.mxu0 0
    %2647 = vmatpush1.bf16.msra.mxu0 %v2619
    %2648 = vmatprep.subr.bf16.mxu0 0
    %2649 = vmatpush1.bf16.msra.mxu0 %v2618
    %2650 = vmatprep.subr.bf16.mxu0 0
    %2651 = vmatpush2.bf16.msra.mxu0 0
    %2652 = vmatprep.subr.bf16.mxu0 0
    %2653 = vmatpush2.bf16.msra.mxu0 0
    %2654 = vmatprep.subr.bf16.mxu0 0
    %2655 = vmatpush2.bf16.msra.mxu0 0
    %2656 = vmatprep.subr.bf16.mxu0 0
    %2657 = vmatpush2.bf16.msra.mxu0 0
    %2658 = vmatprep.subr.bf16.mxu0 0
    %2659 = vmatpush2.bf16.msra.mxu0 0
    %2660 = vmatprep.subr.bf16.mxu0 0
    %2661 = vmatpush2.bf16.msra.mxu0 0
    %2662 = vmatprep.subr.bf16.mxu0 0
    %2663 = vmatpush2.bf16.msra.mxu0 0
    %2664 = vmatprep.subr.bf16.mxu0 0
    %2665 = vmatpush2.bf16.msra.mxu0 0
    %2666 = vmatprep.mubr.bf16.mxu0 0
    %2667 = vmatmul.mubr.bf16.gmra.mxu0 %v2461
    %v2668 = vpop.f32.mrf.mxu0
    %v2669 = vadd.f32 %v2581, %v2668
    %v2670 = vpop.f32.mrf.mxu0
    %v2671 = vpop.f32.mrf.mxu0
    %v2672 = vpop.f32.mrf.mxu0
    %2673 = vdwg.mxu0
    %s2674 = scalar_lea.vmem [#allocation6], 2
    %v2675 = vld [vmem:[%s2674] ss:$7 sm:$0x3]
    %v2676 = vpack.c.bf16 %v2675, %v2675
    %s2677 = scalar_lea.vmem [#allocation16], 128
    %v2678 = vld [vmem:[%s2677] sm:$0xf]
    %v2679 = vld [vmem:[%s2677 + $0x4] sm:$0xf]
    %v2680 = vld [vmem:[%s2677 + $0x8] sm:$0xf]
    %v2681 = vld [vmem:[%s2677 + $0xc] sm:$0xf]
    %v2682 = vld [vmem:[%s2677 + $0x10] sm:$0xf]
    %v2683 = vld [vmem:[%s2677 + $0x14] sm:$0xf]
    %v2684 = vld [vmem:[%s2677 + $0x18] sm:$0xf]
    %v2685 = vld [vmem:[%s2677 + $0x1c] sm:$0xf]
    %v2686 = vld [vmem:[%s2677 + $0x20] sm:$0xf]
    %v2687 = vld [vmem:[%s2677 + $0x24] sm:$0xf]
    %v2688 = vld [vmem:[%s2677 + $0x28] sm:$0xf]
    %v2689 = vld [vmem:[%s2677 + $0x2c] sm:$0xf]
    %v2690 = vld [vmem:[%s2677 + $0x30] sm:$0xf]
    %v2691 = vld [vmem:[%s2677 + $0x34] sm:$0xf]
    %v2692 = vld [vmem:[%s2677 + $0x38] sm:$0xf]
    %v2693 = vld [vmem:[%s2677 + $0x3c] sm:$0xf]
    %v2710 = vunpack.c.l.b16 %v2678
    %v2711 = vunpack.c.l.b16 %v2679
    %v2712 = vunpack.c.l.b16 %v2680
    %v2713 = vunpack.c.l.b16 %v2681
    %v2714 = vunpack.c.l.b16 %v2682
    %v2715 = vunpack.c.l.b16 %v2683
    %v2716 = vunpack.c.l.b16 %v2684
    %v2717 = vunpack.c.l.b16 %v2685
    %v2718 = vunpack.c.l.b16 %v2686
    %v2719 = vunpack.c.l.b16 %v2687
    %v2720 = vunpack.c.l.b16 %v2688
    %v2721 = vunpack.c.l.b16 %v2689
    %v2722 = vunpack.c.l.b16 %v2690
    %v2723 = vunpack.c.l.b16 %v2691
    %v2724 = vunpack.c.l.b16 %v2692
    %v2725 = vunpack.c.l.b16 %v2693
    %v2726 = vpack.c.b16 %v2711, %v2710
    %v2727 = vpack.c.b16 %v2713, %v2712
    %v2728 = vpack.c.b16 %v2715, %v2714
    %v2729 = vpack.c.b16 %v2717, %v2716
    %v2730 = vpack.c.b16 %v2719, %v2718
    %v2731 = vpack.c.b16 %v2721, %v2720
    %v2732 = vpack.c.b16 %v2723, %v2722
    %v2733 = vpack.c.b16 %v2725, %v2724
    %2742 = vmatprep.subr.bf16.mxu0 0
    %2743 = vmatpush1.bf16.msra.mxu0 %v2733
    %2744 = vmatprep.subr.bf16.mxu0 0
    %2745 = vmatpush1.bf16.msra.mxu0 %v2732
    %2746 = vmatprep.subr.bf16.mxu0 0
    %2747 = vmatpush1.bf16.msra.mxu0 %v2731
    %2748 = vmatprep.subr.bf16.mxu0 0
    %2749 = vmatpush1.bf16.msra.mxu0 %v2730
    %2750 = vmatprep.subr.bf16.mxu0 0
    %2751 = vmatpush1.bf16.msra.mxu0 %v2729
    %2752 = vmatprep.subr.bf16.mxu0 0
    %2753 = vmatpush1.bf16.msra.mxu0 %v2728
    %2754 = vmatprep.subr.bf16.mxu0 0
    %2755 = vmatpush1.bf16.msra.mxu0 %v2727
    %2756 = vmatprep.subr.bf16.mxu0 0
    %2757 = vmatpush1.bf16.msra.mxu0 %v2726
    %2758 = vmatprep.subr.bf16.mxu0 0
    %2759 = vmatpush2.bf16.msra.mxu0 0
    %2760 = vmatprep.subr.bf16.mxu0 0
    %2761 = vmatpush2.bf16.msra.mxu0 0
    %2762 = vmatprep.subr.bf16.mxu0 0
    %2763 = vmatpush2.bf16.msra.mxu0 0
    %2764 = vmatprep.subr.bf16.mxu0 0
    %2765 = vmatpush2.bf16.msra.mxu0 0
    %2766 = vmatprep.subr.bf16.mxu0 0
    %2767 = vmatpush2.bf16.msra.mxu0 0
    %2768 = vmatprep.subr.bf16.mxu0 0
    %2769 = vmatpush2.bf16.msra.mxu0 0
    %2770 = vmatprep.subr.bf16.mxu0 0
    %2771 = vmatpush2.bf16.msra.mxu0 0
    %2772 = vmatprep.subr.bf16.mxu0 0
    %2773 = vmatpush2.bf16.msra.mxu0 0
    %2774 = vmatprep.mubr.bf16.mxu0 0
    %2775 = vmatmul.mubr.bf16.gmra.mxu0 %v2676
    %v2776 = vpop.f32.mrf.mxu0
    %v2777 = vadd.f32 0.0, %v2776
    %v2778 = vpop.f32.mrf.mxu0
    %v2779 = vpop.f32.mrf.mxu0
    %v2780 = vpop.f32.mrf.mxu0
    %2781 = vdwg.mxu0
    %v2782 = vadd.f32 %v2669, %v2777
    %s2783 = scalar_lea.vmem [#allocation6], 3
    %v2784 = vld [vmem:[%s2783] ss:$7 sm:$0x3]
    %v2785 = vpack.c.bf16 %v2784, %v2784
    %s2786 = scalar_lea.vmem [#allocation16], 192
    %v2787 = vld [vmem:[%s2786] sm:$0xf]
    %v2788 = vld [vmem:[%s2786 + $0x4] sm:$0xf]
    %v2789 = vld [vmem:[%s2786 + $0x8] sm:$0xf]
    %v2790 = vld [vmem:[%s2786 + $0xc] sm:$0xf]
    %v2791 = vld [vmem:[%s2786 + $0x10] sm:$0xf]
    %v2792 = vld [vmem:[%s2786 + $0x14] sm:$0xf]
    %v2793 = vld [vmem:[%s2786 + $0x18] sm:$0xf]
    %v2794 = vld [vmem:[%s2786 + $0x1c] sm:$0xf]
    %v2795 = vld [vmem:[%s2786 + $0x20] sm:$0xf]
    %v2796 = vld [vmem:[%s2786 + $0x24] sm:$0xf]
    %v2797 = vld [vmem:[%s2786 + $0x28] sm:$0xf]
    %v2798 = vld [vmem:[%s2786 + $0x2c] sm:$0xf]
    %v2799 = vld [vmem:[%s2786 + $0x30] sm:$0xf]
    %v2800 = vld [vmem:[%s2786 + $0x34] sm:$0xf]
    %v2801 = vld [vmem:[%s2786 + $0x38] sm:$0xf]
    %v2802 = vld [vmem:[%s2786 + $0x3c] sm:$0xf]
    %v2819 = vunpack.c.l.b16 %v2787
    %v2820 = vunpack.c.l.b16 %v2788
    %v2821 = vunpack.c.l.b16 %v2789
    %v2822 = vunpack.c.l.b16 %v2790
    %v2823 = vunpack.c.l.b16 %v2791
    %v2824 = vunpack.c.l.b16 %v2792
    %v2825 = vunpack.c.l.b16 %v2793
    %v2826 = vunpack.c.l.b16 %v2794
    %v2827 = vunpack.c.l.b16 %v2795
    %v2828 = vunpack.c.l.b16 %v2796
    %v2829 = vunpack.c.l.b16 %v2797
    %v2830 = vunpack.c.l.b16 %v2798
    %v2831 = vunpack.c.l.b16 %v2799
    %v2832 = vunpack.c.l.b16 %v2800
    %v2833 = vunpack.c.l.b16 %v2801
    %v2834 = vunpack.c.l.b16 %v2802
    %v2835 = vpack.c.b16 %v2820, %v2819
    %v2836 = vpack.c.b16 %v2822, %v2821
    %v2837 = vpack.c.b16 %v2824, %v2823
    %v2838 = vpack.c.b16 %v2826, %v2825
    %v2839 = vpack.c.b16 %v2828, %v2827
    %v2840 = vpack.c.b16 %v2830, %v2829
    %v2841 = vpack.c.b16 %v2832, %v2831
    %v2842 = vpack.c.b16 %v2834, %v2833
    %2851 = vmatprep.subr.bf16.mxu0 0
    %2852 = vmatpush1.bf16.msra.mxu0 %v2842
    %2853 = vmatprep.subr.bf16.mxu0 0
    %2854 = vmatpush1.bf16.msra.mxu0 %v2841
    %2855 = vmatprep.subr.bf16.mxu0 0
    %2856 = vmatpush1.bf16.msra.mxu0 %v2840
    %2857 = vmatprep.subr.bf16.mxu0 0
    %2858 = vmatpush1.bf16.msra.mxu0 %v2839
    %2859 = vmatprep.subr.bf16.mxu0 0
    %2860 = vmatpush1.bf16.msra.mxu0 %v2838
    %2861 = vmatprep.subr.bf16.mxu0 0
    %2862 = vmatpush1.bf16.msra.mxu0 %v2837
    %2863 = vmatprep.subr.bf16.mxu0 0
    %2864 = vmatpush1.bf16.msra.mxu0 %v2836
    %2865 = vmatprep.subr.bf16.mxu0 0
    %2866 = vmatpush1.bf16.msra.mxu0 %v2835
    %2867 = vmatprep.subr.bf16.mxu0 0
    %2868 = vmatpush2.bf16.msra.mxu0 0
    %2869 = vmatprep.subr.bf16.mxu0 0
    %2870 = vmatpush2.bf16.msra.mxu0 0
    %2871 = vmatprep.subr.bf16.mxu0 0
    %2872 = vmatpush2.bf16.msra.mxu0 0
    %2873 = vmatprep.subr.bf16.mxu0 0
    %2874 = vmatpush2.bf16.msra.mxu0 0
    %2875 = vmatprep.subr.bf16.mxu0 0
    %2876 = vmatpush2.bf16.msra.mxu0 0
    %2877 = vmatprep.subr.bf16.mxu0 0
    %2878 = vmatpush2.bf16.msra.mxu0 0
    %2879 = vmatprep.subr.bf16.mxu0 0
    %2880 = vmatpush2.bf16.msra.mxu0 0
    %2881 = vmatprep.subr.bf16.mxu0 0
    %2882 = vmatpush2.bf16.msra.mxu0 0
    %2883 = vmatprep.mubr.bf16.mxu0 0
    %2884 = vmatmul.mubr.bf16.gmra.mxu0 %v2785
    %v2885 = vpop.f32.mrf.mxu0
    %v2886 = vadd.f32 0.0, %v2885
    %v2887 = vpop.f32.mrf.mxu0
    %v2888 = vpop.f32.mrf.mxu0
    %v2889 = vpop.f32.mrf.mxu0
    %2890 = vdwg.mxu0
    %v2891 = vadd.f32 %v2782, %v2886
    %v2892 = vld [vmem:[#allocation18] sm:$0x1]
    %v2894 = vlaneseq
    %v2895 = vshrl.u32 %v2894, 7
    %v2896 = vsub.s32 0, %v2895
    %v2897 = vrot.slane %v2892, %v2896
    %v2899 = vadd.f32 %v2891, %v2897
    %v2900 = vmax.f32 %v2899, 0.0
    %v2901 = vpack.c.bf16 %v2900, %v2900
    %v2902 = vld [vmem:[#allocation19] sm:$0xf]
    %v2903 = vld [vmem:[#allocation19 + $0x4] sm:$0xf]
    %v2904 = vld [vmem:[#allocation19 + $0x8] sm:$0xf]
    %v2905 = vld [vmem:[#allocation19 + $0xc] sm:$0xf]
    %v2906 = vld [vmem:[#allocation19 + $0x10] sm:$0xf]
    %v2907 = vld [vmem:[#allocation19 + $0x14] sm:$0xf]
    %v2908 = vld [vmem:[#allocation19 + $0x18] sm:$0xf]
    %v2909 = vld [vmem:[#allocation19 + $0x1c] sm:$0xf]
    %v2910 = vld [vmem:[#allocation19 + $0x20] sm:$0xf]
    %v2911 = vld [vmem:[#allocation19 + $0x24] sm:$0xf]
    %v2912 = vld [vmem:[#allocation19 + $0x28] sm:$0xf]
    %v2913 = vld [vmem:[#allocation19 + $0x2c] sm:$0xf]
    %v2914 = vld [vmem:[#allocation19 + $0x30] sm:$0xf]
    %v2915 = vld [vmem:[#allocation19 + $0x34] sm:$0xf]
    %v2916 = vld [vmem:[#allocation19 + $0x38] sm:$0xf]
    %v2917 = vld [vmem:[#allocation19 + $0x3c] sm:$0xf]
    %v2918 = vld [vmem:[#allocation21] sm:$0x1]
    %v2920 = vlaneseq
    %v2921 = vshrl.u32 %v2920, 7
    %v2922 = vsub.s32 0, %v2921
    %v2923 = vrot.slane %v2918, %v2922
    %v2941 = vunpack.c.l.b16 %v2902
    %v2942 = vunpack.c.l.b16 %v2903
    %v2943 = vunpack.c.l.b16 %v2904
    %v2944 = vunpack.c.l.b16 %v2905
    %v2945 = vunpack.c.l.b16 %v2906
    %v2946 = vunpack.c.l.b16 %v2907
    %v2947 = vunpack.c.l.b16 %v2908
    %v2948 = vunpack.c.l.b16 %v2909
    %v2949 = vunpack.c.l.b16 %v2910
    %v2950 = vunpack.c.l.b16 %v2911
    %v2951 = vunpack.c.l.b16 %v2912
    %v2952 = vunpack.c.l.b16 %v2913
    %v2953 = vunpack.c.l.b16 %v2914
    %v2954 = vunpack.c.l.b16 %v2915
    %v2955 = vunpack.c.l.b16 %v2916
    %v2956 = vunpack.c.l.b16 %v2917
    %v2957 = vpack.c.b16 %v2942, %v2941
    %v2958 = vpack.c.b16 %v2944, %v2943
    %v2959 = vpack.c.b16 %v2946, %v2945
    %v2960 = vpack.c.b16 %v2948, %v2947
    %v2961 = vpack.c.b16 %v2950, %v2949
    %v2962 = vpack.c.b16 %v2952, %v2951
    %v2963 = vpack.c.b16 %v2954, %v2953
    %v2964 = vpack.c.b16 %v2956, %v2955
    %2973 = vmatprep.subr.bf16.mxu0 0
    %2974 = vmatpush1.bf16.msra.mxu0 %v2964
    %2975 = vmatprep.subr.bf16.mxu0 0
    %2976 = vmatpush1.bf16.msra.mxu0 %v2963
    %2977 = vmatprep.subr.bf16.mxu0 0
    %2978 = vmatpush1.bf16.msra.mxu0 %v2962
    %2979 = vmatprep.subr.bf16.mxu0 0
    %2980 = vmatpush1.bf16.msra.mxu0 %v2961
    %2981 = vmatprep.subr.bf16.mxu0 0
    %2982 = vmatpush1.bf16.msra.mxu0 %v2960
    %2983 = vmatprep.subr.bf16.mxu0 0
    %2984 = vmatpush1.bf16.msra.mxu0 %v2959
    %2985 = vmatprep.subr.bf16.mxu0 0
    %2986 = vmatpush1.bf16.msra.mxu0 %v2958
    %2987 = vmatprep.subr.bf16.mxu0 0
    %2988 = vmatpush1.bf16.msra.mxu0 %v2957
    %2989 = vmatprep.subr.bf16.mxu0 0
    %2990 = vmatpush2.bf16.msra.mxu0 0
    %2991 = vmatprep.subr.bf16.mxu0 0
    %2992 = vmatpush2.bf16.msra.mxu0 0
    %2993 = vmatprep.subr.bf16.mxu0 0
    %2994 = vmatpush2.bf16.msra.mxu0 0
    %2995 = vmatprep.subr.bf16.mxu0 0
    %2996 = vmatpush2.bf16.msra.mxu0 0
    %2997 = vmatprep.subr.bf16.mxu0 0
    %2998 = vmatpush2.bf16.msra.mxu0 0
    %2999 = vmatprep.subr.bf16.mxu0 0
    %3000 = vmatpush2.bf16.msra.mxu0 0
    %3001 = vmatprep.subr.bf16.mxu0 0
    %3002 = vmatpush2.bf16.msra.mxu0 0
    %3003 = vmatprep.subr.bf16.mxu0 0
    %3004 = vmatpush2.bf16.msra.mxu0 0
    %3005 = vmatprep.mubr.bf16.mxu0 0
    %3006 = vmatmul.mubr.bf16.gmra.mxu0 %v2901
    %v3007 = vpop.f32.mrf.mxu0
    %v3008 = vadd.f32 %v2923, %v3007
    %v3009 = vpop.f32.mrf.mxu0
    %v3010 = vpop.f32.mrf.mxu0
    %v3011 = vpop.f32.mrf.mxu0
    %3012 = vdwg.mxu0
    %v3013 = vmax.f32 %v3008, 0.0
    %v3014 = vpack.c.bf16 %v3013, %v3013
    %v3015 = vld [vmem:[#allocation22] sm:$0xf]
    %v3016 = vld [vmem:[#allocation22 + $0x4] sm:$0xf]
    %v3017 = vld [vmem:[#allocation22 + $0x8] sm:$0xf]
    %v3018 = vld [vmem:[#allocation22 + $0xc] sm:$0xf]
    %v3019 = vld [vmem:[#allocation22 + $0x10] sm:$0xf]
    %v3020 = vld [vmem:[#allocation22 + $0x14] sm:$0xf]
    %v3021 = vld [vmem:[#allocation22 + $0x18] sm:$0xf]
    %v3022 = vld [vmem:[#allocation22 + $0x1c] sm:$0xf]
    %v3023 = vld [vmem:[#allocation22 + $0x20] sm:$0xf]
    %v3024 = vld [vmem:[#allocation22 + $0x24] sm:$0xf]
    %v3025 = vld [vmem:[#allocation22 + $0x28] sm:$0xf]
    %v3026 = vld [vmem:[#allocation22 + $0x2c] sm:$0xf]
    %v3027 = vld [vmem:[#allocation22 + $0x30] sm:$0xf]
    %v3028 = vld [vmem:[#allocation22 + $0x34] sm:$0xf]
    %v3029 = vld [vmem:[#allocation22 + $0x38] sm:$0xf]
    %v3030 = vld [vmem:[#allocation22 + $0x3c] sm:$0xf]
    %v3031 = vld [vmem:[#allocation24] sm:$0x1]
    %v3033 = vlaneseq
    %v3034 = vshrl.u32 %v3033, 7
    %v3035 = vsub.s32 0, %v3034
    %v3036 = vrot.slane %v3031, %v3035
    %v3054 = vunpack.c.l.b16 %v3015
    %v3055 = vunpack.c.l.b16 %v3016
    %v3056 = vunpack.c.l.b16 %v3017
    %v3057 = vunpack.c.l.b16 %v3018
    %v3058 = vunpack.c.l.b16 %v3019
    %v3059 = vunpack.c.l.b16 %v3020
    %v3060 = vunpack.c.l.b16 %v3021
    %v3061 = vunpack.c.l.b16 %v3022
    %v3062 = vunpack.c.l.b16 %v3023
    %v3063 = vunpack.c.l.b16 %v3024
    %v3064 = vunpack.c.l.b16 %v3025
    %v3065 = vunpack.c.l.b16 %v3026
    %v3066 = vunpack.c.l.b16 %v3027
    %v3067 = vunpack.c.l.b16 %v3028
    %v3068 = vunpack.c.l.b16 %v3029
    %v3069 = vunpack.c.l.b16 %v3030
    %v3070 = vpack.c.b16 %v3055, %v3054
    %v3071 = vpack.c.b16 %v3057, %v3056
    %v3072 = vpack.c.b16 %v3059, %v3058
    %v3073 = vpack.c.b16 %v3061, %v3060
    %v3074 = vpack.c.b16 %v3063, %v3062
    %v3075 = vpack.c.b16 %v3065, %v3064
    %v3076 = vpack.c.b16 %v3067, %v3066
    %v3077 = vpack.c.b16 %v3069, %v3068
    %3086 = vmatprep.subr.bf16.mxu0 0
    %3087 = vmatpush1.bf16.msra.mxu0 %v3077
    %3088 = vmatprep.subr.bf16.mxu0 0
    %3089 = vmatpush1.bf16.msra.mxu0 %v3076
    %3090 = vmatprep.subr.bf16.mxu0 0
    %3091 = vmatpush1.bf16.msra.mxu0 %v3075
    %3092 = vmatprep.subr.bf16.mxu0 0
    %3093 = vmatpush1.bf16.msra.mxu0 %v3074
    %3094 = vmatprep.subr.bf16.mxu0 0
    %3095 = vmatpush1.bf16.msra.mxu0 %v3073
    %3096 = vmatprep.subr.bf16.mxu0 0
    %3097 = vmatpush1.bf16.msra.mxu0 %v3072
    %3098 = vmatprep.subr.bf16.mxu0 0
    %3099 = vmatpush1.bf16.msra.mxu0 %v3071
    %3100 = vmatprep.subr.bf16.mxu0 0
    %3101 = vmatpush1.bf16.msra.mxu0 %v3070
    %3102 = vmatprep.subr.bf16.mxu0 0
    %3103 = vmatpush2.bf16.msra.mxu0 0
    %3104 = vmatprep.subr.bf16.mxu0 0
    %3105 = vmatpush2.bf16.msra.mxu0 0
    %3106 = vmatprep.subr.bf16.mxu0 0
    %3107 = vmatpush2.bf16.msra.mxu0 0
    %3108 = vmatprep.subr.bf16.mxu0 0
    %3109 = vmatpush2.bf16.msra.mxu0 0
    %3110 = vmatprep.subr.bf16.mxu0 0
    %3111 = vmatpush2.bf16.msra.mxu0 0
    %3112 = vmatprep.subr.bf16.mxu0 0
    %3113 = vmatpush2.bf16.msra.mxu0 0
    %3114 = vmatprep.subr.bf16.mxu0 0
    %3115 = vmatpush2.bf16.msra.mxu0 0
    %3116 = vmatprep.subr.bf16.mxu0 0
    %3117 = vmatpush2.bf16.msra.mxu0 0
    %3118 = vmatprep.mubr.bf16.mxu0 0
    %3119 = vmatmul.mubr.bf16.gmra.mxu0 %v3014
    %v3120 = vpop.f32.mrf.mxu0
    %v3121 = vadd.f32 %v3036, %v3120
    %v3122 = vpop.f32.mrf.mxu0
    %v3123 = vpop.f32.mrf.mxu0
    %v3124 = vpop.f32.mrf.mxu0
    %3125 = vdwg.mxu0
    %3126 = vst [vmem:[#allocation25] sm:$0x3] %v3121
    // Predicated region
    $region106: #{net_forward.1} parent=1 // pred_check
      _
    $region107: #{net_forward.1} parent=1 // pred_check_branch
      %3128 = sbr.rel (0) target = $region109
    $region108: #{net_forward.1} parent=1 // pred_region
      %s3130 = ssub.s32 32, 32
      %3131 = vsyncadd [#allocation9], %s3130
      %s3133 = sshll.u32 [#allocation25], 4
      %s3134 = int_to_ptr.vmem [resolvable:$true] %s3133
      %3136 = dma.vmem_to_hbm [thread:$0]  %s3134, 32, %s15, [#allocation9]
    $region109: #{net_forward.1} parent=1 // pred_fallthru
      _
    // Predicated region
    $region110: #{net_forward.1} parent=1 // pred_check
      _
    $region111: #{net_forward.1} parent=1 // pred_check_branch
      %3138 = sbr.rel (0) target = $region113
    $region112: #{net_forward.1} parent=1 // pred_region
      %3139 = dma.done [#allocation9], 32
    $region113: #{net_forward.1} parent=1 // pred_fallthru
      _
    %3140 = vsyncpa [#allocation8], 1
    %3141 = vsyncpa [#allocation11], 1
    %3142 = vsyncpa [#allocation14], 1
    %3143 = vsyncpa [#allocation17], 1
    %3144 = vsyncpa [#allocation20], 1
    %3145 = vsyncpa [#allocation23], 1
    %3146 = vsyncpa [#allocation9], 1

</llo_original>
